<compile_context>
chip_gen: v7x
topology: tpu7x:2x2x1
jax: 0.10.0
libtpu: 0.0.40
codegen_flags: <defaults>
</compile_context>

<pallas_src>
import numpy as np
import jax
import jax.numpy as jnp
from jax.experimental import pallas as pl
from jax.experimental.pallas import tpu as pltpu

EPS = 1e-5
_SQRT_HALF = 0.7071067811865476  # 1/sqrt(2)

_VMEM = pl.BlockSpec(memory_space=pltpu.MemorySpace.VMEM)
# Actual VMEM use here is ~4 MiB; 32 MiB scoped limit is safe on v5e/v6e (128 MiB
# physical) and v7x (64 MiB physical).
_COMPILER_PARAMS = pltpu.CompilerParams(vmem_limit_bytes=32 * 1024 * 1024)


def _gelu_exact(x):
    # matches torch.nn.GELU() (erf-based, approximate='none')
    return 0.5 * x * (1.0 + jax.lax.erf(x * _SQRT_HALF))


# ----------------------------------------------------------------------------
# One-time parameter preparation (hoisted out of the forward pass)
# ----------------------------------------------------------------------------
def _banded_depthwise(dw_w, W):
    """dw_w: (K, K, C) -> (K, L, L) banded weights; dx shift, per-channel tap and
    W zero-padding folded in (out-of-range taps simply have no entry)."""
    K, _, C = dw_w.shape
    pad = K // 2
    L = W * C
    out = np.zeros((K, L, L), np.float32)
    for dy in range(K):
        for dx in range(K):
            for w_out in range(W):
                w_in = w_out + dx - pad
                if 0 <= w_in < W:
                    for c in range(C):
                        out[dy, w_in * C + c, w_out * C + c] = dw_w[dy, dx, c]
    return out


def _banded_grouped(bt_w, W, dim):
    """bt_w: (K, K, G, dim) grouped (groups=dim) conv weight -> (G, K, L, L):
    one banded per-dy weight per stored 'mem' tensor (the concat is never formed;
    cat channel o*G+j lives in tensor t=(o*G+j)//dim, channel (o*G+j)%dim)."""
    K, _, G, _ = bt_w.shape
    pad = K // 2
    L = W * dim
    out = np.zeros((G, K, L, L), np.float32)
    for o in range(dim):
        for j in range(G):
            t, c_in = divmod(o * G + j, dim)
            for dy in range(K):
                for dx in range(K):
                    v = bt_w[dy, dx, j, o]
                    for w_out in range(W):
                        w_in = w_out + dx - pad
                        if 0 <= w_in < W:
                            out[t, dy, w_in * dim + c_in, w_out * dim + o] = v
    return out


def prepare_params(params, W):
    """Expand / lane-fold all weights once; the forward pass only consumes these."""
    mixers, bottlenecks = params["mixers"], params["bottlenecks"]
    C = int(mixers[0]["dw_w"].shape[2])
    L = W * C

    def tile_vec(v):  # (C,) -> (1, W*C), channel is the inner lane factor
        return np.tile(np.asarray(v, np.float32), W).reshape(1, L)

    eye_w = np.eye(W, dtype=np.float32)
    prep = {
        "dww": np.stack([_banded_depthwise(np.asarray(mp["dw_w"], np.float32), W)
                         for mp in mixers]),                              # (depth, K, L, L)
        "dwb": np.stack([tile_vec(mp["dw_b"]) for mp in mixers]),
        "g1":  np.stack([tile_vec(mp["bn1_g"]) for mp in mixers]),
        "b1":  np.stack([tile_vec(mp["bn1_b"]) for mp in mixers]),
        "pww": np.stack([np.kron(eye_w, np.asarray(mp["pw_w"], np.float32))
                         for mp in mixers]),                              # (depth, L, L)
        "pwb": np.stack([tile_vec(mp["pw_b"]) for mp in mixers]),
        "g2":  np.stack([tile_vec(mp["bn2_g"]) for mp in mixers]),
        "b2":  np.stack([tile_vec(mp["bn2_b"]) for mp in mixers]),
        "btw": np.concatenate([_banded_grouped(np.asarray(bp["bt_w"], np.float32), W, C)
                               for bp in bottlenecks], axis=0),           # (sum_i(i+2), K, L, L)
        "btb": np.stack([tile_vec(bp["bt_b"]) for bp in bottlenecks]),
        "g3":  np.stack([tile_vec(bp["bn_g"]) for bp in bottlenecks]),
        "b3":  np.stack([tile_vec(bp["bn_b"]) for bp in bottlenecks]),
        "fold": np.kron(np.ones((W, W), np.float32), np.eye(C, dtype=np.float32)),  # (L, L)
    }
    return {k: jnp.asarray(v) for k, v in prep.items()}


# ----------------------------------------------------------------------------
# Fused kernel: the whole DenseConvMixerBlock depth-loop in one pallas_call
# ----------------------------------------------------------------------------
def _make_fused_kernel(N, H, W, C, K, depth):
    pad = K // 2
    L = W * C
    R = N * H
    inv_cnt = 1.0 / float(N * H * W)
    bt_off = [sum(k + 2 for k in range(i)) for i in range(depth)]  # static offsets

    def kernel(xpad_ref, dww_ref, dwb_ref, g1_ref, b1_ref,
               pww_ref, pwb_ref, g2_ref, b2_ref,
               btw_ref, btb_ref, g3_ref, b3_ref, fold_ref,
               o_ref, *scratch):
        mem_refs = list(scratch[:depth])   # H-padded mixer outputs (mem[1:])
        cur_ref = scratch[depth]           # H-padded current bottleneck output

        fold = fold_ref[...]               # (L, L), hoisted once

        # Zero scratch once so the H-halo rows are valid zero padding.
        for r in mem_refs + [cur_ref]:
            r[...] = jnp.zeros_like(r)

        def slabs(src):
            # K row-shifted, lane-aligned (R, L) views of an H-padded activation.
            return [src[:, dy:dy + H, :].reshape(R, L) for dy in range(K)]

        def bn(y, gamma, beta):
            # Training-mode batch stats; one fold matmul for both E[y] and E[y^2].
            s = jnp.concatenate([jnp.sum(y, axis=0, keepdims=True),
                                 jnp.sum(y * y, axis=0, keepdims=True)], axis=0)
            s = jnp.dot(s, fold, preferred_element_type=jnp.float32) * inv_cnt
            mean = s[0:1]
            var = jnp.maximum(s[1:2] - mean * mean, 0.0)
            return (y - mean) * jax.lax.rsqrt(var + EPS) * gamma + beta

        cur_src = xpad_ref          # block-0 mixer input; also mem[0] (= x) for bottlenecks
        padded_srcs = [xpad_ref]    # running "torch.cat" kept as VMEM views, never formed
        for i in range(depth):
            # ---- mixer: Residual(depthwise KxK -> GELU -> BN) -> 1x1 -> GELU -> BN ----
            xs = slabs(cur_src)
            y = dwb_ref[i]
            for dy in range(K):     # dx shift / W-pad folded into the banded weight
                y = y + jnp.dot(xs[dy], dww_ref[i, dy],
                                preferred_element_type=jnp.float32)
            y = bn(_gelu_exact(y), g1_ref[i], b1_ref[i])
            y = y + xs[pad]         # Residual: + x (reuses the lane-aligned dy==pad slab)
            z = jnp.dot(y, pww_ref[i], preferred_element_type=jnp.float32) + pwb_ref[i]
            z = bn(_gelu_exact(z), g2_ref[i], b2_ref[i])
            mem_refs[i][:, pad:pad + H, :] = z.reshape(N, H, L)   # lane-aligned store
            padded_srcs.append(mem_refs[i])

            # ---- dense bottleneck: grouped KxK conv over concat(mem) -> GELU -> BN ----
            u = btb_ref[i]
            for t, src in enumerate(padded_srcs):
                ts = slabs(src)
                for dy in range(K):
                    u = u + jnp.dot(ts[dy], btw_ref[bt_off[i] + t, dy],
                                    preferred_element_type=jnp.float32)
            u = bn(_gelu_exact(u), g3_ref[i], b3_ref[i])
            if i + 1 < depth:
                cur_ref[:, pad:pad + H, :] = u.reshape(N, H, L)
                cur_src = cur_ref
            else:
                o_ref[...] = u.astype(o_ref.dtype)

    return kernel


def dense_conv_mixer_block(x_nchw, prep):
    N, C, H, W = x_nchw.shape
    depth, K = prep["dww"].shape[0], prep["dww"].shape[1]
    pad = K // 2
    L = W * C

    # Only input/output glue remains outside the kernel (tiny, once per forward).
    x = jnp.transpose(x_nchw, (0, 2, 3, 1)).reshape(N, H, L)   # lane = w*C + c
    xpad = jnp.pad(x, ((0, 0), (pad, pad), (0, 0)))            # H halo only (lanes stay 128)

    out2d = pl.pallas_call(
        _make_fused_kernel(N, H, W, C, K, depth),
        out_shape=jax.ShapeDtypeStruct((N * H, L), x_nchw.dtype),
        in_specs=[_VMEM] * 14,
        out_specs=_VMEM,
        scratch_shapes=[pltpu.VMEM((N, H + 2 * pad, L), jnp.float32)
                        for _ in range(depth + 1)],
        compiler_params=_COMPILER_PARAMS,
    )(xpad, prep["dww"], prep["dwb"], prep["g1"], prep["b1"],
      prep["pww"], prep["pwb"], prep["g2"], prep["b2"],
      prep["btw"], prep["btb"], prep["g3"], prep["b3"], prep["fold"])

    return jnp.transpose(out2d.reshape(N, H, W, C), (0, 3, 1, 2))   # NHWC -> NCHW


# ----------------------------------------------------------------------------
# Pure-JAX reference (independent path, used only for a tolerance self-check)
# ----------------------------------------------------------------------------
def reference_forward(x_nchw, params):
    x = jnp.transpose(x_nchw, (0, 2, 3, 1)).astype(jnp.float32)
    N, H, W, C = x.shape
    hi = jax.lax.Precision.HIGHEST

    def conv_dw(a, w, b):
        K = w.shape[0]; p = K // 2
        ap = jnp.pad(a, ((0, 0), (p, p), (p, p), (0, 0)))
        out = jnp.zeros_like(a)
        for dy in range(K):
            for dx in range(K):
                out = out + ap[:, dy:dy + H, dx:dx + W, :] * w[dy, dx]
        return out + b

    def conv_dense(a, w, b):
        K = w.shape[0]; p = K // 2
        ap = jnp.pad(a, ((0, 0), (p, p), (p, p), (0, 0)))
        out = jnp.zeros(a.shape[:3] + (w.shape[3],), jnp.float32)
        for dy in range(K):
            for dx in range(K):
                out = out + jnp.einsum("nhwi,io->nhwo", ap[:, dy:dy + H, dx:dx + W, :],
                                       w[dy, dx], precision=hi)
        return out + b

    def bn(a, g, bta):
        mean = jnp.mean(a, axis=(0, 1, 2), keepdims=True)
        var = jnp.mean((a - mean) ** 2, axis=(0, 1, 2), keepdims=True)
        return (a - mean) * jax.lax.rsqrt(var + EPS) * g + bta

    mem = [x]
    last = x
    for mp, bp in zip(params["mixers"], params["bottlenecks"]):
        y = bn(_gelu_exact(conv_dw(last, mp["dw_w"], mp["dw_b"])),
               mp["bn1_g"], mp["bn1_b"]) + last
        y = bn(_gelu_exact(jnp.einsum("nhwi,io->nhwo", y, mp["pw_w"], precision=hi)
                           + mp["pw_b"]), mp["bn2_g"], mp["bn2_b"])
        mem.append(y)
        cat = jnp.concatenate(mem, axis=-1)
        K, _, G, dim = bp["bt_w"].shape
        wd = jnp.zeros((K, K, cat.shape[-1], dim), jnp.float32)
        o_idx = jnp.arange(dim)
        for j in range(G):
            wd = wd.at[:, :, o_idx * G + j, o_idx].set(bp["bt_w"][:, :, j, :])
        last = bn(_gelu_exact(conv_dense(cat, wd, bp["bt_b"])), bp["bn_g"], bp["bn_b"])
    return jnp.transpose(last, (0, 3, 1, 2))


# ----------------------------------------------------------------------------
# Deterministic synthetic parameter initialization
# ----------------------------------------------------------------------------
def init_params(key, depth, dim, K):
    keys = jax.random.split(key, depth * 2)
    mixers, bottlenecks = [], []
    for i in range(depth):
        km = jax.random.split(keys[2 * i], 8)
        mixers.append({
            "dw_w": 0.3 * jax.random.normal(km[0], (K, K, dim), jnp.float32),
            "dw_b": 0.1 * jax.random.normal(km[1], (dim,), jnp.float32),
            "bn1_g": 1.0 + 0.1 * jax.random.normal(km[2], (dim,), jnp.float32),
            "bn1_b": 0.1 * jax.random.normal(km[3], (dim,), jnp.float32),
            "pw_w": 0.3 * jax.random.normal(km[4], (dim, dim), jnp.float32),
            "pw_b": 0.1 * jax.random.normal(km[5], (dim,), jnp.float32),
            "bn2_g": 1.0 + 0.1 * jax.random.normal(km[6], (dim,), jnp.float32),
            "bn2_b": 0.1 * jax.random.normal(km[7], (dim,), jnp.float32),
        })
        kb = jax.random.split(keys[2 * i + 1], 4)
        G = i + 2
        bottlenecks.append({
            "bt_w": 0.3 * jax.random.normal(kb[0], (K, K, G, dim), jnp.float32),
            "bt_b": 0.1 * jax.random.normal(kb[1], (dim,), jnp.float32),
            "bn_g": 1.0 + 0.1 * jax.random.normal(kb[2], (dim,), jnp.float32),
            "bn_b": 0.1 * jax.random.normal(kb[3], (dim,), jnp.float32),
        })
    return {"mixers": mixers, "bottlenecks": bottlenecks}


if __name__ == "__main__":
    depth, dim, ksize = 2, 8, 3
    N, H, W = 2, 16, 16            # W * dim = 128 -> lane-dense layout

    key = jax.random.PRNGKey(0)
    kx, kp = jax.random.split(key)
    x = jax.random.normal(kx, (N, dim, H, W), jnp.float32)   # NCHW, like PyTorch input
    params = init_params(kp, depth, dim, ksize)

    prep = prepare_params(params, W)           # one-time expanded-weight prep (hoisted)
    fwd = jax.jit(dense_conv_mixer_block)
    out = jax.block_until_ready(fwd(x, prep))

    assert out.shape == (N, dim, H, W), out.shape
    assert bool(jnp.all(jnp.isfinite(out)))
    ref = reference_forward(x, params)
    err = float(jnp.max(jnp.abs(out - ref)))
    assert err < 5e-2, f"kernel/reference mismatch: max|diff|={err}"
    print("KERNEL_OK")
</pallas_src>

<mosaic_0001>
module attributes {stable_mosaic.version = 11 : i64} {
  func.func @kernel(%arg0: memref<2x18x128xf32, #tpu.memory_space<vmem>>, %arg1: memref<2x3x128x128xf32, #tpu.memory_space<vmem>>, %arg2: memref<2x1x128xf32, #tpu.memory_space<vmem>>, %arg3: memref<2x1x128xf32, #tpu.memory_space<vmem>>, %arg4: memref<2x1x128xf32, #tpu.memory_space<vmem>>, %arg5: memref<2x128x128xf32, #tpu.memory_space<vmem>>, %arg6: memref<2x1x128xf32, #tpu.memory_space<vmem>>, %arg7: memref<2x1x128xf32, #tpu.memory_space<vmem>>, %arg8: memref<2x1x128xf32, #tpu.memory_space<vmem>>, %arg9: memref<5x3x128x128xf32, #tpu.memory_space<vmem>>, %arg10: memref<2x1x128xf32, #tpu.memory_space<vmem>>, %arg11: memref<2x1x128xf32, #tpu.memory_space<vmem>>, %arg12: memref<2x1x128xf32, #tpu.memory_space<vmem>>, %arg13: memref<128x128xf32, #tpu.memory_space<vmem>>, %arg14: memref<32x128xf32, #tpu.memory_space<vmem>>, %arg15: memref<2x18x128xf32, #tpu.memory_space<vmem>>, %arg16: memref<2x18x128xf32, #tpu.memory_space<vmem>>, %arg17: memref<2x18x128xf32, #tpu.memory_space<vmem>>) attributes {dimension_semantics = [], scalar_prefetch = 0 : i64, scratch_operands = 3 : i64, tpu.core_type = #tpu.core_type<tc>} {
    %c0 = arith.constant 0 : index
    %c0_0 = arith.constant 0 : index
    %0 = vector.load %arg13[%c0, %c0_0] : memref<128x128xf32, #tpu.memory_space<vmem>>, vector<128x128xf32>
    %cst = arith.constant 0.000000e+00 : f32
    %1 = vector.broadcast %cst : f32 to vector<2x18x128xf32>
    %c0_1 = arith.constant 0 : index
    %c0_2 = arith.constant 0 : index
    %c0_3 = arith.constant 0 : index
    %2 = vector.load %arg15[%c0_1, %c0_2, %c0_3] : memref<2x18x128xf32, #tpu.memory_space<vmem>>, vector<2x18x128xf32>
    tpu.vector_store %arg15[%c0_1, %c0_2, %c0_3], %1 {strides = array<i32>} : memref<2x18x128xf32, #tpu.memory_space<vmem>>, vector<2x18x128xf32>,
    %cst_4 = arith.constant 0.000000e+00 : f32
    %3 = vector.broadcast %cst_4 : f32 to vector<2x18x128xf32>
    %c0_5 = arith.constant 0 : index
    %c0_6 = arith.constant 0 : index
    %c0_7 = arith.constant 0 : index
    %4 = vector.load %arg16[%c0_5, %c0_6, %c0_7] : memref<2x18x128xf32, #tpu.memory_space<vmem>>, vector<2x18x128xf32>
    tpu.vector_store %arg16[%c0_5, %c0_6, %c0_7], %3 {strides = array<i32>} : memref<2x18x128xf32, #tpu.memory_space<vmem>>, vector<2x18x128xf32>,
    %cst_8 = arith.constant 0.000000e+00 : f32
    %5 = vector.broadcast %cst_8 : f32 to vector<2x18x128xf32>
    %c0_9 = arith.constant 0 : index
    %c0_10 = arith.constant 0 : index
    %c0_11 = arith.constant 0 : index
    %6 = vector.load %arg17[%c0_9, %c0_10, %c0_11] : memref<2x18x128xf32, #tpu.memory_space<vmem>>, vector<2x18x128xf32>
    tpu.vector_store %arg17[%c0_9, %c0_10, %c0_11], %5 {strides = array<i32>} : memref<2x18x128xf32, #tpu.memory_space<vmem>>, vector<2x18x128xf32>,
    %c0_12 = arith.constant 0 : index
    %c0_13 = arith.constant 0 : index
    %c0_14 = arith.constant 0 : index
    %7 = vector.load %arg0[%c0_12, %c0_13, %c0_14] : memref<2x18x128xf32, #tpu.memory_space<vmem>>, vector<2x16x128xf32>
    %8 = vector.shape_cast %7 : vector<2x16x128xf32> to vector<32x128xf32>
    %c0_15 = arith.constant 0 : index
    %c1 = arith.constant 1 : index
    %c0_16 = arith.constant 0 : index
    %9 = vector.load %arg0[%c0_15, %c1, %c0_16] : memref<2x18x128xf32, #tpu.memory_space<vmem>>, vector<2x16x128xf32>
    %10 = vector.shape_cast %9 : vector<2x16x128xf32> to vector<32x128xf32>
    %c0_17 = arith.constant 0 : index
    %c2 = arith.constant 2 : index
    %c0_18 = arith.constant 0 : index
    %11 = vector.load %arg0[%c0_17, %c2, %c0_18] : memref<2x18x128xf32, #tpu.memory_space<vmem>>, vector<2x16x128xf32>
    %12 = vector.shape_cast %11 : vector<2x16x128xf32> to vector<32x128xf32>
    %c0_19 = arith.constant 0 : index
    %c0_20 = arith.constant 0 : index
    %c0_21 = arith.constant 0 : index
    %13 = vector.load %arg2[%c0_19, %c0_20, %c0_21] : memref<2x1x128xf32, #tpu.memory_space<vmem>>, vector<1x1x128xf32>
    %14 = vector.shape_cast %13 : vector<1x1x128xf32> to vector<1x128xf32>
    %c0_22 = arith.constant 0 : index
    %c0_23 = arith.constant 0 : index
    %c0_24 = arith.constant 0 : index
    %c0_25 = arith.constant 0 : index
    %15 = vector.load %arg1[%c0_22, %c0_23, %c0_24, %c0_25] : memref<2x3x128x128xf32, #tpu.memory_space<vmem>>, vector<1x1x128x128xf32>
    %16 = vector.shape_cast %15 : vector<1x1x128x128xf32> to vector<128x128xf32>
    %cst_26 = arith.constant dense<0.000000e+00> : vector<32x128xf32>
    %17 = tpu.matmul %8, %16, %cst_26 {dimension_numbers = #tpu.dot_dimension_numbers<[1], [0], [0], [1], [0, 0, 1, 1], [], []>} : vector<32x128xf32>, vector<128x128xf32>, vector<32x128xf32> -> vector<32x128xf32>
    %18 = vector.broadcast %14 : vector<1x128xf32> to vector<32x128xf32>
    %19 = arith.addf %18, %17 : vector<32x128xf32>
    %c0_27 = arith.constant 0 : index
    %c1_28 = arith.constant 1 : index
    %c0_29 = arith.constant 0 : index
    %c0_30 = arith.constant 0 : index
    %20 = vector.load %arg1[%c0_27, %c1_28, %c0_29, %c0_30] : memref<2x3x128x128xf32, #tpu.memory_space<vmem>>, vector<1x1x128x128xf32>
    %21 = vector.shape_cast %20 : vector<1x1x128x128xf32> to vector<128x128xf32>
    %cst_31 = arith.constant dense<0.000000e+00> : vector<32x128xf32>
    %22 = tpu.matmul %10, %21, %cst_31 {dimension_numbers = #tpu.dot_dimension_numbers<[1], [0], [0], [1], [0, 0, 1, 1], [], []>} : vector<32x128xf32>, vector<128x128xf32>, vector<32x128xf32> -> vector<32x128xf32>
    %23 = arith.addf %19, %22 : vector<32x128xf32>
    %c0_32 = arith.constant 0 : index
    %c2_33 = arith.constant 2 : index
    %c0_34 = arith.constant 0 : index
    %c0_35 = arith.constant 0 : index
    %24 = vector.load %arg1[%c0_32, %c2_33, %c0_34, %c0_35] : memref<2x3x128x128xf32, #tpu.memory_space<vmem>>, vector<1x1x128x128xf32>
    %25 = vector.shape_cast %24 : vector<1x1x128x128xf32> to vector<128x128xf32>
    %cst_36 = arith.constant dense<0.000000e+00> : vector<32x128xf32>
    %26 = tpu.matmul %12, %25, %cst_36 {dimension_numbers = #tpu.dot_dimension_numbers<[1], [0], [0], [1], [0, 0, 1, 1], [], []>} : vector<32x128xf32>, vector<128x128xf32>, vector<32x128xf32> -> vector<32x128xf32>
    %27 = arith.addf %23, %26 : vector<32x128xf32>
    %cst_37 = arith.constant 5.000000e-01 : f32
    %28 = vector.broadcast %cst_37 : f32 to vector<32x128xf32>
    %29 = arith.mulf %28, %27 : vector<32x128xf32>
    %cst_38 = arith.constant 0.707106769 : f32
    %30 = vector.broadcast %cst_38 : f32 to vector<32x128xf32>
    %31 = arith.mulf %27, %30 : vector<32x128xf32>
    %32 = math.erf %31 : vector<32x128xf32>
    %cst_39 = arith.constant 1.000000e+00 : f32
    %33 = vector.broadcast %cst_39 : f32 to vector<32x128xf32>
    %34 = arith.addf %33, %32 : vector<32x128xf32>
    %35 = arith.mulf %29, %34 : vector<32x128xf32>
    %c0_40 = arith.constant 0 : index
    %c0_41 = arith.constant 0 : index
    %c0_42 = arith.constant 0 : index
    %36 = vector.load %arg3[%c0_40, %c0_41, %c0_42] : memref<2x1x128xf32, #tpu.memory_space<vmem>>, vector<1x1x128xf32>
    %37 = vector.shape_cast %36 : vector<1x1x128xf32> to vector<1x128xf32>
    %c0_43 = arith.constant 0 : index
    %c0_44 = arith.constant 0 : index
    %c0_45 = arith.constant 0 : index
    %38 = vector.load %arg4[%c0_43, %c0_44, %c0_45] : memref<2x1x128xf32, #tpu.memory_space<vmem>>, vector<1x1x128xf32>
    %39 = vector.shape_cast %38 : vector<1x1x128xf32> to vector<1x128xf32>
    %cst_46 = arith.constant dense<0.000000e+00> : vector<128xf32>
    %40 = vector.multi_reduction <add>, %35, %cst_46 [0] : vector<32x128xf32> to vector<128xf32>
    %41 = vector.shape_cast %40 : vector<128xf32> to vector<1x128xf32>
    %42 = arith.mulf %35, %35 : vector<32x128xf32>
    %cst_47 = arith.constant dense<0.000000e+00> : vector<128xf32>
    %43 = vector.multi_reduction <add>, %42, %cst_47 [0] : vector<32x128xf32> to vector<128xf32>
    %44 = vector.shape_cast %43 : vector<128xf32> to vector<1x128xf32>
    %45 = tpu.concatenate %41, %44 in 0 : vector<1x128xf32>, vector<1x128xf32> -> vector<2x128xf32>
    %cst_48 = arith.constant dense<0.000000e+00> : vector<2x128xf32>
    %46 = tpu.matmul %45, %0, %cst_48 {dimension_numbers = #tpu.dot_dimension_numbers<[1], [0], [0], [1], [0, 0, 1, 1], [], []>} : vector<2x128xf32>, vector<128x128xf32>, vector<2x128xf32> -> vector<2x128xf32>
    %cst_49 = arith.constant 0.001953125 : f32
    %47 = vector.broadcast %cst_49 : f32 to vector<2x128xf32>
    %48 = arith.mulf %46, %47 : vector<2x128xf32>
    %49 = vector.extract_strided_slice %48 {offsets = [0, 0], sizes = [1, 128], strides = [1, 1]} : vector<2x128xf32> to vector<1x128xf32>
    %50 = vector.extract_strided_slice %48 {offsets = [1, 0], sizes = [1, 128], strides = [1, 1]} : vector<2x128xf32> to vector<1x128xf32>
    %51 = arith.mulf %49, %49 : vector<1x128xf32>
    %52 = arith.subf %50, %51 : vector<1x128xf32>
    %cst_50 = arith.constant 0.000000e+00 : f32
    %53 = vector.broadcast %cst_50 : f32 to vector<1x128xf32>
    %54 = arith.maximumf %52, %53 : vector<1x128xf32>
    %55 = vector.broadcast %49 : vector<1x128xf32> to vector<32x128xf32>
    %56 = arith.subf %35, %55 : vector<32x128xf32>
    %cst_51 = arith.constant 9.99999974E-6 : f32
    %57 = vector.broadcast %cst_51 : f32 to vector<1x128xf32>
    %58 = arith.addf %54, %57 : vector<1x128xf32>
    %59 = math.rsqrt %58 : vector<1x128xf32>
    %60 = vector.broadcast %59 : vector<1x128xf32> to vector<32x128xf32>
    %61 = arith.mulf %56, %60 : vector<32x128xf32>
    %62 = vector.broadcast %37 : vector<1x128xf32> to vector<32x128xf32>
    %63 = arith.mulf %61, %62 : vector<32x128xf32>
    %64 = vector.broadcast %39 : vector<1x128xf32> to vector<32x128xf32>
    %65 = arith.addf %63, %64 : vector<32x128xf32>
    %66 = arith.addf %65, %10 : vector<32x128xf32>
    %c0_52 = arith.constant 0 : index
    %c0_53 = arith.constant 0 : index
    %c0_54 = arith.constant 0 : index
    %67 = vector.load %arg5[%c0_52, %c0_53, %c0_54] : memref<2x128x128xf32, #tpu.memory_space<vmem>>, vector<1x128x128xf32>
    %68 = vector.shape_cast %67 : vector<1x128x128xf32> to vector<128x128xf32>
    %cst_55 = arith.constant dense<0.000000e+00> : vector<32x128xf32>
    %69 = tpu.matmul %66, %68, %cst_55 {dimension_numbers = #tpu.dot_dimension_numbers<[1], [0], [0], [1], [0, 0, 1, 1], [], []>} : vector<32x128xf32>, vector<128x128xf32>, vector<32x128xf32> -> vector<32x128xf32>
    %c0_56 = arith.constant 0 : index
    %c0_57 = arith.constant 0 : index
    %c0_58 = arith.constant 0 : index
    %70 = vector.load %arg6[%c0_56, %c0_57, %c0_58] : memref<2x1x128xf32, #tpu.memory_space<vmem>>, vector<1x1x128xf32>
    %71 = vector.shape_cast %70 : vector<1x1x128xf32> to vector<1x128xf32>
    %72 = vector.broadcast %71 : vector<1x128xf32> to vector<32x128xf32>
    %73 = arith.addf %69, %72 : vector<32x128xf32>
    %cst_59 = arith.constant 5.000000e-01 : f32
    %74 = vector.broadcast %cst_59 : f32 to vector<32x128xf32>
    %75 = arith.mulf %74, %73 : vector<32x128xf32>
    %cst_60 = arith.constant 0.707106769 : f32
    %76 = vector.broadcast %cst_60 : f32 to vector<32x128xf32>
    %77 = arith.mulf %73, %76 : vector<32x128xf32>
    %78 = math.erf %77 : vector<32x128xf32>
    %cst_61 = arith.constant 1.000000e+00 : f32
    %79 = vector.broadcast %cst_61 : f32 to vector<32x128xf32>
    %80 = arith.addf %79, %78 : vector<32x128xf32>
    %81 = arith.mulf %75, %80 : vector<32x128xf32>
    %c0_62 = arith.constant 0 : index
    %c0_63 = arith.constant 0 : index
    %c0_64 = arith.constant 0 : index
    %82 = vector.load %arg7[%c0_62, %c0_63, %c0_64] : memref<2x1x128xf32, #tpu.memory_space<vmem>>, vector<1x1x128xf32>
    %83 = vector.shape_cast %82 : vector<1x1x128xf32> to vector<1x128xf32>
    %c0_65 = arith.constant 0 : index
    %c0_66 = arith.constant 0 : index
    %c0_67 = arith.constant 0 : index
    %84 = vector.load %arg8[%c0_65, %c0_66, %c0_67] : memref<2x1x128xf32, #tpu.memory_space<vmem>>, vector<1x1x128xf32>
    %85 = vector.shape_cast %84 : vector<1x1x128xf32> to vector<1x128xf32>
    %cst_68 = arith.constant dense<0.000000e+00> : vector<128xf32>
    %86 = vector.multi_reduction <add>, %81, %cst_68 [0] : vector<32x128xf32> to vector<128xf32>
    %87 = vector.shape_cast %86 : vector<128xf32> to vector<1x128xf32>
    %88 = arith.mulf %81, %81 : vector<32x128xf32>
    %cst_69 = arith.constant dense<0.000000e+00> : vector<128xf32>
    %89 = vector.multi_reduction <add>, %88, %cst_69 [0] : vector<32x128xf32> to vector<128xf32>
    %90 = vector.shape_cast %89 : vector<128xf32> to vector<1x128xf32>
    %91 = tpu.concatenate %87, %90 in 0 : vector<1x128xf32>, vector<1x128xf32> -> vector<2x128xf32>
    %cst_70 = arith.constant dense<0.000000e+00> : vector<2x128xf32>
    %92 = tpu.matmul %91, %0, %cst_70 {dimension_numbers = #tpu.dot_dimension_numbers<[1], [0], [0], [1], [0, 0, 1, 1], [], []>} : vector<2x128xf32>, vector<128x128xf32>, vector<2x128xf32> -> vector<2x128xf32>
    %cst_71 = arith.constant 0.001953125 : f32
    %93 = vector.broadcast %cst_71 : f32 to vector<2x128xf32>
    %94 = arith.mulf %92, %93 : vector<2x128xf32>
    %95 = vector.extract_strided_slice %94 {offsets = [0, 0], sizes = [1, 128], strides = [1, 1]} : vector<2x128xf32> to vector<1x128xf32>
    %96 = vector.extract_strided_slice %94 {offsets = [1, 0], sizes = [1, 128], strides = [1, 1]} : vector<2x128xf32> to vector<1x128xf32>
    %97 = arith.mulf %95, %95 : vector<1x128xf32>
    %98 = arith.subf %96, %97 : vector<1x128xf32>
    %cst_72 = arith.constant 0.000000e+00 : f32
    %99 = vector.broadcast %cst_72 : f32 to vector<1x128xf32>
    %100 = arith.maximumf %98, %99 : vector<1x128xf32>
    %101 = vector.broadcast %95 : vector<1x128xf32> to vector<32x128xf32>
    %102 = arith.subf %81, %101 : vector<32x128xf32>
    %cst_73 = arith.constant 9.99999974E-6 : f32
    %103 = vector.broadcast %cst_73 : f32 to vector<1x128xf32>
    %104 = arith.addf %100, %103 : vector<1x128xf32>
    %105 = math.rsqrt %104 : vector<1x128xf32>
    %106 = vector.broadcast %105 : vector<1x128xf32> to vector<32x128xf32>
    %107 = arith.mulf %102, %106 : vector<32x128xf32>
    %108 = vector.broadcast %83 : vector<1x128xf32> to vector<32x128xf32>
    %109 = arith.mulf %107, %108 : vector<32x128xf32>
    %110 = vector.broadcast %85 : vector<1x128xf32> to vector<32x128xf32>
    %111 = arith.addf %109, %110 : vector<32x128xf32>
    %112 = vector.shape_cast %111 : vector<32x128xf32> to vector<2x16x128xf32>
    %c0_74 = arith.constant 0 : index
    %c1_75 = arith.constant 1 : index
    %c0_76 = arith.constant 0 : index
    %113 = vector.load %arg15[%c0_74, %c1_75, %c0_76] : memref<2x18x128xf32, #tpu.memory_space<vmem>>, vector<2x16x128xf32>
    tpu.vector_store %arg15[%c0_74, %c1_75, %c0_76], %112 {strides = array<i32>} : memref<2x18x128xf32, #tpu.memory_space<vmem>>, vector<2x16x128xf32>,
    %c0_77 = arith.constant 0 : index
    %c0_78 = arith.constant 0 : index
    %c0_79 = arith.constant 0 : index
    %114 = vector.load %arg10[%c0_77, %c0_78, %c0_79] : memref<2x1x128xf32, #tpu.memory_space<vmem>>, vector<1x1x128xf32>
    %115 = vector.shape_cast %114 : vector<1x1x128xf32> to vector<1x128xf32>
    %c0_80 = arith.constant 0 : index
    %c0_81 = arith.constant 0 : index
    %c0_82 = arith.constant 0 : index
    %116 = vector.load %arg0[%c0_80, %c0_81, %c0_82] : memref<2x18x128xf32, #tpu.memory_space<vmem>>, vector<2x16x128xf32>
    %117 = vector.shape_cast %116 : vector<2x16x128xf32> to vector<32x128xf32>
    %c0_83 = arith.constant 0 : index
    %c1_84 = arith.constant 1 : index
    %c0_85 = arith.constant 0 : index
    %118 = vector.load %arg0[%c0_83, %c1_84, %c0_85] : memref<2x18x128xf32, #tpu.memory_space<vmem>>, vector<2x16x128xf32>
    %119 = vector.shape_cast %118 : vector<2x16x128xf32> to vector<32x128xf32>
    %c0_86 = arith.constant 0 : index
    %c2_87 = arith.constant 2 : index
    %c0_88 = arith.constant 0 : index
    %120 = vector.load %arg0[%c0_86, %c2_87, %c0_88] : memref<2x18x128xf32, #tpu.memory_space<vmem>>, vector<2x16x128xf32>
    %121 = vector.shape_cast %120 : vector<2x16x128xf32> to vector<32x128xf32>
    %c0_89 = arith.constant 0 : index
    %c0_90 = arith.constant 0 : index
    %c0_91 = arith.constant 0 : index
    %c0_92 = arith.constant 0 : index
    %122 = vector.load %arg9[%c0_89, %c0_90, %c0_91, %c0_92] : memref<5x3x128x128xf32, #tpu.memory_space<vmem>>, vector<1x1x128x128xf32>
    %123 = vector.shape_cast %122 : vector<1x1x128x128xf32> to vector<128x128xf32>
    %cst_93 = arith.constant dense<0.000000e+00> : vector<32x128xf32>
    %124 = tpu.matmul %117, %123, %cst_93 {dimension_numbers = #tpu.dot_dimension_numbers<[1], [0], [0], [1], [0, 0, 1, 1], [], []>} : vector<32x128xf32>, vector<128x128xf32>, vector<32x128xf32> -> vector<32x128xf32>
    %125 = vector.broadcast %115 : vector<1x128xf32> to vector<32x128xf32>
    %126 = arith.addf %125, %124 : vector<32x128xf32>
    %c0_94 = arith.constant 0 : index
    %c1_95 = arith.constant 1 : index
    %c0_96 = arith.constant 0 : index
    %c0_97 = arith.constant 0 : index
    %127 = vector.load %arg9[%c0_94, %c1_95, %c0_96, %c0_97] : memref<5x3x128x128xf32, #tpu.memory_space<vmem>>, vector<1x1x128x128xf32>
    %128 = vector.shape_cast %127 : vector<1x1x128x128xf32> to vector<128x128xf32>
    %cst_98 = arith.constant dense<0.000000e+00> : vector<32x128xf32>
    %129 = tpu.matmul %119, %128, %cst_98 {dimension_numbers = #tpu.dot_dimension_numbers<[1], [0], [0], [1], [0, 0, 1, 1], [], []>} : vector<32x128xf32>, vector<128x128xf32>, vector<32x128xf32> -> vector<32x128xf32>
    %130 = arith.addf %126, %129 : vector<32x128xf32>
    %c0_99 = arith.constant 0 : index
    %c2_100 = arith.constant 2 : index
    %c0_101 = arith.constant 0 : index
    %c0_102 = arith.constant 0 : index
    %131 = vector.load %arg9[%c0_99, %c2_100, %c0_101, %c0_102] : memref<5x3x128x128xf32, #tpu.memory_space<vmem>>, vector<1x1x128x128xf32>
    %132 = vector.shape_cast %131 : vector<1x1x128x128xf32> to vector<128x128xf32>
    %cst_103 = arith.constant dense<0.000000e+00> : vector<32x128xf32>
    %133 = tpu.matmul %121, %132, %cst_103 {dimension_numbers = #tpu.dot_dimension_numbers<[1], [0], [0], [1], [0, 0, 1, 1], [], []>} : vector<32x128xf32>, vector<128x128xf32>, vector<32x128xf32> -> vector<32x128xf32>
    %134 = arith.addf %130, %133 : vector<32x128xf32>
    %c0_104 = arith.constant 0 : index
    %c0_105 = arith.constant 0 : index
    %c0_106 = arith.constant 0 : index
    %135 = vector.load %arg15[%c0_104, %c0_105, %c0_106] : memref<2x18x128xf32, #tpu.memory_space<vmem>>, vector<2x16x128xf32>
    %136 = vector.shape_cast %135 : vector<2x16x128xf32> to vector<32x128xf32>
    %c0_107 = arith.constant 0 : index
    %c1_108 = arith.constant 1 : index
    %c0_109 = arith.constant 0 : index
    %137 = vector.load %arg15[%c0_107, %c1_108, %c0_109] : memref<2x18x128xf32, #tpu.memory_space<vmem>>, vector<2x16x128xf32>
    %138 = vector.shape_cast %137 : vector<2x16x128xf32> to vector<32x128xf32>
    %c0_110 = arith.constant 0 : index
    %c2_111 = arith.constant 2 : index
    %c0_112 = arith.constant 0 : index
    %139 = vector.load %arg15[%c0_110, %c2_111, %c0_112] : memref<2x18x128xf32, #tpu.memory_space<vmem>>, vector<2x16x128xf32>
    %140 = vector.shape_cast %139 : vector<2x16x128xf32> to vector<32x128xf32>
    %c1_113 = arith.constant 1 : index
    %c0_114 = arith.constant 0 : index
    %c0_115 = arith.constant 0 : index
    %c0_116 = arith.constant 0 : index
    %141 = vector.load %arg9[%c1_113, %c0_114, %c0_115, %c0_116] : memref<5x3x128x128xf32, #tpu.memory_space<vmem>>, vector<1x1x128x128xf32>
    %142 = vector.shape_cast %141 : vector<1x1x128x128xf32> to vector<128x128xf32>
    %cst_117 = arith.constant dense<0.000000e+00> : vector<32x128xf32>
    %143 = tpu.matmul %136, %142, %cst_117 {dimension_numbers = #tpu.dot_dimension_numbers<[1], [0], [0], [1], [0, 0, 1, 1], [], []>} : vector<32x128xf32>, vector<128x128xf32>, vector<32x128xf32> -> vector<32x128xf32>
    %144 = arith.addf %134, %143 : vector<32x128xf32>
    %c1_118 = arith.constant 1 : index
    %c1_119 = arith.constant 1 : index
    %c0_120 = arith.constant 0 : index
    %c0_121 = arith.constant 0 : index
    %145 = vector.load %arg9[%c1_118, %c1_119, %c0_120, %c0_121] : memref<5x3x128x128xf32, #tpu.memory_space<vmem>>, vector<1x1x128x128xf32>
    %146 = vector.shape_cast %145 : vector<1x1x128x128xf32> to vector<128x128xf32>
    %cst_122 = arith.constant dense<0.000000e+00> : vector<32x128xf32>
    %147 = tpu.matmul %138, %146, %cst_122 {dimension_numbers = #tpu.dot_dimension_numbers<[1], [0], [0], [1], [0, 0, 1, 1], [], []>} : vector<32x128xf32>, vector<128x128xf32>, vector<32x128xf32> -> vector<32x128xf32>
    %148 = arith.addf %144, %147 : vector<32x128xf32>
    %c1_123 = arith.constant 1 : index
    %c2_124 = arith.constant 2 : index
    %c0_125 = arith.constant 0 : index
    %c0_126 = arith.constant 0 : index
    %149 = vector.load %arg9[%c1_123, %c2_124, %c0_125, %c0_126] : memref<5x3x128x128xf32, #tpu.memory_space<vmem>>, vector<1x1x128x128xf32>
    %150 = vector.shape_cast %149 : vector<1x1x128x128xf32> to vector<128x128xf32>
    %cst_127 = arith.constant dense<0.000000e+00> : vector<32x128xf32>
    %151 = tpu.matmul %140, %150, %cst_127 {dimension_numbers = #tpu.dot_dimension_numbers<[1], [0], [0], [1], [0, 0, 1, 1], [], []>} : vector<32x128xf32>, vector<128x128xf32>, vector<32x128xf32> -> vector<32x128xf32>
    %152 = arith.addf %148, %151 : vector<32x128xf32>
    %cst_128 = arith.constant 5.000000e-01 : f32
    %153 = vector.broadcast %cst_128 : f32 to vector<32x128xf32>
    %154 = arith.mulf %153, %152 : vector<32x128xf32>
    %cst_129 = arith.constant 0.707106769 : f32
    %155 = vector.broadcast %cst_129 : f32 to vector<32x128xf32>
    %156 = arith.mulf %152, %155 : vector<32x128xf32>
    %157 = math.erf %156 : vector<32x128xf32>
    %cst_130 = arith.constant 1.000000e+00 : f32
    %158 = vector.broadcast %cst_130 : f32 to vector<32x128xf32>
    %159 = arith.addf %158, %157 : vector<32x128xf32>
    %160 = arith.mulf %154, %159 : vector<32x128xf32>
    %c0_131 = arith.constant 0 : index
    %c0_132 = arith.constant 0 : index
    %c0_133 = arith.constant 0 : index
    %161 = vector.load %arg11[%c0_131, %c0_132, %c0_133] : memref<2x1x128xf32, #tpu.memory_space<vmem>>, vector<1x1x128xf32>
    %162 = vector.shape_cast %161 : vector<1x1x128xf32> to vector<1x128xf32>
    %c0_134 = arith.constant 0 : index
    %c0_135 = arith.constant 0 : index
    %c0_136 = arith.constant 0 : index
    %163 = vector.load %arg12[%c0_134, %c0_135, %c0_136] : memref<2x1x128xf32, #tpu.memory_space<vmem>>, vector<1x1x128xf32>
    %164 = vector.shape_cast %163 : vector<1x1x128xf32> to vector<1x128xf32>
    %cst_137 = arith.constant dense<0.000000e+00> : vector<128xf32>
    %165 = vector.multi_reduction <add>, %160, %cst_137 [0] : vector<32x128xf32> to vector<128xf32>
    %166 = vector.shape_cast %165 : vector<128xf32> to vector<1x128xf32>
    %167 = arith.mulf %160, %160 : vector<32x128xf32>
    %cst_138 = arith.constant dense<0.000000e+00> : vector<128xf32>
    %168 = vector.multi_reduction <add>, %167, %cst_138 [0] : vector<32x128xf32> to vector<128xf32>
    %169 = vector.shape_cast %168 : vector<128xf32> to vector<1x128xf32>
    %170 = tpu.concatenate %166, %169 in 0 : vector<1x128xf32>, vector<1x128xf32> -> vector<2x128xf32>
    %cst_139 = arith.constant dense<0.000000e+00> : vector<2x128xf32>
    %171 = tpu.matmul %170, %0, %cst_139 {dimension_numbers = #tpu.dot_dimension_numbers<[1], [0], [0], [1], [0, 0, 1, 1], [], []>} : vector<2x128xf32>, vector<128x128xf32>, vector<2x128xf32> -> vector<2x128xf32>
    %cst_140 = arith.constant 0.001953125 : f32
    %172 = vector.broadcast %cst_140 : f32 to vector<2x128xf32>
    %173 = arith.mulf %171, %172 : vector<2x128xf32>
    %174 = vector.extract_strided_slice %173 {offsets = [0, 0], sizes = [1, 128], strides = [1, 1]} : vector<2x128xf32> to vector<1x128xf32>
    %175 = vector.extract_strided_slice %173 {offsets = [1, 0], sizes = [1, 128], strides = [1, 1]} : vector<2x128xf32> to vector<1x128xf32>
    %176 = arith.mulf %174, %174 : vector<1x128xf32>
    %177 = arith.subf %175, %176 : vector<1x128xf32>
    %cst_141 = arith.constant 0.000000e+00 : f32
    %178 = vector.broadcast %cst_141 : f32 to vector<1x128xf32>
    %179 = arith.maximumf %177, %178 : vector<1x128xf32>
    %180 = vector.broadcast %174 : vector<1x128xf32> to vector<32x128xf32>
    %181 = arith.subf %160, %180 : vector<32x128xf32>
    %cst_142 = arith.constant 9.99999974E-6 : f32
    %182 = vector.broadcast %cst_142 : f32 to vector<1x128xf32>
    %183 = arith.addf %179, %182 : vector<1x128xf32>
    %184 = math.rsqrt %183 : vector<1x128xf32>
    %185 = vector.broadcast %184 : vector<1x128xf32> to vector<32x128xf32>
    %186 = arith.mulf %181, %185 : vector<32x128xf32>
    %187 = vector.broadcast %162 : vector<1x128xf32> to vector<32x128xf32>
    %188 = arith.mulf %186, %187 : vector<32x128xf32>
    %189 = vector.broadcast %164 : vector<1x128xf32> to vector<32x128xf32>
    %190 = arith.addf %188, %189 : vector<32x128xf32>
    %191 = vector.shape_cast %190 : vector<32x128xf32> to vector<2x16x128xf32>
    %c0_143 = arith.constant 0 : index
    %c1_144 = arith.constant 1 : index
    %c0_145 = arith.constant 0 : index
    %192 = vector.load %arg17[%c0_143, %c1_144, %c0_145] : memref<2x18x128xf32, #tpu.memory_space<vmem>>, vector<2x16x128xf32>
    tpu.vector_store %arg17[%c0_143, %c1_144, %c0_145], %191 {strides = array<i32>} : memref<2x18x128xf32, #tpu.memory_space<vmem>>, vector<2x16x128xf32>,
    %c0_146 = arith.constant 0 : index
    %c0_147 = arith.constant 0 : index
    %c0_148 = arith.constant 0 : index
    %193 = vector.load %arg17[%c0_146, %c0_147, %c0_148] : memref<2x18x128xf32, #tpu.memory_space<vmem>>, vector<2x16x128xf32>
    %194 = vector.shape_cast %193 : vector<2x16x128xf32> to vector<32x128xf32>
    %c0_149 = arith.constant 0 : index
    %c1_150 = arith.constant 1 : index
    %c0_151 = arith.constant 0 : index
    %195 = vector.load %arg17[%c0_149, %c1_150, %c0_151] : memref<2x18x128xf32, #tpu.memory_space<vmem>>, vector<2x16x128xf32>
    %196 = vector.shape_cast %195 : vector<2x16x128xf32> to vector<32x128xf32>
    %c0_152 = arith.constant 0 : index
    %c2_153 = arith.constant 2 : index
    %c0_154 = arith.constant 0 : index
    %197 = vector.load %arg17[%c0_152, %c2_153, %c0_154] : memref<2x18x128xf32, #tpu.memory_space<vmem>>, vector<2x16x128xf32>
    %198 = vector.shape_cast %197 : vector<2x16x128xf32> to vector<32x128xf32>
    %c1_155 = arith.constant 1 : index
    %c0_156 = arith.constant 0 : index
    %c0_157 = arith.constant 0 : index
    %199 = vector.load %arg2[%c1_155, %c0_156, %c0_157] : memref<2x1x128xf32, #tpu.memory_space<vmem>>, vector<1x1x128xf32>
    %200 = vector.shape_cast %199 : vector<1x1x128xf32> to vector<1x128xf32>
    %c1_158 = arith.constant 1 : index
    %c0_159 = arith.constant 0 : index
    %c0_160 = arith.constant 0 : index
    %c0_161 = arith.constant 0 : index
    %201 = vector.load %arg1[%c1_158, %c0_159, %c0_160, %c0_161] : memref<2x3x128x128xf32, #tpu.memory_space<vmem>>, vector<1x1x128x128xf32>
    %202 = vector.shape_cast %201 : vector<1x1x128x128xf32> to vector<128x128xf32>
    %cst_162 = arith.constant dense<0.000000e+00> : vector<32x128xf32>
    %203 = tpu.matmul %194, %202, %cst_162 {dimension_numbers = #tpu.dot_dimension_numbers<[1], [0], [0], [1], [0, 0, 1, 1], [], []>} : vector<32x128xf32>, vector<128x128xf32>, vector<32x128xf32> -> vector<32x128xf32>
    %204 = vector.broadcast %200 : vector<1x128xf32> to vector<32x128xf32>
    %205 = arith.addf %204, %203 : vector<32x128xf32>
    %c1_163 = arith.constant 1 : index
    %c1_164 = arith.constant 1 : index
    %c0_165 = arith.constant 0 : index
    %c0_166 = arith.constant 0 : index
    %206 = vector.load %arg1[%c1_163, %c1_164, %c0_165, %c0_166] : memref<2x3x128x128xf32, #tpu.memory_space<vmem>>, vector<1x1x128x128xf32>
    %207 = vector.shape_cast %206 : vector<1x1x128x128xf32> to vector<128x128xf32>
    %cst_167 = arith.constant dense<0.000000e+00> : vector<32x128xf32>
    %208 = tpu.matmul %196, %207, %cst_167 {dimension_numbers = #tpu.dot_dimension_numbers<[1], [0], [0], [1], [0, 0, 1, 1], [], []>} : vector<32x128xf32>, vector<128x128xf32>, vector<32x128xf32> -> vector<32x128xf32>
    %209 = arith.addf %205, %208 : vector<32x128xf32>
    %c1_168 = arith.constant 1 : index
    %c2_169 = arith.constant 2 : index
    %c0_170 = arith.constant 0 : index
    %c0_171 = arith.constant 0 : index
    %210 = vector.load %arg1[%c1_168, %c2_169, %c0_170, %c0_171] : memref<2x3x128x128xf32, #tpu.memory_space<vmem>>, vector<1x1x128x128xf32>
    %211 = vector.shape_cast %210 : vector<1x1x128x128xf32> to vector<128x128xf32>
    %cst_172 = arith.constant dense<0.000000e+00> : vector<32x128xf32>
    %212 = tpu.matmul %198, %211, %cst_172 {dimension_numbers = #tpu.dot_dimension_numbers<[1], [0], [0], [1], [0, 0, 1, 1], [], []>} : vector<32x128xf32>, vector<128x128xf32>, vector<32x128xf32> -> vector<32x128xf32>
    %213 = arith.addf %209, %212 : vector<32x128xf32>
    %cst_173 = arith.constant 5.000000e-01 : f32
    %214 = vector.broadcast %cst_173 : f32 to vector<32x128xf32>
    %215 = arith.mulf %214, %213 : vector<32x128xf32>
    %cst_174 = arith.constant 0.707106769 : f32
    %216 = vector.broadcast %cst_174 : f32 to vector<32x128xf32>
    %217 = arith.mulf %213, %216 : vector<32x128xf32>
    %218 = math.erf %217 : vector<32x128xf32>
    %cst_175 = arith.constant 1.000000e+00 : f32
    %219 = vector.broadcast %cst_175 : f32 to vector<32x128xf32>
    %220 = arith.addf %219, %218 : vector<32x128xf32>
    %221 = arith.mulf %215, %220 : vector<32x128xf32>
    %c1_176 = arith.constant 1 : index
    %c0_177 = arith.constant 0 : index
    %c0_178 = arith.constant 0 : index
    %222 = vector.load %arg3[%c1_176, %c0_177, %c0_178] : memref<2x1x128xf32, #tpu.memory_space<vmem>>, vector<1x1x128xf32>
    %223 = vector.shape_cast %222 : vector<1x1x128xf32> to vector<1x128xf32>
    %c1_179 = arith.constant 1 : index
    %c0_180 = arith.constant 0 : index
    %c0_181 = arith.constant 0 : index
    %224 = vector.load %arg4[%c1_179, %c0_180, %c0_181] : memref<2x1x128xf32, #tpu.memory_space<vmem>>, vector<1x1x128xf32>
    %225 = vector.shape_cast %224 : vector<1x1x128xf32> to vector<1x128xf32>
    %cst_182 = arith.constant dense<0.000000e+00> : vector<128xf32>
    %226 = vector.multi_reduction <add>, %221, %cst_182 [0] : vector<32x128xf32> to vector<128xf32>
    %227 = vector.shape_cast %226 : vector<128xf32> to vector<1x128xf32>
    %228 = arith.mulf %221, %221 : vector<32x128xf32>
    %cst_183 = arith.constant dense<0.000000e+00> : vector<128xf32>
    %229 = vector.multi_reduction <add>, %228, %cst_183 [0] : vector<32x128xf32> to vector<128xf32>
    %230 = vector.shape_cast %229 : vector<128xf32> to vector<1x128xf32>
    %231 = tpu.concatenate %227, %230 in 0 : vector<1x128xf32>, vector<1x128xf32> -> vector<2x128xf32>
    %cst_184 = arith.constant dense<0.000000e+00> : vector<2x128xf32>
    %232 = tpu.matmul %231, %0, %cst_184 {dimension_numbers = #tpu.dot_dimension_numbers<[1], [0], [0], [1], [0, 0, 1, 1], [], []>} : vector<2x128xf32>, vector<128x128xf32>, vector<2x128xf32> -> vector<2x128xf32>
    %cst_185 = arith.constant 0.001953125 : f32
    %233 = vector.broadcast %cst_185 : f32 to vector<2x128xf32>
    %234 = arith.mulf %232, %233 : vector<2x128xf32>
    %235 = vector.extract_strided_slice %234 {offsets = [0, 0], sizes = [1, 128], strides = [1, 1]} : vector<2x128xf32> to vector<1x128xf32>
    %236 = vector.extract_strided_slice %234 {offsets = [1, 0], sizes = [1, 128], strides = [1, 1]} : vector<2x128xf32> to vector<1x128xf32>
    %237 = arith.mulf %235, %235 : vector<1x128xf32>
    %238 = arith.subf %236, %237 : vector<1x128xf32>
    %cst_186 = arith.constant 0.000000e+00 : f32
    %239 = vector.broadcast %cst_186 : f32 to vector<1x128xf32>
    %240 = arith.maximumf %238, %239 : vector<1x128xf32>
    %241 = vector.broadcast %235 : vector<1x128xf32> to vector<32x128xf32>
    %242 = arith.subf %221, %241 : vector<32x128xf32>
    %cst_187 = arith.constant 9.99999974E-6 : f32
    %243 = vector.broadcast %cst_187 : f32 to vector<1x128xf32>
    %244 = arith.addf %240, %243 : vector<1x128xf32>
    %245 = math.rsqrt %244 : vector<1x128xf32>
    %246 = vector.broadcast %245 : vector<1x128xf32> to vector<32x128xf32>
    %247 = arith.mulf %242, %246 : vector<32x128xf32>
    %248 = vector.broadcast %223 : vector<1x128xf32> to vector<32x128xf32>
    %249 = arith.mulf %247, %248 : vector<32x128xf32>
    %250 = vector.broadcast %225 : vector<1x128xf32> to vector<32x128xf32>
    %251 = arith.addf %249, %250 : vector<32x128xf32>
    %252 = arith.addf %251, %196 : vector<32x128xf32>
    %c1_188 = arith.constant 1 : index
    %c0_189 = arith.constant 0 : index
    %c0_190 = arith.constant 0 : index
    %253 = vector.load %arg5[%c1_188, %c0_189, %c0_190] : memref<2x128x128xf32, #tpu.memory_space<vmem>>, vector<1x128x128xf32>
    %254 = vector.shape_cast %253 : vector<1x128x128xf32> to vector<128x128xf32>
    %cst_191 = arith.constant dense<0.000000e+00> : vector<32x128xf32>
    %255 = tpu.matmul %252, %254, %cst_191 {dimension_numbers = #tpu.dot_dimension_numbers<[1], [0], [0], [1], [0, 0, 1, 1], [], []>} : vector<32x128xf32>, vector<128x128xf32>, vector<32x128xf32> -> vector<32x128xf32>
    %c1_192 = arith.constant 1 : index
    %c0_193 = arith.constant 0 : index
    %c0_194 = arith.constant 0 : index
    %256 = vector.load %arg6[%c1_192, %c0_193, %c0_194] : memref<2x1x128xf32, #tpu.memory_space<vmem>>, vector<1x1x128xf32>
    %257 = vector.shape_cast %256 : vector<1x1x128xf32> to vector<1x128xf32>
    %258 = vector.broadcast %257 : vector<1x128xf32> to vector<32x128xf32>
    %259 = arith.addf %255, %258 : vector<32x128xf32>
    %cst_195 = arith.constant 5.000000e-01 : f32
    %260 = vector.broadcast %cst_195 : f32 to vector<32x128xf32>
    %261 = arith.mulf %260, %259 : vector<32x128xf32>
    %cst_196 = arith.constant 0.707106769 : f32
    %262 = vector.broadcast %cst_196 : f32 to vector<32x128xf32>
    %263 = arith.mulf %259, %262 : vector<32x128xf32>
    %264 = math.erf %263 : vector<32x128xf32>
    %cst_197 = arith.constant 1.000000e+00 : f32
    %265 = vector.broadcast %cst_197 : f32 to vector<32x128xf32>
    %266 = arith.addf %265, %264 : vector<32x128xf32>
    %267 = arith.mulf %261, %266 : vector<32x128xf32>
    %c1_198 = arith.constant 1 : index
    %c0_199 = arith.constant 0 : index
    %c0_200 = arith.constant 0 : index
    %268 = vector.load %arg7[%c1_198, %c0_199, %c0_200] : memref<2x1x128xf32, #tpu.memory_space<vmem>>, vector<1x1x128xf32>
    %269 = vector.shape_cast %268 : vector<1x1x128xf32> to vector<1x128xf32>
    %c1_201 = arith.constant 1 : index
    %c0_202 = arith.constant 0 : index
    %c0_203 = arith.constant 0 : index
    %270 = vector.load %arg8[%c1_201, %c0_202, %c0_203] : memref<2x1x128xf32, #tpu.memory_space<vmem>>, vector<1x1x128xf32>
    %271 = vector.shape_cast %270 : vector<1x1x128xf32> to vector<1x128xf32>
    %cst_204 = arith.constant dense<0.000000e+00> : vector<128xf32>
    %272 = vector.multi_reduction <add>, %267, %cst_204 [0] : vector<32x128xf32> to vector<128xf32>
    %273 = vector.shape_cast %272 : vector<128xf32> to vector<1x128xf32>
    %274 = arith.mulf %267, %267 : vector<32x128xf32>
    %cst_205 = arith.constant dense<0.000000e+00> : vector<128xf32>
    %275 = vector.multi_reduction <add>, %274, %cst_205 [0] : vector<32x128xf32> to vector<128xf32>
    %276 = vector.shape_cast %275 : vector<128xf32> to vector<1x128xf32>
    %277 = tpu.concatenate %273, %276 in 0 : vector<1x128xf32>, vector<1x128xf32> -> vector<2x128xf32>
    %cst_206 = arith.constant dense<0.000000e+00> : vector<2x128xf32>
    %278 = tpu.matmul %277, %0, %cst_206 {dimension_numbers = #tpu.dot_dimension_numbers<[1], [0], [0], [1], [0, 0, 1, 1], [], []>} : vector<2x128xf32>, vector<128x128xf32>, vector<2x128xf32> -> vector<2x128xf32>
    %cst_207 = arith.constant 0.001953125 : f32
    %279 = vector.broadcast %cst_207 : f32 to vector<2x128xf32>
    %280 = arith.mulf %278, %279 : vector<2x128xf32>
    %281 = vector.extract_strided_slice %280 {offsets = [0, 0], sizes = [1, 128], strides = [1, 1]} : vector<2x128xf32> to vector<1x128xf32>
    %282 = vector.extract_strided_slice %280 {offsets = [1, 0], sizes = [1, 128], strides = [1, 1]} : vector<2x128xf32> to vector<1x128xf32>
    %283 = arith.mulf %281, %281 : vector<1x128xf32>
    %284 = arith.subf %282, %283 : vector<1x128xf32>
    %cst_208 = arith.constant 0.000000e+00 : f32
    %285 = vector.broadcast %cst_208 : f32 to vector<1x128xf32>
    %286 = arith.maximumf %284, %285 : vector<1x128xf32>
    %287 = vector.broadcast %281 : vector<1x128xf32> to vector<32x128xf32>
    %288 = arith.subf %267, %287 : vector<32x128xf32>
    %cst_209 = arith.constant 9.99999974E-6 : f32
    %289 = vector.broadcast %cst_209 : f32 to vector<1x128xf32>
    %290 = arith.addf %286, %289 : vector<1x128xf32>
    %291 = math.rsqrt %290 : vector<1x128xf32>
    %292 = vector.broadcast %291 : vector<1x128xf32> to vector<32x128xf32>
    %293 = arith.mulf %288, %292 : vector<32x128xf32>
    %294 = vector.broadcast %269 : vector<1x128xf32> to vector<32x128xf32>
    %295 = arith.mulf %293, %294 : vector<32x128xf32>
    %296 = vector.broadcast %271 : vector<1x128xf32> to vector<32x128xf32>
    %297 = arith.addf %295, %296 : vector<32x128xf32>
    %298 = vector.shape_cast %297 : vector<32x128xf32> to vector<2x16x128xf32>
    %c0_210 = arith.constant 0 : index
    %c1_211 = arith.constant 1 : index
    %c0_212 = arith.constant 0 : index
    %299 = vector.load %arg16[%c0_210, %c1_211, %c0_212] : memref<2x18x128xf32, #tpu.memory_space<vmem>>, vector<2x16x128xf32>
    tpu.vector_store %arg16[%c0_210, %c1_211, %c0_212], %298 {strides = array<i32>} : memref<2x18x128xf32, #tpu.memory_space<vmem>>, vector<2x16x128xf32>,
    %c1_213 = arith.constant 1 : index
    %c0_214 = arith.constant 0 : index
    %c0_215 = arith.constant 0 : index
    %300 = vector.load %arg10[%c1_213, %c0_214, %c0_215] : memref<2x1x128xf32, #tpu.memory_space<vmem>>, vector<1x1x128xf32>
    %301 = vector.shape_cast %300 : vector<1x1x128xf32> to vector<1x128xf32>
    %c0_216 = arith.constant 0 : index
    %c0_217 = arith.constant 0 : index
    %c0_218 = arith.constant 0 : index
    %302 = vector.load %arg0[%c0_216, %c0_217, %c0_218] : memref<2x18x128xf32, #tpu.memory_space<vmem>>, vector<2x16x128xf32>
    %303 = vector.shape_cast %302 : vector<2x16x128xf32> to vector<32x128xf32>
    %c0_219 = arith.constant 0 : index
    %c1_220 = arith.constant 1 : index
    %c0_221 = arith.constant 0 : index
    %304 = vector.load %arg0[%c0_219, %c1_220, %c0_221] : memref<2x18x128xf32, #tpu.memory_space<vmem>>, vector<2x16x128xf32>
    %305 = vector.shape_cast %304 : vector<2x16x128xf32> to vector<32x128xf32>
    %c0_222 = arith.constant 0 : index
    %c2_223 = arith.constant 2 : index
    %c0_224 = arith.constant 0 : index
    %306 = vector.load %arg0[%c0_222, %c2_223, %c0_224] : memref<2x18x128xf32, #tpu.memory_space<vmem>>, vector<2x16x128xf32>
    %307 = vector.shape_cast %306 : vector<2x16x128xf32> to vector<32x128xf32>
    %c2_225 = arith.constant 2 : index
    %c0_226 = arith.constant 0 : index
    %c0_227 = arith.constant 0 : index
    %c0_228 = arith.constant 0 : index
    %308 = vector.load %arg9[%c2_225, %c0_226, %c0_227, %c0_228] : memref<5x3x128x128xf32, #tpu.memory_space<vmem>>, vector<1x1x128x128xf32>
    %309 = vector.shape_cast %308 : vector<1x1x128x128xf32> to vector<128x128xf32>
    %cst_229 = arith.constant dense<0.000000e+00> : vector<32x128xf32>
    %310 = tpu.matmul %303, %309, %cst_229 {dimension_numbers = #tpu.dot_dimension_numbers<[1], [0], [0], [1], [0, 0, 1, 1], [], []>} : vector<32x128xf32>, vector<128x128xf32>, vector<32x128xf32> -> vector<32x128xf32>
    %311 = vector.broadcast %301 : vector<1x128xf32> to vector<32x128xf32>
    %312 = arith.addf %311, %310 : vector<32x128xf32>
    %c2_230 = arith.constant 2 : index
    %c1_231 = arith.constant 1 : index
    %c0_232 = arith.constant 0 : index
    %c0_233 = arith.constant 0 : index
    %313 = vector.load %arg9[%c2_230, %c1_231, %c0_232, %c0_233] : memref<5x3x128x128xf32, #tpu.memory_space<vmem>>, vector<1x1x128x128xf32>
    %314 = vector.shape_cast %313 : vector<1x1x128x128xf32> to vector<128x128xf32>
    %cst_234 = arith.constant dense<0.000000e+00> : vector<32x128xf32>
    %315 = tpu.matmul %305, %314, %cst_234 {dimension_numbers = #tpu.dot_dimension_numbers<[1], [0], [0], [1], [0, 0, 1, 1], [], []>} : vector<32x128xf32>, vector<128x128xf32>, vector<32x128xf32> -> vector<32x128xf32>
    %316 = arith.addf %312, %315 : vector<32x128xf32>
    %c2_235 = arith.constant 2 : index
    %c2_236 = arith.constant 2 : index
    %c0_237 = arith.constant 0 : index
    %c0_238 = arith.constant 0 : index
    %317 = vector.load %arg9[%c2_235, %c2_236, %c0_237, %c0_238] : memref<5x3x128x128xf32, #tpu.memory_space<vmem>>, vector<1x1x128x128xf32>
    %318 = vector.shape_cast %317 : vector<1x1x128x128xf32> to vector<128x128xf32>
    %cst_239 = arith.constant dense<0.000000e+00> : vector<32x128xf32>
    %319 = tpu.matmul %307, %318, %cst_239 {dimension_numbers = #tpu.dot_dimension_numbers<[1], [0], [0], [1], [0, 0, 1, 1], [], []>} : vector<32x128xf32>, vector<128x128xf32>, vector<32x128xf32> -> vector<32x128xf32>
    %320 = arith.addf %316, %319 : vector<32x128xf32>
    %c0_240 = arith.constant 0 : index
    %c0_241 = arith.constant 0 : index
    %c0_242 = arith.constant 0 : index
    %321 = vector.load %arg15[%c0_240, %c0_241, %c0_242] : memref<2x18x128xf32, #tpu.memory_space<vmem>>, vector<2x16x128xf32>
    %322 = vector.shape_cast %321 : vector<2x16x128xf32> to vector<32x128xf32>
    %c0_243 = arith.constant 0 : index
    %c1_244 = arith.constant 1 : index
    %c0_245 = arith.constant 0 : index
    %323 = vector.load %arg15[%c0_243, %c1_244, %c0_245] : memref<2x18x128xf32, #tpu.memory_space<vmem>>, vector<2x16x128xf32>
    %324 = vector.shape_cast %323 : vector<2x16x128xf32> to vector<32x128xf32>
    %c0_246 = arith.constant 0 : index
    %c2_247 = arith.constant 2 : index
    %c0_248 = arith.constant 0 : index
    %325 = vector.load %arg15[%c0_246, %c2_247, %c0_248] : memref<2x18x128xf32, #tpu.memory_space<vmem>>, vector<2x16x128xf32>
    %326 = vector.shape_cast %325 : vector<2x16x128xf32> to vector<32x128xf32>
    %c3 = arith.constant 3 : index
    %c0_249 = arith.constant 0 : index
    %c0_250 = arith.constant 0 : index
    %c0_251 = arith.constant 0 : index
    %327 = vector.load %arg9[%c3, %c0_249, %c0_250, %c0_251] : memref<5x3x128x128xf32, #tpu.memory_space<vmem>>, vector<1x1x128x128xf32>
    %328 = vector.shape_cast %327 : vector<1x1x128x128xf32> to vector<128x128xf32>
    %cst_252 = arith.constant dense<0.000000e+00> : vector<32x128xf32>
    %329 = tpu.matmul %322, %328, %cst_252 {dimension_numbers = #tpu.dot_dimension_numbers<[1], [0], [0], [1], [0, 0, 1, 1], [], []>} : vector<32x128xf32>, vector<128x128xf32>, vector<32x128xf32> -> vector<32x128xf32>
    %330 = arith.addf %320, %329 : vector<32x128xf32>
    %c3_253 = arith.constant 3 : index
    %c1_254 = arith.constant 1 : index
    %c0_255 = arith.constant 0 : index
    %c0_256 = arith.constant 0 : index
    %331 = vector.load %arg9[%c3_253, %c1_254, %c0_255, %c0_256] : memref<5x3x128x128xf32, #tpu.memory_space<vmem>>, vector<1x1x128x128xf32>
    %332 = vector.shape_cast %331 : vector<1x1x128x128xf32> to vector<128x128xf32>
    %cst_257 = arith.constant dense<0.000000e+00> : vector<32x128xf32>
    %333 = tpu.matmul %324, %332, %cst_257 {dimension_numbers = #tpu.dot_dimension_numbers<[1], [0], [0], [1], [0, 0, 1, 1], [], []>} : vector<32x128xf32>, vector<128x128xf32>, vector<32x128xf32> -> vector<32x128xf32>
    %334 = arith.addf %330, %333 : vector<32x128xf32>
    %c3_258 = arith.constant 3 : index
    %c2_259 = arith.constant 2 : index
    %c0_260 = arith.constant 0 : index
    %c0_261 = arith.constant 0 : index
    %335 = vector.load %arg9[%c3_258, %c2_259, %c0_260, %c0_261] : memref<5x3x128x128xf32, #tpu.memory_space<vmem>>, vector<1x1x128x128xf32>
    %336 = vector.shape_cast %335 : vector<1x1x128x128xf32> to vector<128x128xf32>
    %cst_262 = arith.constant dense<0.000000e+00> : vector<32x128xf32>
    %337 = tpu.matmul %326, %336, %cst_262 {dimension_numbers = #tpu.dot_dimension_numbers<[1], [0], [0], [1], [0, 0, 1, 1], [], []>} : vector<32x128xf32>, vector<128x128xf32>, vector<32x128xf32> -> vector<32x128xf32>
    %338 = arith.addf %334, %337 : vector<32x128xf32>
    %c0_263 = arith.constant 0 : index
    %c0_264 = arith.constant 0 : index
    %c0_265 = arith.constant 0 : index
    %339 = vector.load %arg16[%c0_263, %c0_264, %c0_265] : memref<2x18x128xf32, #tpu.memory_space<vmem>>, vector<2x16x128xf32>
    %340 = vector.shape_cast %339 : vector<2x16x128xf32> to vector<32x128xf32>
    %c0_266 = arith.constant 0 : index
    %c1_267 = arith.constant 1 : index
    %c0_268 = arith.constant 0 : index
    %341 = vector.load %arg16[%c0_266, %c1_267, %c0_268] : memref<2x18x128xf32, #tpu.memory_space<vmem>>, vector<2x16x128xf32>
    %342 = vector.shape_cast %341 : vector<2x16x128xf32> to vector<32x128xf32>
    %c0_269 = arith.constant 0 : index
    %c2_270 = arith.constant 2 : index
    %c0_271 = arith.constant 0 : index
    %343 = vector.load %arg16[%c0_269, %c2_270, %c0_271] : memref<2x18x128xf32, #tpu.memory_space<vmem>>, vector<2x16x128xf32>
    %344 = vector.shape_cast %343 : vector<2x16x128xf32> to vector<32x128xf32>
    %c4 = arith.constant 4 : index
    %c0_272 = arith.constant 0 : index
    %c0_273 = arith.constant 0 : index
    %c0_274 = arith.constant 0 : index
    %345 = vector.load %arg9[%c4, %c0_272, %c0_273, %c0_274] : memref<5x3x128x128xf32, #tpu.memory_space<vmem>>, vector<1x1x128x128xf32>
    %346 = vector.shape_cast %345 : vector<1x1x128x128xf32> to vector<128x128xf32>
    %cst_275 = arith.constant dense<0.000000e+00> : vector<32x128xf32>
    %347 = tpu.matmul %340, %346, %cst_275 {dimension_numbers = #tpu.dot_dimension_numbers<[1], [0], [0], [1], [0, 0, 1, 1], [], []>} : vector<32x128xf32>, vector<128x128xf32>, vector<32x128xf32> -> vector<32x128xf32>
    %348 = arith.addf %338, %347 : vector<32x128xf32>
    %c4_276 = arith.constant 4 : index
    %c1_277 = arith.constant 1 : index
    %c0_278 = arith.constant 0 : index
    %c0_279 = arith.constant 0 : index
    %349 = vector.load %arg9[%c4_276, %c1_277, %c0_278, %c0_279] : memref<5x3x128x128xf32, #tpu.memory_space<vmem>>, vector<1x1x128x128xf32>
    %350 = vector.shape_cast %349 : vector<1x1x128x128xf32> to vector<128x128xf32>
    %cst_280 = arith.constant dense<0.000000e+00> : vector<32x128xf32>
    %351 = tpu.matmul %342, %350, %cst_280 {dimension_numbers = #tpu.dot_dimension_numbers<[1], [0], [0], [1], [0, 0, 1, 1], [], []>} : vector<32x128xf32>, vector<128x128xf32>, vector<32x128xf32> -> vector<32x128xf32>
    %352 = arith.addf %348, %351 : vector<32x128xf32>
    %c4_281 = arith.constant 4 : index
    %c2_282 = arith.constant 2 : index
    %c0_283 = arith.constant 0 : index
    %c0_284 = arith.constant 0 : index
    %353 = vector.load %arg9[%c4_281, %c2_282, %c0_283, %c0_284] : memref<5x3x128x128xf32, #tpu.memory_space<vmem>>, vector<1x1x128x128xf32>
    %354 = vector.shape_cast %353 : vector<1x1x128x128xf32> to vector<128x128xf32>
    %cst_285 = arith.constant dense<0.000000e+00> : vector<32x128xf32>
    %355 = tpu.matmul %344, %354, %cst_285 {dimension_numbers = #tpu.dot_dimension_numbers<[1], [0], [0], [1], [0, 0, 1, 1], [], []>} : vector<32x128xf32>, vector<128x128xf32>, vector<32x128xf32> -> vector<32x128xf32>
    %356 = arith.addf %352, %355 : vector<32x128xf32>
    %cst_286 = arith.constant 5.000000e-01 : f32
    %357 = vector.broadcast %cst_286 : f32 to vector<32x128xf32>
    %358 = arith.mulf %357, %356 : vector<32x128xf32>
    %cst_287 = arith.constant 0.707106769 : f32
    %359 = vector.broadcast %cst_287 : f32 to vector<32x128xf32>
    %360 = arith.mulf %356, %359 : vector<32x128xf32>
    %361 = math.erf %360 : vector<32x128xf32>
    %cst_288 = arith.constant 1.000000e+00 : f32
    %362 = vector.broadcast %cst_288 : f32 to vector<32x128xf32>
    %363 = arith.addf %362, %361 : vector<32x128xf32>
    %364 = arith.mulf %358, %363 : vector<32x128xf32>
    %c1_289 = arith.constant 1 : index
    %c0_290 = arith.constant 0 : index
    %c0_291 = arith.constant 0 : index
    %365 = vector.load %arg11[%c1_289, %c0_290, %c0_291] : memref<2x1x128xf32, #tpu.memory_space<vmem>>, vector<1x1x128xf32>
    %366 = vector.shape_cast %365 : vector<1x1x128xf32> to vector<1x128xf32>
    %c1_292 = arith.constant 1 : index
    %c0_293 = arith.constant 0 : index
    %c0_294 = arith.constant 0 : index
    %367 = vector.load %arg12[%c1_292, %c0_293, %c0_294] : memref<2x1x128xf32, #tpu.memory_space<vmem>>, vector<1x1x128xf32>
    %368 = vector.shape_cast %367 : vector<1x1x128xf32> to vector<1x128xf32>
    %cst_295 = arith.constant dense<0.000000e+00> : vector<128xf32>
    %369 = vector.multi_reduction <add>, %364, %cst_295 [0] : vector<32x128xf32> to vector<128xf32>
    %370 = vector.shape_cast %369 : vector<128xf32> to vector<1x128xf32>
    %371 = arith.mulf %364, %364 : vector<32x128xf32>
    %cst_296 = arith.constant dense<0.000000e+00> : vector<128xf32>
    %372 = vector.multi_reduction <add>, %371, %cst_296 [0] : vector<32x128xf32> to vector<128xf32>
    %373 = vector.shape_cast %372 : vector<128xf32> to vector<1x128xf32>
    %374 = tpu.concatenate %370, %373 in 0 : vector<1x128xf32>, vector<1x128xf32> -> vector<2x128xf32>
    %cst_297 = arith.constant dense<0.000000e+00> : vector<2x128xf32>
    %375 = tpu.matmul %374, %0, %cst_297 {dimension_numbers = #tpu.dot_dimension_numbers<[1], [0], [0], [1], [0, 0, 1, 1], [], []>} : vector<2x128xf32>, vector<128x128xf32>, vector<2x128xf32> -> vector<2x128xf32>
    %cst_298 = arith.constant 0.001953125 : f32
    %376 = vector.broadcast %cst_298 : f32 to vector<2x128xf32>
    %377 = arith.mulf %375, %376 : vector<2x128xf32>
    %378 = vector.extract_strided_slice %377 {offsets = [0, 0], sizes = [1, 128], strides = [1, 1]} : vector<2x128xf32> to vector<1x128xf32>
    %379 = vector.extract_strided_slice %377 {offsets = [1, 0], sizes = [1, 128], strides = [1, 1]} : vector<2x128xf32> to vector<1x128xf32>
    %380 = arith.mulf %378, %378 : vector<1x128xf32>
    %381 = arith.subf %379, %380 : vector<1x128xf32>
    %cst_299 = arith.constant 0.000000e+00 : f32
    %382 = vector.broadcast %cst_299 : f32 to vector<1x128xf32>
    %383 = arith.maximumf %381, %382 : vector<1x128xf32>
    %384 = vector.broadcast %378 : vector<1x128xf32> to vector<32x128xf32>
    %385 = arith.subf %364, %384 : vector<32x128xf32>
    %cst_300 = arith.constant 9.99999974E-6 : f32
    %386 = vector.broadcast %cst_300 : f32 to vector<1x128xf32>
    %387 = arith.addf %383, %386 : vector<1x128xf32>
    %388 = math.rsqrt %387 : vector<1x128xf32>
    %389 = vector.broadcast %388 : vector<1x128xf32> to vector<32x128xf32>
    %390 = arith.mulf %385, %389 : vector<32x128xf32>
    %391 = vector.broadcast %366 : vector<1x128xf32> to vector<32x128xf32>
    %392 = arith.mulf %390, %391 : vector<32x128xf32>
    %393 = vector.broadcast %368 : vector<1x128xf32> to vector<32x128xf32>
    %394 = arith.addf %392, %393 : vector<32x128xf32>
    %c0_301 = arith.constant 0 : index
    %c0_302 = arith.constant 0 : index
    %395 = vector.load %arg14[%c0_301, %c0_302] : memref<32x128xf32, #tpu.memory_space<vmem>>, vector<32x128xf32>
    tpu.vector_store %arg14[%c0_301, %c0_302], %394 {strides = array<i32>} : memref<32x128xf32, #tpu.memory_space<vmem>>, vector<32x128xf32>,
    return
  }
}

</mosaic_0001>

<llo_original>
// kernel: dense_conv_mixer_block.1
$region0: #{dense_conv_mixer_block.1}
  #allocation0 [shape = 'u32[]', space=smem, size = 0x4, offset = 0x4, fixed_abs, tag = 'smem constant byte address 0x4 - core index']
  #allocation1 [shape = 'u32[144,128]{1,0:T(1,128)}', space=vmem, size = 0x12000, scoped, tag = 'internal scratch']
  #allocation2 [shape = 'f32[2,18,128]{2,1,0:T(8,128)}', space=vmem, size = 0x6000, scoped, tag = 'scratch operand']
  #allocation3 [shape = 'f32[2,18,128]{2,1,0:T(8,128)}', space=vmem, size = 0x6000, scoped, tag = 'scratch operand']
  #allocation4 [shape = 'f32[2,18,128]{2,1,0:T(8,128)}', space=vmem, size = 0x6000, scoped, tag = 'scratch operand']
  %s0 = inlined_call_operand.vmem [shape: f32[2,18,128], index: 0, kind: input, shape index: {}]
  %s1 = inlined_call_operand.vmem [shape: f32[2,3,128,128], index: 1, kind: input, shape index: {}]
  %s2 = inlined_call_operand.vmem [shape: f32[2,1,128], index: 2, kind: input, shape index: {}]
  %s3 = inlined_call_operand.vmem [shape: f32[2,1,128], index: 3, kind: input, shape index: {}]
  %s4 = inlined_call_operand.vmem [shape: f32[2,1,128], index: 4, kind: input, shape index: {}]
  %s5 = inlined_call_operand.hbm [shape: f32[2,128,128], index: 5, kind: input, shape index: {}]
  %s6 = inlined_call_operand.vmem [shape: f32[2,1,128], index: 6, kind: input, shape index: {}]
  %s7 = inlined_call_operand.vmem [shape: f32[2,1,128], index: 7, kind: input, shape index: {}]
  %s8 = inlined_call_operand.vmem [shape: f32[2,1,128], index: 8, kind: input, shape index: {}]
  %s9 = inlined_call_operand.hbm [shape: f32[5,3,128,128], index: 9, kind: input, shape index: {}]
  %s10 = inlined_call_operand.vmem [shape: f32[2,1,128], index: 10, kind: input, shape index: {}]
  %s11 = inlined_call_operand.vmem [shape: f32[2,1,128], index: 11, kind: input, shape index: {}]
  %s12 = inlined_call_operand.vmem [shape: f32[2,1,128], index: 12, kind: input, shape index: {}]
  %s13 = inlined_call_operand.vmem [shape: f32[128,128], index: 13, kind: input, shape index: {}]
  %s14 = inlined_call_operand.vmem [shape: f32[32,128], index: 14, kind: output, shape index: {}]
  %s15 = sld [smem:[#allocation0]]
  $region74: #{dense_conv_mixer_block.1} parent=0
    _
  %s17 = ssub.s32 1, %s15
  %s18 = scalar_select 0, %s17, %s15
  $region1: #{dense_conv_mixer_block.1} parent=0
    #allocation5 [shape = 'u8[131072]{0}', space=vmem, size = 0x20000, scoped, tag = 'input window, operand 5, single buffered']
    #allocation6 [shape = 's32[1]{0}', space=sflag, size = 0x4, scoped, tag = 'scoped memory for dense_conv_mixer_block.1']
    #allocation7 [shape = 'u8[983040]{0}', space=vmem, size = 0xf0000, scoped, tag = 'input window, operand 9, single buffered']
    #allocation8 [shape = 's32[1]{0}', space=sflag, size = 0x4, scoped, tag = 'scoped memory for dense_conv_mixer_block.1']
    %19 = vsyncpa [#allocation6], 0
    %20 = vsyncpa [#allocation8], 0
    // Predicated region
    $region2: #{dense_conv_mixer_block.1} parent=1 // pred_check
      _
    $region3: #{dense_conv_mixer_block.1} parent=1 // pred_check_branch
      %22 = sbr.rel (0) target = $region5
    $region4: #{dense_conv_mixer_block.1} parent=1 // pred_region
      _
    $region5: #{dense_conv_mixer_block.1} parent=1 // pred_fallthru
      _
    // Predicated region
    $region6: #{dense_conv_mixer_block.1} parent=1 // pred_check
      _
    $region7: #{dense_conv_mixer_block.1} parent=1 // pred_check_branch
      %24 = sbr.rel (0) target = $region9
    $region8: #{dense_conv_mixer_block.1} parent=1 // pred_region
      _
    $region9: #{dense_conv_mixer_block.1} parent=1 // pred_fallthru
      _
    // Predicated region
    $region10: #{dense_conv_mixer_block.1} parent=1 // pred_check
      _
    $region11: #{dense_conv_mixer_block.1} parent=1 // pred_check_branch
      %26 = sbr.rel (0) target = $region13
    $region12: #{dense_conv_mixer_block.1} parent=1 // pred_region
      _
    $region13: #{dense_conv_mixer_block.1} parent=1 // pred_fallthru
      _
    // Predicated region
    $region14: #{dense_conv_mixer_block.1} parent=1 // pred_check
      _
    $region15: #{dense_conv_mixer_block.1} parent=1 // pred_check_branch
      %28 = sbr.rel (0) target = $region17
    $region16: #{dense_conv_mixer_block.1} parent=1 // pred_region
      _
    $region17: #{dense_conv_mixer_block.1} parent=1 // pred_fallthru
      _
    // Predicated region
    $region18: #{dense_conv_mixer_block.1} parent=1 // pred_check
      _
    $region19: #{dense_conv_mixer_block.1} parent=1 // pred_check_branch
      %30 = sbr.rel (0) target = $region21
    $region20: #{dense_conv_mixer_block.1} parent=1 // pred_region
      _
    $region21: #{dense_conv_mixer_block.1} parent=1 // pred_fallthru
      _
    // Predicated region
    $region22: #{dense_conv_mixer_block.1} parent=1 // pred_check
      _
    $region23: #{dense_conv_mixer_block.1} parent=1 // pred_check_branch
      %32 = sbr.rel (0) target = $region25
    $region24: #{dense_conv_mixer_block.1} parent=1 // pred_region
      %s34 = ssub.s32 4096, 4096
      %35 = vsyncadd [#allocation6], %s34
      %s36 = sshll.u32 [#allocation5], 4
      %s37 = int_to_ptr.vmem [resolvable:$true] %s36
      %42 = dma.hbm_to_vmem [thread:$0]  %s5, 4096, %s37, [#allocation6], 128, 128, 8
    $region25: #{dense_conv_mixer_block.1} parent=1 // pred_fallthru
      _
    // Predicated region
    $region26: #{dense_conv_mixer_block.1} parent=1 // pred_check
      _
    $region27: #{dense_conv_mixer_block.1} parent=1 // pred_check_branch
      %44 = sbr.rel (0) target = $region29
    $region28: #{dense_conv_mixer_block.1} parent=1 // pred_region
      _
    $region29: #{dense_conv_mixer_block.1} parent=1 // pred_fallthru
      _
    // Predicated region
    $region30: #{dense_conv_mixer_block.1} parent=1 // pred_check
      _
    $region31: #{dense_conv_mixer_block.1} parent=1 // pred_check_branch
      %46 = sbr.rel (0) target = $region33
    $region32: #{dense_conv_mixer_block.1} parent=1 // pred_region
      _
    $region33: #{dense_conv_mixer_block.1} parent=1 // pred_fallthru
      _
    // Predicated region
    $region34: #{dense_conv_mixer_block.1} parent=1 // pred_check
      _
    $region35: #{dense_conv_mixer_block.1} parent=1 // pred_check_branch
      %48 = sbr.rel (0) target = $region37
    $region36: #{dense_conv_mixer_block.1} parent=1 // pred_region
      _
    $region37: #{dense_conv_mixer_block.1} parent=1 // pred_fallthru
      _
    // Predicated region
    $region38: #{dense_conv_mixer_block.1} parent=1 // pred_check
      _
    $region39: #{dense_conv_mixer_block.1} parent=1 // pred_check_branch
      %50 = sbr.rel (0) target = $region41
    $region40: #{dense_conv_mixer_block.1} parent=1 // pred_region
      %s52 = ssub.s32 30720, 30720
      %53 = vsyncadd [#allocation8], %s52
      %s54 = sshll.u32 [#allocation7], 4
      %s55 = int_to_ptr.vmem [resolvable:$true] %s54
      %60 = dma.hbm_to_vmem [thread:$0]  %s9, 30720, %s55, [#allocation8], 128, 128, 8
    $region41: #{dense_conv_mixer_block.1} parent=1 // pred_fallthru
      _
    // Predicated region
    $region42: #{dense_conv_mixer_block.1} parent=1 // pred_check
      _
    $region43: #{dense_conv_mixer_block.1} parent=1 // pred_check_branch
      %62 = sbr.rel (0) target = $region45
    $region44: #{dense_conv_mixer_block.1} parent=1 // pred_region
      _
    $region45: #{dense_conv_mixer_block.1} parent=1 // pred_fallthru
      _
    // Predicated region
    $region46: #{dense_conv_mixer_block.1} parent=1 // pred_check
      _
    $region47: #{dense_conv_mixer_block.1} parent=1 // pred_check_branch
      %64 = sbr.rel (0) target = $region49
    $region48: #{dense_conv_mixer_block.1} parent=1 // pred_region
      _
    $region49: #{dense_conv_mixer_block.1} parent=1 // pred_fallthru
      _
    // Predicated region
    $region50: #{dense_conv_mixer_block.1} parent=1 // pred_check
      _
    $region51: #{dense_conv_mixer_block.1} parent=1 // pred_check_branch
      %66 = sbr.rel (0) target = $region53
    $region52: #{dense_conv_mixer_block.1} parent=1 // pred_region
      _
    $region53: #{dense_conv_mixer_block.1} parent=1 // pred_fallthru
      _
    // Predicated region
    $region54: #{dense_conv_mixer_block.1} parent=1 // pred_check
      _
    $region55: #{dense_conv_mixer_block.1} parent=1 // pred_check_branch
      %68 = sbr.rel (0) target = $region57
    $region56: #{dense_conv_mixer_block.1} parent=1 // pred_region
      _
    $region57: #{dense_conv_mixer_block.1} parent=1 // pred_fallthru
      _
    // Predicated region
    $region58: #{dense_conv_mixer_block.1} parent=1 // pred_check
      _
    $region59: #{dense_conv_mixer_block.1} parent=1 // pred_check_branch
      %70 = sbr.rel (0) target = $region61
    $region60: #{dense_conv_mixer_block.1} parent=1 // pred_region
      %71 = dma.done [#allocation6], 4096
    $region61: #{dense_conv_mixer_block.1} parent=1 // pred_fallthru
      _
    // Predicated region
    $region62: #{dense_conv_mixer_block.1} parent=1 // pred_check
      _
    $region63: #{dense_conv_mixer_block.1} parent=1 // pred_check_branch
      %73 = sbr.rel (0) target = $region65
    $region64: #{dense_conv_mixer_block.1} parent=1 // pred_region
      %74 = dma.done [#allocation8], 30720
    $region65: #{dense_conv_mixer_block.1} parent=1 // pred_fallthru
      _
    %v75 = vld [vmem:[%s13] sm:$0xff]
    %v76 = vld [vmem:[%s13 + $0x8] sm:$0xff]
    %v77 = vld [vmem:[%s13 + $0x10] sm:$0xff]
    %v78 = vld [vmem:[%s13 + $0x18] sm:$0xff]
    %v79 = vld [vmem:[%s13 + $0x20] sm:$0xff]
    %v80 = vld [vmem:[%s13 + $0x28] sm:$0xff]
    %v81 = vld [vmem:[%s13 + $0x30] sm:$0xff]
    %v82 = vld [vmem:[%s13 + $0x38] sm:$0xff]
    %v83 = vld [vmem:[%s13 + $0x40] sm:$0xff]
    %v84 = vld [vmem:[%s13 + $0x48] sm:$0xff]
    %v85 = vld [vmem:[%s13 + $0x50] sm:$0xff]
    %v86 = vld [vmem:[%s13 + $0x58] sm:$0xff]
    %v87 = vld [vmem:[%s13 + $0x60] sm:$0xff]
    %v88 = vld [vmem:[%s13 + $0x68] sm:$0xff]
    %v89 = vld [vmem:[%s13 + $0x70] sm:$0xff]
    %v90 = vld [vmem:[%s13 + $0x78] sm:$0xff]
    %91 = vst [vmem:[#allocation2] sm:$0xff] 0.0
    %92 = vst [vmem:[#allocation2 + $0x8] sm:$0xff] 0.0
    %93 = vst [vmem:[#allocation2 + $0x10] sm:$0x3] 0.0
    %94 = vst [vmem:[#allocation2 + $0x18] sm:$0xff] 0.0
    %95 = vst [vmem:[#allocation2 + $0x20] sm:$0xff] 0.0
    %96 = vst [vmem:[#allocation2 + $0x28] sm:$0x3] 0.0
    %97 = vst [vmem:[#allocation3] sm:$0xff] 0.0
    %98 = vst [vmem:[#allocation3 + $0x8] sm:$0xff] 0.0
    %99 = vst [vmem:[#allocation3 + $0x10] sm:$0x3] 0.0
    %100 = vst [vmem:[#allocation3 + $0x18] sm:$0xff] 0.0
    %101 = vst [vmem:[#allocation3 + $0x20] sm:$0xff] 0.0
    %102 = vst [vmem:[#allocation3 + $0x28] sm:$0x3] 0.0
    %103 = vst [vmem:[#allocation4] sm:$0xff] 0.0
    %104 = vst [vmem:[#allocation4 + $0x8] sm:$0xff] 0.0
    %105 = vst [vmem:[#allocation4 + $0x10] sm:$0x3] 0.0
    %106 = vst [vmem:[#allocation4 + $0x18] sm:$0xff] 0.0
    %107 = vst [vmem:[#allocation4 + $0x20] sm:$0xff] 0.0
    %108 = vst [vmem:[#allocation4 + $0x28] sm:$0x3] 0.0
    %v109 = vld [vmem:[%s0] sm:$0xff]
    %v110 = vld [vmem:[%s0 + $0x8] sm:$0xff]
    %v111 = vld [vmem:[%s0 + $0x18] sm:$0xff]
    %v112 = vld [vmem:[%s0 + $0x20] sm:$0xff]
    %v113 = vld [vmem:[%s0 + $0x1] sm:$0xff]
    %v114 = vld [vmem:[%s0 + $0x9] sm:$0xff]
    %v115 = vld [vmem:[%s0 + $0x19] sm:$0xff]
    %v116 = vld [vmem:[%s0 + $0x21] sm:$0xff]
    %v117 = vld [vmem:[%s0 + $0x2] sm:$0xff]
    %v118 = vld [vmem:[%s0 + $0xa] sm:$0xff]
    %v119 = vld [vmem:[%s0 + $0x1a] sm:$0xff]
    %v120 = vld [vmem:[%s0 + $0x22] sm:$0xff]
    %v121 = vld [vmem:[%s2] sm:$0x1]
    %v122 = vld [vmem:[%s1] sm:$0xff]
    %v123 = vld [vmem:[%s1 + $0x8] sm:$0xff]
    %v124 = vld [vmem:[%s1 + $0x10] sm:$0xff]
    %v125 = vld [vmem:[%s1 + $0x18] sm:$0xff]
    %v126 = vld [vmem:[%s1 + $0x20] sm:$0xff]
    %v127 = vld [vmem:[%s1 + $0x28] sm:$0xff]
    %v128 = vld [vmem:[%s1 + $0x30] sm:$0xff]
    %v129 = vld [vmem:[%s1 + $0x38] sm:$0xff]
    %v130 = vld [vmem:[%s1 + $0x40] sm:$0xff]
    %v131 = vld [vmem:[%s1 + $0x48] sm:$0xff]
    %v132 = vld [vmem:[%s1 + $0x50] sm:$0xff]
    %v133 = vld [vmem:[%s1 + $0x58] sm:$0xff]
    %v134 = vld [vmem:[%s1 + $0x60] sm:$0xff]
    %v135 = vld [vmem:[%s1 + $0x68] sm:$0xff]
    %v136 = vld [vmem:[%s1 + $0x70] sm:$0xff]
    %v137 = vld [vmem:[%s1 + $0x78] sm:$0xff]
    %138 = vmatprep.subr.mxu0 0.0
    %139 = vmatpush1.msra.mxu0 %v122
    %140 = vmatprep.subr.mxu0 0.0
    %141 = vmatpush1.msra.mxu0 %v123
    %142 = vmatprep.subr.mxu0 0.0
    %143 = vmatpush1.msra.mxu0 %v124
    %144 = vmatprep.subr.mxu0 0.0
    %145 = vmatpush1.msra.mxu0 %v125
    %146 = vmatprep.subr.mxu0 0.0
    %147 = vmatpush1.msra.mxu0 %v126
    %148 = vmatprep.subr.mxu0 0.0
    %149 = vmatpush1.msra.mxu0 %v127
    %150 = vmatprep.subr.mxu0 0.0
    %151 = vmatpush1.msra.mxu0 %v128
    %152 = vmatprep.subr.mxu0 0.0
    %153 = vmatpush1.msra.mxu0 %v129
    %154 = vmatprep.subr.mxu0 0.0
    %155 = vmatpush1.msra.mxu0 %v130
    %156 = vmatprep.subr.mxu0 0.0
    %157 = vmatpush1.msra.mxu0 %v131
    %158 = vmatprep.subr.mxu0 0.0
    %159 = vmatpush1.msra.mxu0 %v132
    %160 = vmatprep.subr.mxu0 0.0
    %161 = vmatpush1.msra.mxu0 %v133
    %162 = vmatprep.subr.mxu0 0.0
    %163 = vmatpush1.msra.mxu0 %v134
    %164 = vmatprep.subr.mxu0 0.0
    %165 = vmatpush1.msra.mxu0 %v135
    %166 = vmatprep.subr.mxu0 0.0
    %167 = vmatpush1.msra.mxu0 %v136
    %168 = vmatprep.subr.mxu0 0.0
    %169 = vmatpush1.msra.mxu0 %v137
    %170 = vmatprep.subr.mxu0 0.0
    %171 = vmatpush1.msra.mxu0 0.0
    %172 = vmatprep.subr.mxu0 0.0
    %173 = vmatpush1.msra.mxu0 0.0
    %174 = vmatprep.subr.mxu0 0.0
    %175 = vmatpush1.msra.mxu0 0.0
    %176 = vmatprep.subr.mxu0 0.0
    %177 = vmatpush1.msra.mxu0 0.0
    %178 = vmatprep.subr.mxu0 0.0
    %179 = vmatpush1.msra.mxu0 0.0
    %180 = vmatprep.subr.mxu0 0.0
    %181 = vmatpush1.msra.mxu0 0.0
    %182 = vmatprep.subr.mxu0 0.0
    %183 = vmatpush1.msra.mxu0 0.0
    %184 = vmatprep.subr.mxu0 0.0
    %185 = vmatpush1.msra.mxu0 0.0
    %186 = vmatprep.subr.mxu0 0.0
    %187 = vmatpush1.msra.mxu0 0.0
    %188 = vmatprep.subr.mxu0 0.0
    %189 = vmatpush1.msra.mxu0 0.0
    %190 = vmatprep.subr.mxu0 0.0
    %191 = vmatpush1.msra.mxu0 0.0
    %192 = vmatprep.subr.mxu0 0.0
    %193 = vmatpush1.msra.mxu0 0.0
    %194 = vmatprep.subr.mxu0 0.0
    %195 = vmatpush1.msra.mxu0 0.0
    %196 = vmatprep.subr.mxu0 0.0
    %197 = vmatpush1.msra.mxu0 0.0
    %198 = vmatprep.subr.mxu0 0.0
    %199 = vmatpush1.msra.mxu0 0.0
    %200 = vmatprep.subr.mxu0 0.0
    %201 = vmatpush1.msra.mxu0 0.0
    %202 = vmatprep.mubr.f32.mxu0 0.0
    %203 = vmatmul.mubr.f32.gmra.mrb[0].mxu0 %v109
    %v204 = vpop.f32.mrb[0].mxu0
    %v205 = vadd.f32 0.0, %v204
    %v206 = vpop.f32.mrb[0].mxu0
    %207 = vmatprep.mubr.f32.mxu0 0.0
    %208 = vmatmul.mubr.f32.gmra.mrb[0].mxu0 %v110
    %v209 = vpop.f32.mrb[0].mxu0
    %v210 = vadd.f32 0.0, %v209
    %v211 = vpop.f32.mrb[0].mxu0
    %212 = vmatprep.mubr.f32.mxu0 0.0
    %213 = vmatmul.mubr.f32.gmra.mrb[0].mxu0 %v111
    %v214 = vpop.f32.mrb[0].mxu0
    %v215 = vadd.f32 0.0, %v214
    %v216 = vpop.f32.mrb[0].mxu0
    %217 = vmatprep.mubr.f32.mxu0 0.0
    %218 = vmatmul.mubr.f32.gmra.mrb[0].mxu0 %v112
    %v219 = vpop.f32.mrb[0].mxu0
    %v220 = vadd.f32 0.0, %v219
    %v221 = vpop.f32.mrb[0].mxu0
    %222 = vdwg.mxu0
    %v224 = vlaneseq
    %v225 = vshrl.u32 %v224, 7
    %v226 = vsub.s32 0, %v225
    %v227 = vrot.slane %v121, %v226
    %v229 = vadd.f32 %v227, %v205
    %v230 = vadd.f32 %v227, %v210
    %v231 = vadd.f32 %v227, %v215
    %v232 = vadd.f32 %v227, %v220
    %s233 = scalar_lea.vmem %s1, 128
    %v234 = vld [vmem:[%s233] sm:$0xff]
    %v235 = vld [vmem:[%s233 + $0x8] sm:$0xff]
    %v236 = vld [vmem:[%s233 + $0x10] sm:$0xff]
    %v237 = vld [vmem:[%s233 + $0x18] sm:$0xff]
    %v238 = vld [vmem:[%s233 + $0x20] sm:$0xff]
    %v239 = vld [vmem:[%s233 + $0x28] sm:$0xff]
    %v240 = vld [vmem:[%s233 + $0x30] sm:$0xff]
    %v241 = vld [vmem:[%s233 + $0x38] sm:$0xff]
    %v242 = vld [vmem:[%s233 + $0x40] sm:$0xff]
    %v243 = vld [vmem:[%s233 + $0x48] sm:$0xff]
    %v244 = vld [vmem:[%s233 + $0x50] sm:$0xff]
    %v245 = vld [vmem:[%s233 + $0x58] sm:$0xff]
    %v246 = vld [vmem:[%s233 + $0x60] sm:$0xff]
    %v247 = vld [vmem:[%s233 + $0x68] sm:$0xff]
    %v248 = vld [vmem:[%s233 + $0x70] sm:$0xff]
    %v249 = vld [vmem:[%s233 + $0x78] sm:$0xff]
    %250 = vmatprep.subr.mxu0 0.0
    %251 = vmatpush1.msra.mxu0 %v234
    %252 = vmatprep.subr.mxu0 0.0
    %253 = vmatpush1.msra.mxu0 %v235
    %254 = vmatprep.subr.mxu0 0.0
    %255 = vmatpush1.msra.mxu0 %v236
    %256 = vmatprep.subr.mxu0 0.0
    %257 = vmatpush1.msra.mxu0 %v237
    %258 = vmatprep.subr.mxu0 0.0
    %259 = vmatpush1.msra.mxu0 %v238
    %260 = vmatprep.subr.mxu0 0.0
    %261 = vmatpush1.msra.mxu0 %v239
    %262 = vmatprep.subr.mxu0 0.0
    %263 = vmatpush1.msra.mxu0 %v240
    %264 = vmatprep.subr.mxu0 0.0
    %265 = vmatpush1.msra.mxu0 %v241
    %266 = vmatprep.subr.mxu0 0.0
    %267 = vmatpush1.msra.mxu0 %v242
    %268 = vmatprep.subr.mxu0 0.0
    %269 = vmatpush1.msra.mxu0 %v243
    %270 = vmatprep.subr.mxu0 0.0
    %271 = vmatpush1.msra.mxu0 %v244
    %272 = vmatprep.subr.mxu0 0.0
    %273 = vmatpush1.msra.mxu0 %v245
    %274 = vmatprep.subr.mxu0 0.0
    %275 = vmatpush1.msra.mxu0 %v246
    %276 = vmatprep.subr.mxu0 0.0
    %277 = vmatpush1.msra.mxu0 %v247
    %278 = vmatprep.subr.mxu0 0.0
    %279 = vmatpush1.msra.mxu0 %v248
    %280 = vmatprep.subr.mxu0 0.0
    %281 = vmatpush1.msra.mxu0 %v249
    %282 = vmatprep.subr.mxu0 0.0
    %283 = vmatpush1.msra.mxu0 0.0
    %284 = vmatprep.subr.mxu0 0.0
    %285 = vmatpush1.msra.mxu0 0.0
    %286 = vmatprep.subr.mxu0 0.0
    %287 = vmatpush1.msra.mxu0 0.0
    %288 = vmatprep.subr.mxu0 0.0
    %289 = vmatpush1.msra.mxu0 0.0
    %290 = vmatprep.subr.mxu0 0.0
    %291 = vmatpush1.msra.mxu0 0.0
    %292 = vmatprep.subr.mxu0 0.0
    %293 = vmatpush1.msra.mxu0 0.0
    %294 = vmatprep.subr.mxu0 0.0
    %295 = vmatpush1.msra.mxu0 0.0
    %296 = vmatprep.subr.mxu0 0.0
    %297 = vmatpush1.msra.mxu0 0.0
    %298 = vmatprep.subr.mxu0 0.0
    %299 = vmatpush1.msra.mxu0 0.0
    %300 = vmatprep.subr.mxu0 0.0
    %301 = vmatpush1.msra.mxu0 0.0
    %302 = vmatprep.subr.mxu0 0.0
    %303 = vmatpush1.msra.mxu0 0.0
    %304 = vmatprep.subr.mxu0 0.0
    %305 = vmatpush1.msra.mxu0 0.0
    %306 = vmatprep.subr.mxu0 0.0
    %307 = vmatpush1.msra.mxu0 0.0
    %308 = vmatprep.subr.mxu0 0.0
    %309 = vmatpush1.msra.mxu0 0.0
    %310 = vmatprep.subr.mxu0 0.0
    %311 = vmatpush1.msra.mxu0 0.0
    %312 = vmatprep.subr.mxu0 0.0
    %313 = vmatpush1.msra.mxu0 0.0
    %314 = vmatprep.mubr.f32.mxu0 0.0
    %315 = vmatmul.mubr.f32.gmra.mrb[0].mxu0 %v113
    %v316 = vpop.f32.mrb[0].mxu0
    %v317 = vadd.f32 0.0, %v316
    %v318 = vpop.f32.mrb[0].mxu0
    %319 = vmatprep.mubr.f32.mxu0 0.0
    %320 = vmatmul.mubr.f32.gmra.mrb[0].mxu0 %v114
    %v321 = vpop.f32.mrb[0].mxu0
    %v322 = vadd.f32 0.0, %v321
    %v323 = vpop.f32.mrb[0].mxu0
    %324 = vmatprep.mubr.f32.mxu0 0.0
    %325 = vmatmul.mubr.f32.gmra.mrb[0].mxu0 %v115
    %v326 = vpop.f32.mrb[0].mxu0
    %v327 = vadd.f32 0.0, %v326
    %v328 = vpop.f32.mrb[0].mxu0
    %329 = vmatprep.mubr.f32.mxu0 0.0
    %330 = vmatmul.mubr.f32.gmra.mrb[0].mxu0 %v116
    %v331 = vpop.f32.mrb[0].mxu0
    %v332 = vadd.f32 0.0, %v331
    %v333 = vpop.f32.mrb[0].mxu0
    %334 = vdwg.mxu0
    %v335 = vadd.f32 %v229, %v317
    %v336 = vadd.f32 %v230, %v322
    %v337 = vadd.f32 %v231, %v327
    %v338 = vadd.f32 %v232, %v332
    %s339 = scalar_lea.vmem %s1, 256
    %v340 = vld [vmem:[%s339] sm:$0xff]
    %v341 = vld [vmem:[%s339 + $0x8] sm:$0xff]
    %v342 = vld [vmem:[%s339 + $0x10] sm:$0xff]
    %v343 = vld [vmem:[%s339 + $0x18] sm:$0xff]
    %v344 = vld [vmem:[%s339 + $0x20] sm:$0xff]
    %v345 = vld [vmem:[%s339 + $0x28] sm:$0xff]
    %v346 = vld [vmem:[%s339 + $0x30] sm:$0xff]
    %v347 = vld [vmem:[%s339 + $0x38] sm:$0xff]
    %v348 = vld [vmem:[%s339 + $0x40] sm:$0xff]
    %v349 = vld [vmem:[%s339 + $0x48] sm:$0xff]
    %v350 = vld [vmem:[%s339 + $0x50] sm:$0xff]
    %v351 = vld [vmem:[%s339 + $0x58] sm:$0xff]
    %v352 = vld [vmem:[%s339 + $0x60] sm:$0xff]
    %v353 = vld [vmem:[%s339 + $0x68] sm:$0xff]
    %v354 = vld [vmem:[%s339 + $0x70] sm:$0xff]
    %v355 = vld [vmem:[%s339 + $0x78] sm:$0xff]
    %356 = vmatprep.subr.mxu0 0.0
    %357 = vmatpush1.msra.mxu0 %v340
    %358 = vmatprep.subr.mxu0 0.0
    %359 = vmatpush1.msra.mxu0 %v341
    %360 = vmatprep.subr.mxu0 0.0
    %361 = vmatpush1.msra.mxu0 %v342
    %362 = vmatprep.subr.mxu0 0.0
    %363 = vmatpush1.msra.mxu0 %v343
    %364 = vmatprep.subr.mxu0 0.0
    %365 = vmatpush1.msra.mxu0 %v344
    %366 = vmatprep.subr.mxu0 0.0
    %367 = vmatpush1.msra.mxu0 %v345
    %368 = vmatprep.subr.mxu0 0.0
    %369 = vmatpush1.msra.mxu0 %v346
    %370 = vmatprep.subr.mxu0 0.0
    %371 = vmatpush1.msra.mxu0 %v347
    %372 = vmatprep.subr.mxu0 0.0
    %373 = vmatpush1.msra.mxu0 %v348
    %374 = vmatprep.subr.mxu0 0.0
    %375 = vmatpush1.msra.mxu0 %v349
    %376 = vmatprep.subr.mxu0 0.0
    %377 = vmatpush1.msra.mxu0 %v350
    %378 = vmatprep.subr.mxu0 0.0
    %379 = vmatpush1.msra.mxu0 %v351
    %380 = vmatprep.subr.mxu0 0.0
    %381 = vmatpush1.msra.mxu0 %v352
    %382 = vmatprep.subr.mxu0 0.0
    %383 = vmatpush1.msra.mxu0 %v353
    %384 = vmatprep.subr.mxu0 0.0
    %385 = vmatpush1.msra.mxu0 %v354
    %386 = vmatprep.subr.mxu0 0.0
    %387 = vmatpush1.msra.mxu0 %v355
    %388 = vmatprep.subr.mxu0 0.0
    %389 = vmatpush1.msra.mxu0 0.0
    %390 = vmatprep.subr.mxu0 0.0
    %391 = vmatpush1.msra.mxu0 0.0
    %392 = vmatprep.subr.mxu0 0.0
    %393 = vmatpush1.msra.mxu0 0.0
    %394 = vmatprep.subr.mxu0 0.0
    %395 = vmatpush1.msra.mxu0 0.0
    %396 = vmatprep.subr.mxu0 0.0
    %397 = vmatpush1.msra.mxu0 0.0
    %398 = vmatprep.subr.mxu0 0.0
    %399 = vmatpush1.msra.mxu0 0.0
    %400 = vmatprep.subr.mxu0 0.0
    %401 = vmatpush1.msra.mxu0 0.0
    %402 = vmatprep.subr.mxu0 0.0
    %403 = vmatpush1.msra.mxu0 0.0
    %404 = vmatprep.subr.mxu0 0.0
    %405 = vmatpush1.msra.mxu0 0.0
    %406 = vmatprep.subr.mxu0 0.0
    %407 = vmatpush1.msra.mxu0 0.0
    %408 = vmatprep.subr.mxu0 0.0
    %409 = vmatpush1.msra.mxu0 0.0
    %410 = vmatprep.subr.mxu0 0.0
    %411 = vmatpush1.msra.mxu0 0.0
    %412 = vmatprep.subr.mxu0 0.0
    %413 = vmatpush1.msra.mxu0 0.0
    %414 = vmatprep.subr.mxu0 0.0
    %415 = vmatpush1.msra.mxu0 0.0
    %416 = vmatprep.subr.mxu0 0.0
    %417 = vmatpush1.msra.mxu0 0.0
    %418 = vmatprep.subr.mxu0 0.0
    %419 = vmatpush1.msra.mxu0 0.0
    %420 = vmatprep.mubr.f32.mxu0 0.0
    %421 = vmatmul.mubr.f32.gmra.mrb[0].mxu0 %v117
    %v422 = vpop.f32.mrb[0].mxu0
    %v423 = vadd.f32 0.0, %v422
    %v424 = vpop.f32.mrb[0].mxu0
    %425 = vmatprep.mubr.f32.mxu0 0.0
    %426 = vmatmul.mubr.f32.gmra.mrb[0].mxu0 %v118
    %v427 = vpop.f32.mrb[0].mxu0
    %v428 = vadd.f32 0.0, %v427
    %v429 = vpop.f32.mrb[0].mxu0
    %430 = vmatprep.mubr.f32.mxu0 0.0
    %431 = vmatmul.mubr.f32.gmra.mrb[0].mxu0 %v119
    %v432 = vpop.f32.mrb[0].mxu0
    %v433 = vadd.f32 0.0, %v432
    %v434 = vpop.f32.mrb[0].mxu0
    %435 = vmatprep.mubr.f32.mxu0 0.0
    %436 = vmatmul.mubr.f32.gmra.mrb[0].mxu0 %v120
    %v437 = vpop.f32.mrb[0].mxu0
    %v438 = vadd.f32 0.0, %v437
    %v439 = vpop.f32.mrb[0].mxu0
    %440 = vdwg.mxu0
    %v441 = vadd.f32 %v335, %v423
    %v442 = vadd.f32 %v336, %v428
    %v443 = vadd.f32 %v337, %v433
    %v444 = vadd.f32 %v338, %v438
    %v445 = vmul.f32 %v441, 0.5
    %v446 = vmul.f32 %v442, 0.5
    %v447 = vmul.f32 %v443, 0.5
    %v448 = vmul.f32 %v444, 0.5
    %v449 = vmul.f32 %v441, 0.70710677
    %v450 = vmul.f32 %v442, 0.70710677
    %v451 = vmul.f32 %v443, 0.70710677
    %v452 = vmul.f32 %v444, 0.70710677
    %v453 = verf.f32.pop %v449
    %v454 = verf.f32.pop %v450
    %v455 = verf.f32.pop %v451
    %v456 = verf.f32.pop %v452
    %v457 = vadd.f32 %v453, 1.0
    %v458 = vadd.f32 %v454, 1.0
    %v459 = vadd.f32 %v455, 1.0
    %v460 = vadd.f32 %v456, 1.0
    %v461 = vmul.f32 %v445, %v457
    %v462 = vmul.f32 %v446, %v458
    %v463 = vmul.f32 %v447, %v459
    %v464 = vmul.f32 %v448, %v460
    %v465 = vld [vmem:[%s3] sm:$0x1]
    %v466 = vld [vmem:[%s4] sm:$0x1]
    %v467 = vadd.f32 %v461, %v462
    %v468 = vadd.f32 %v467, %v463
    %v469 = vadd.f32 %v468, %v464
    %v470 = vrot.slane %v469, 4
    %v471 = vadd.f32 %v469, %v470
    %v472 = vrot.slane %v471, 2
    %v473 = vadd.f32 %v471, %v472
    %v474 = vrot.slane %v473, 1
    %v475 = vadd.f32 %v473, %v474
    %v476 = vmul.f32 %v461, %v461
    %v477 = vmul.f32 %v462, %v462
    %v478 = vmul.f32 %v463, %v463
    %v479 = vmul.f32 %v464, %v464
    %v480 = vadd.f32 %v476, %v477
    %v481 = vadd.f32 %v480, %v478
    %v482 = vadd.f32 %v481, %v479
    %v483 = vrot.slane %v482, 4
    %v484 = vadd.f32 %v482, %v483
    %v485 = vrot.slane %v484, 2
    %v486 = vadd.f32 %v484, %v485
    %v487 = vrot.slane %v486, 1
    %v488 = vadd.f32 %v486, %v487
    %vm489 = vcmask 1040384
    %v490 = vsel %vm489, %v475, %v488
    %491 = vmatprep.subr.mxu0 0.0
    %492 = vmatpush1.msra.mxu0 %v75
    %493 = vmatprep.subr.mxu0 0.0
    %494 = vmatpush1.msra.mxu0 %v76
    %495 = vmatprep.subr.mxu0 0.0
    %496 = vmatpush1.msra.mxu0 %v77
    %497 = vmatprep.subr.mxu0 0.0
    %498 = vmatpush1.msra.mxu0 %v78
    %499 = vmatprep.subr.mxu0 0.0
    %500 = vmatpush1.msra.mxu0 %v79
    %501 = vmatprep.subr.mxu0 0.0
    %502 = vmatpush1.msra.mxu0 %v80
    %503 = vmatprep.subr.mxu0 0.0
    %504 = vmatpush1.msra.mxu0 %v81
    %505 = vmatprep.subr.mxu0 0.0
    %506 = vmatpush1.msra.mxu0 %v82
    %507 = vmatprep.subr.mxu0 0.0
    %508 = vmatpush1.msra.mxu0 %v83
    %509 = vmatprep.subr.mxu0 0.0
    %510 = vmatpush1.msra.mxu0 %v84
    %511 = vmatprep.subr.mxu0 0.0
    %512 = vmatpush1.msra.mxu0 %v85
    %513 = vmatprep.subr.mxu0 0.0
    %514 = vmatpush1.msra.mxu0 %v86
    %515 = vmatprep.subr.mxu0 0.0
    %516 = vmatpush1.msra.mxu0 %v87
    %517 = vmatprep.subr.mxu0 0.0
    %518 = vmatpush1.msra.mxu0 %v88
    %519 = vmatprep.subr.mxu0 0.0
    %520 = vmatpush1.msra.mxu0 %v89
    %521 = vmatprep.subr.mxu0 0.0
    %522 = vmatpush1.msra.mxu0 %v90
    %523 = vmatprep.subr.mxu0 0.0
    %524 = vmatpush1.msra.mxu0 0.0
    %525 = vmatprep.subr.mxu0 0.0
    %526 = vmatpush1.msra.mxu0 0.0
    %527 = vmatprep.subr.mxu0 0.0
    %528 = vmatpush1.msra.mxu0 0.0
    %529 = vmatprep.subr.mxu0 0.0
    %530 = vmatpush1.msra.mxu0 0.0
    %531 = vmatprep.subr.mxu0 0.0
    %532 = vmatpush1.msra.mxu0 0.0
    %533 = vmatprep.subr.mxu0 0.0
    %534 = vmatpush1.msra.mxu0 0.0
    %535 = vmatprep.subr.mxu0 0.0
    %536 = vmatpush1.msra.mxu0 0.0
    %537 = vmatprep.subr.mxu0 0.0
    %538 = vmatpush1.msra.mxu0 0.0
    %539 = vmatprep.subr.mxu0 0.0
    %540 = vmatpush1.msra.mxu0 0.0
    %541 = vmatprep.subr.mxu0 0.0
    %542 = vmatpush1.msra.mxu0 0.0
    %543 = vmatprep.subr.mxu0 0.0
    %544 = vmatpush1.msra.mxu0 0.0
    %545 = vmatprep.subr.mxu0 0.0
    %546 = vmatpush1.msra.mxu0 0.0
    %547 = vmatprep.subr.mxu0 0.0
    %548 = vmatpush1.msra.mxu0 0.0
    %549 = vmatprep.subr.mxu0 0.0
    %550 = vmatpush1.msra.mxu0 0.0
    %551 = vmatprep.subr.mxu0 0.0
    %552 = vmatpush1.msra.mxu0 0.0
    %553 = vmatprep.subr.mxu0 0.0
    %554 = vmatpush1.msra.mxu0 0.0
    %555 = vmatprep.mubr.f32.mxu0 0.0
    %556 = vmatmul.mubr.f32.gmra.mrb[0].mxu0 %v490
    %v557 = vpop.f32.mrb[0].mxu0
    %v558 = vadd.f32 0.0, %v557
    %v559 = vpop.f32.mrb[0].mxu0
    %560 = vdwg.mxu0
    %v561 = vmul.f32 %v558, 0.001953125
    %v562 = vmul.f32 %v561, %v561
    %v564 = vrot.slane %v562, 7
    %v566 = vsub.f32 %v561, %v564
    %v567 = vmax.f32 %v566, 0.0
    %v568 = vlaneseq
    %v569 = vshrl.u32 %v568, 7
    %v570 = vsub.s32 0, %v569
    %v571 = vrot.slane %v561, %v570
    %v572 = vsub.f32 %v461, %v571
    %v573 = vsub.f32 %v462, %v571
    %v574 = vsub.f32 %v463, %v571
    %v575 = vsub.f32 %v464, %v571
    %v576 = vadd.f32 %v567, 1e-05
    %v577 = vrsqrt.pop %v576
    %v578 = vlaneseq
    %v579 = vshrl.u32 %v578, 7
    %v580 = vsub.s32 1, %v579
    %v581 = vrot.slane %v577, %v580
    %v582 = vmul.f32 %v572, %v581
    %v583 = vmul.f32 %v573, %v581
    %v584 = vmul.f32 %v574, %v581
    %v585 = vmul.f32 %v575, %v581
    %v587 = vlaneseq
    %v588 = vshrl.u32 %v587, 7
    %v589 = vsub.s32 0, %v588
    %v590 = vrot.slane %v465, %v589
    %v592 = vmul.f32 %v582, %v590
    %v593 = vmul.f32 %v583, %v590
    %v594 = vmul.f32 %v584, %v590
    %v595 = vmul.f32 %v585, %v590
    %v597 = vlaneseq
    %v598 = vshrl.u32 %v597, 7
    %v599 = vsub.s32 0, %v598
    %v600 = vrot.slane %v466, %v599
    %v602 = vadd.f32 %v592, %v600
    %v603 = vadd.f32 %v593, %v600
    %v604 = vadd.f32 %v594, %v600
    %v605 = vadd.f32 %v595, %v600
    %v606 = vadd.f32 %v602, %v113
    %v607 = vadd.f32 %v603, %v114
    %v608 = vadd.f32 %v604, %v115
    %v609 = vadd.f32 %v605, %v116
    %v610 = vld [vmem:[#allocation5] sm:$0xff]
    %v611 = vld [vmem:[#allocation5 + $0x8] sm:$0xff]
    %v612 = vld [vmem:[#allocation5 + $0x10] sm:$0xff]
    %v613 = vld [vmem:[#allocation5 + $0x18] sm:$0xff]
    %v614 = vld [vmem:[#allocation5 + $0x20] sm:$0xff]
    %v615 = vld [vmem:[#allocation5 + $0x28] sm:$0xff]
    %v616 = vld [vmem:[#allocation5 + $0x30] sm:$0xff]
    %v617 = vld [vmem:[#allocation5 + $0x38] sm:$0xff]
    %v618 = vld [vmem:[#allocation5 + $0x40] sm:$0xff]
    %v619 = vld [vmem:[#allocation5 + $0x48] sm:$0xff]
    %v620 = vld [vmem:[#allocation5 + $0x50] sm:$0xff]
    %v621 = vld [vmem:[#allocation5 + $0x58] sm:$0xff]
    %v622 = vld [vmem:[#allocation5 + $0x60] sm:$0xff]
    %v623 = vld [vmem:[#allocation5 + $0x68] sm:$0xff]
    %v624 = vld [vmem:[#allocation5 + $0x70] sm:$0xff]
    %v625 = vld [vmem:[#allocation5 + $0x78] sm:$0xff]
    %v626 = vld [vmem:[%s6] sm:$0x1]
    %v628 = vlaneseq
    %v629 = vshrl.u32 %v628, 7
    %v630 = vsub.s32 0, %v629
    %v631 = vrot.slane %v626, %v630
    %633 = vmatprep.subr.mxu0 0.0
    %634 = vmatpush1.msra.mxu0 %v610
    %635 = vmatprep.subr.mxu0 0.0
    %636 = vmatpush1.msra.mxu0 %v611
    %637 = vmatprep.subr.mxu0 0.0
    %638 = vmatpush1.msra.mxu0 %v612
    %639 = vmatprep.subr.mxu0 0.0
    %640 = vmatpush1.msra.mxu0 %v613
    %641 = vmatprep.subr.mxu0 0.0
    %642 = vmatpush1.msra.mxu0 %v614
    %643 = vmatprep.subr.mxu0 0.0
    %644 = vmatpush1.msra.mxu0 %v615
    %645 = vmatprep.subr.mxu0 0.0
    %646 = vmatpush1.msra.mxu0 %v616
    %647 = vmatprep.subr.mxu0 0.0
    %648 = vmatpush1.msra.mxu0 %v617
    %649 = vmatprep.subr.mxu0 0.0
    %650 = vmatpush1.msra.mxu0 %v618
    %651 = vmatprep.subr.mxu0 0.0
    %652 = vmatpush1.msra.mxu0 %v619
    %653 = vmatprep.subr.mxu0 0.0
    %654 = vmatpush1.msra.mxu0 %v620
    %655 = vmatprep.subr.mxu0 0.0
    %656 = vmatpush1.msra.mxu0 %v621
    %657 = vmatprep.subr.mxu0 0.0
    %658 = vmatpush1.msra.mxu0 %v622
    %659 = vmatprep.subr.mxu0 0.0
    %660 = vmatpush1.msra.mxu0 %v623
    %661 = vmatprep.subr.mxu0 0.0
    %662 = vmatpush1.msra.mxu0 %v624
    %663 = vmatprep.subr.mxu0 0.0
    %664 = vmatpush1.msra.mxu0 %v625
    %665 = vmatprep.subr.mxu0 0.0
    %666 = vmatpush1.msra.mxu0 0.0
    %667 = vmatprep.subr.mxu0 0.0
    %668 = vmatpush1.msra.mxu0 0.0
    %669 = vmatprep.subr.mxu0 0.0
    %670 = vmatpush1.msra.mxu0 0.0
    %671 = vmatprep.subr.mxu0 0.0
    %672 = vmatpush1.msra.mxu0 0.0
    %673 = vmatprep.subr.mxu0 0.0
    %674 = vmatpush1.msra.mxu0 0.0
    %675 = vmatprep.subr.mxu0 0.0
    %676 = vmatpush1.msra.mxu0 0.0
    %677 = vmatprep.subr.mxu0 0.0
    %678 = vmatpush1.msra.mxu0 0.0
    %679 = vmatprep.subr.mxu0 0.0
    %680 = vmatpush1.msra.mxu0 0.0
    %681 = vmatprep.subr.mxu0 0.0
    %682 = vmatpush1.msra.mxu0 0.0
    %683 = vmatprep.subr.mxu0 0.0
    %684 = vmatpush1.msra.mxu0 0.0
    %685 = vmatprep.subr.mxu0 0.0
    %686 = vmatpush1.msra.mxu0 0.0
    %687 = vmatprep.subr.mxu0 0.0
    %688 = vmatpush1.msra.mxu0 0.0
    %689 = vmatprep.subr.mxu0 0.0
    %690 = vmatpush1.msra.mxu0 0.0
    %691 = vmatprep.subr.mxu0 0.0
    %692 = vmatpush1.msra.mxu0 0.0
    %693 = vmatprep.subr.mxu0 0.0
    %694 = vmatpush1.msra.mxu0 0.0
    %695 = vmatprep.subr.mxu0 0.0
    %696 = vmatpush1.msra.mxu0 0.0
    %697 = vmatprep.mubr.f32.mxu0 0.0
    %698 = vmatmul.mubr.f32.gmra.mrb[0].mxu0 %v606
    %v699 = vpop.f32.mrb[0].mxu0
    %v700 = vadd.f32 %v631, %v699
    %v701 = vpop.f32.mrb[0].mxu0
    %702 = vmatprep.mubr.f32.mxu0 0.0
    %703 = vmatmul.mubr.f32.gmra.mrb[0].mxu0 %v607
    %v704 = vpop.f32.mrb[0].mxu0
    %v705 = vadd.f32 %v631, %v704
    %v706 = vpop.f32.mrb[0].mxu0
    %707 = vmatprep.mubr.f32.mxu0 0.0
    %708 = vmatmul.mubr.f32.gmra.mrb[0].mxu0 %v608
    %v709 = vpop.f32.mrb[0].mxu0
    %v710 = vadd.f32 %v631, %v709
    %v711 = vpop.f32.mrb[0].mxu0
    %712 = vmatprep.mubr.f32.mxu0 0.0
    %713 = vmatmul.mubr.f32.gmra.mrb[0].mxu0 %v609
    %v714 = vpop.f32.mrb[0].mxu0
    %v715 = vadd.f32 %v631, %v714
    %v716 = vpop.f32.mrb[0].mxu0
    %717 = vdwg.mxu0
    %v718 = vmul.f32 %v700, 0.5
    %v719 = vmul.f32 %v705, 0.5
    %v720 = vmul.f32 %v710, 0.5
    %v721 = vmul.f32 %v715, 0.5
    %v722 = vmul.f32 %v700, 0.70710677
    %v723 = vmul.f32 %v705, 0.70710677
    %v724 = vmul.f32 %v710, 0.70710677
    %v725 = vmul.f32 %v715, 0.70710677
    %v726 = verf.f32.pop %v722
    %v727 = verf.f32.pop %v723
    %v728 = verf.f32.pop %v724
    %v729 = verf.f32.pop %v725
    %v730 = vadd.f32 %v726, 1.0
    %v731 = vadd.f32 %v727, 1.0
    %v732 = vadd.f32 %v728, 1.0
    %v733 = vadd.f32 %v729, 1.0
    %v734 = vmul.f32 %v718, %v730
    %v735 = vmul.f32 %v719, %v731
    %v736 = vmul.f32 %v720, %v732
    %v737 = vmul.f32 %v721, %v733
    %v738 = vld [vmem:[%s7] sm:$0x1]
    %v739 = vld [vmem:[%s8] sm:$0x1]
    %v740 = vadd.f32 %v734, %v735
    %v741 = vadd.f32 %v740, %v736
    %v742 = vadd.f32 %v741, %v737
    %v743 = vrot.slane %v742, 4
    %v744 = vadd.f32 %v742, %v743
    %v745 = vrot.slane %v744, 2
    %v746 = vadd.f32 %v744, %v745
    %v747 = vrot.slane %v746, 1
    %v748 = vadd.f32 %v746, %v747
    %v749 = vmul.f32 %v734, %v734
    %v750 = vmul.f32 %v735, %v735
    %v751 = vmul.f32 %v736, %v736
    %v752 = vmul.f32 %v737, %v737
    %v753 = vadd.f32 %v749, %v750
    %v754 = vadd.f32 %v753, %v751
    %v755 = vadd.f32 %v754, %v752
    %v756 = vrot.slane %v755, 4
    %v757 = vadd.f32 %v755, %v756
    %v758 = vrot.slane %v757, 2
    %v759 = vadd.f32 %v757, %v758
    %v760 = vrot.slane %v759, 1
    %v761 = vadd.f32 %v759, %v760
    %v762 = vsel %vm489, %v748, %v761
    %763 = vmatprep.subr.mxu0 0.0
    %764 = vmatpush1.msra.mxu0 %v75
    %765 = vmatprep.subr.mxu0 0.0
    %766 = vmatpush1.msra.mxu0 %v76
    %767 = vmatprep.subr.mxu0 0.0
    %768 = vmatpush1.msra.mxu0 %v77
    %769 = vmatprep.subr.mxu0 0.0
    %770 = vmatpush1.msra.mxu0 %v78
    %771 = vmatprep.subr.mxu0 0.0
    %772 = vmatpush1.msra.mxu0 %v79
    %773 = vmatprep.subr.mxu0 0.0
    %774 = vmatpush1.msra.mxu0 %v80
    %775 = vmatprep.subr.mxu0 0.0
    %776 = vmatpush1.msra.mxu0 %v81
    %777 = vmatprep.subr.mxu0 0.0
    %778 = vmatpush1.msra.mxu0 %v82
    %779 = vmatprep.subr.mxu0 0.0
    %780 = vmatpush1.msra.mxu0 %v83
    %781 = vmatprep.subr.mxu0 0.0
    %782 = vmatpush1.msra.mxu0 %v84
    %783 = vmatprep.subr.mxu0 0.0
    %784 = vmatpush1.msra.mxu0 %v85
    %785 = vmatprep.subr.mxu0 0.0
    %786 = vmatpush1.msra.mxu0 %v86
    %787 = vmatprep.subr.mxu0 0.0
    %788 = vmatpush1.msra.mxu0 %v87
    %789 = vmatprep.subr.mxu0 0.0
    %790 = vmatpush1.msra.mxu0 %v88
    %791 = vmatprep.subr.mxu0 0.0
    %792 = vmatpush1.msra.mxu0 %v89
    %793 = vmatprep.subr.mxu0 0.0
    %794 = vmatpush1.msra.mxu0 %v90
    %795 = vmatprep.subr.mxu0 0.0
    %796 = vmatpush1.msra.mxu0 0.0
    %797 = vmatprep.subr.mxu0 0.0
    %798 = vmatpush1.msra.mxu0 0.0
    %799 = vmatprep.subr.mxu0 0.0
    %800 = vmatpush1.msra.mxu0 0.0
    %801 = vmatprep.subr.mxu0 0.0
    %802 = vmatpush1.msra.mxu0 0.0
    %803 = vmatprep.subr.mxu0 0.0
    %804 = vmatpush1.msra.mxu0 0.0
    %805 = vmatprep.subr.mxu0 0.0
    %806 = vmatpush1.msra.mxu0 0.0
    %807 = vmatprep.subr.mxu0 0.0
    %808 = vmatpush1.msra.mxu0 0.0
    %809 = vmatprep.subr.mxu0 0.0
    %810 = vmatpush1.msra.mxu0 0.0
    %811 = vmatprep.subr.mxu0 0.0
    %812 = vmatpush1.msra.mxu0 0.0
    %813 = vmatprep.subr.mxu0 0.0
    %814 = vmatpush1.msra.mxu0 0.0
    %815 = vmatprep.subr.mxu0 0.0
    %816 = vmatpush1.msra.mxu0 0.0
    %817 = vmatprep.subr.mxu0 0.0
    %818 = vmatpush1.msra.mxu0 0.0
    %819 = vmatprep.subr.mxu0 0.0
    %820 = vmatpush1.msra.mxu0 0.0
    %821 = vmatprep.subr.mxu0 0.0
    %822 = vmatpush1.msra.mxu0 0.0
    %823 = vmatprep.subr.mxu0 0.0
    %824 = vmatpush1.msra.mxu0 0.0
    %825 = vmatprep.subr.mxu0 0.0
    %826 = vmatpush1.msra.mxu0 0.0
    %827 = vmatprep.mubr.f32.mxu0 0.0
    %828 = vmatmul.mubr.f32.gmra.mrb[0].mxu0 %v762
    %v829 = vpop.f32.mrb[0].mxu0
    %v830 = vadd.f32 0.0, %v829
    %v831 = vpop.f32.mrb[0].mxu0
    %832 = vdwg.mxu0
    %v833 = vmul.f32 %v830, 0.001953125
    %v834 = vmul.f32 %v833, %v833
    %v836 = vrot.slane %v834, 7
    %v838 = vsub.f32 %v833, %v836
    %v839 = vmax.f32 %v838, 0.0
    %v840 = vlaneseq
    %v841 = vshrl.u32 %v840, 7
    %v842 = vsub.s32 0, %v841
    %v843 = vrot.slane %v833, %v842
    %v844 = vsub.f32 %v734, %v843
    %v845 = vsub.f32 %v735, %v843
    %v846 = vsub.f32 %v736, %v843
    %v847 = vsub.f32 %v737, %v843
    %v848 = vadd.f32 %v839, 1e-05
    %v849 = vrsqrt.pop %v848
    %v850 = vlaneseq
    %v851 = vshrl.u32 %v850, 7
    %v852 = vsub.s32 1, %v851
    %v853 = vrot.slane %v849, %v852
    %v854 = vmul.f32 %v844, %v853
    %v855 = vmul.f32 %v845, %v853
    %v856 = vmul.f32 %v846, %v853
    %v857 = vmul.f32 %v847, %v853
    %v859 = vlaneseq
    %v860 = vshrl.u32 %v859, 7
    %v861 = vsub.s32 0, %v860
    %v862 = vrot.slane %v738, %v861
    %v864 = vmul.f32 %v854, %v862
    %v865 = vmul.f32 %v855, %v862
    %v866 = vmul.f32 %v856, %v862
    %v867 = vmul.f32 %v857, %v862
    %v869 = vlaneseq
    %v870 = vshrl.u32 %v869, 7
    %v871 = vsub.s32 0, %v870
    %v872 = vrot.slane %v739, %v871
    %v874 = vadd.f32 %v864, %v872
    %v875 = vadd.f32 %v865, %v872
    %v876 = vadd.f32 %v866, %v872
    %v877 = vadd.f32 %v867, %v872
    %878 = vst [vmem:[#allocation2 + $0x1] sm:$0xff] %v874
    %879 = vst [vmem:[#allocation2 + $0x9] sm:$0xff] %v875
    %880 = vst [vmem:[#allocation2 + $0x19] sm:$0xff] %v876
    %881 = vst [vmem:[#allocation2 + $0x21] sm:$0xff] %v877
    %v882 = vld [vmem:[%s10] sm:$0x1]
    %v883 = vld [vmem:[%s0] sm:$0xff]
    %v884 = vld [vmem:[%s0 + $0x8] sm:$0xff]
    %v885 = vld [vmem:[%s0 + $0x18] sm:$0xff]
    %v886 = vld [vmem:[%s0 + $0x20] sm:$0xff]
    %v887 = vld [vmem:[%s0 + $0x1] sm:$0xff]
    %v888 = vld [vmem:[%s0 + $0x9] sm:$0xff]
    %v889 = vld [vmem:[%s0 + $0x19] sm:$0xff]
    %v890 = vld [vmem:[%s0 + $0x21] sm:$0xff]
    %v891 = vld [vmem:[%s0 + $0x2] sm:$0xff]
    %v892 = vld [vmem:[%s0 + $0xa] sm:$0xff]
    %v893 = vld [vmem:[%s0 + $0x1a] sm:$0xff]
    %v894 = vld [vmem:[%s0 + $0x22] sm:$0xff]
    %v895 = vld [vmem:[#allocation7] sm:$0xff]
    %v896 = vld [vmem:[#allocation7 + $0x8] sm:$0xff]
    %v897 = vld [vmem:[#allocation7 + $0x10] sm:$0xff]
    %v898 = vld [vmem:[#allocation7 + $0x18] sm:$0xff]
    %v899 = vld [vmem:[#allocation7 + $0x20] sm:$0xff]
    %v900 = vld [vmem:[#allocation7 + $0x28] sm:$0xff]
    %v901 = vld [vmem:[#allocation7 + $0x30] sm:$0xff]
    %v902 = vld [vmem:[#allocation7 + $0x38] sm:$0xff]
    %v903 = vld [vmem:[#allocation7 + $0x40] sm:$0xff]
    %v904 = vld [vmem:[#allocation7 + $0x48] sm:$0xff]
    %v905 = vld [vmem:[#allocation7 + $0x50] sm:$0xff]
    %v906 = vld [vmem:[#allocation7 + $0x58] sm:$0xff]
    %v907 = vld [vmem:[#allocation7 + $0x60] sm:$0xff]
    %v908 = vld [vmem:[#allocation7 + $0x68] sm:$0xff]
    %v909 = vld [vmem:[#allocation7 + $0x70] sm:$0xff]
    %v910 = vld [vmem:[#allocation7 + $0x78] sm:$0xff]
    %911 = vmatprep.subr.mxu0 0.0
    %912 = vmatpush1.msra.mxu0 %v895
    %913 = vmatprep.subr.mxu0 0.0
    %914 = vmatpush1.msra.mxu0 %v896
    %915 = vmatprep.subr.mxu0 0.0
    %916 = vmatpush1.msra.mxu0 %v897
    %917 = vmatprep.subr.mxu0 0.0
    %918 = vmatpush1.msra.mxu0 %v898
    %919 = vmatprep.subr.mxu0 0.0
    %920 = vmatpush1.msra.mxu0 %v899
    %921 = vmatprep.subr.mxu0 0.0
    %922 = vmatpush1.msra.mxu0 %v900
    %923 = vmatprep.subr.mxu0 0.0
    %924 = vmatpush1.msra.mxu0 %v901
    %925 = vmatprep.subr.mxu0 0.0
    %926 = vmatpush1.msra.mxu0 %v902
    %927 = vmatprep.subr.mxu0 0.0
    %928 = vmatpush1.msra.mxu0 %v903
    %929 = vmatprep.subr.mxu0 0.0
    %930 = vmatpush1.msra.mxu0 %v904
    %931 = vmatprep.subr.mxu0 0.0
    %932 = vmatpush1.msra.mxu0 %v905
    %933 = vmatprep.subr.mxu0 0.0
    %934 = vmatpush1.msra.mxu0 %v906
    %935 = vmatprep.subr.mxu0 0.0
    %936 = vmatpush1.msra.mxu0 %v907
    %937 = vmatprep.subr.mxu0 0.0
    %938 = vmatpush1.msra.mxu0 %v908
    %939 = vmatprep.subr.mxu0 0.0
    %940 = vmatpush1.msra.mxu0 %v909
    %941 = vmatprep.subr.mxu0 0.0
    %942 = vmatpush1.msra.mxu0 %v910
    %943 = vmatprep.subr.mxu0 0.0
    %944 = vmatpush1.msra.mxu0 0.0
    %945 = vmatprep.subr.mxu0 0.0
    %946 = vmatpush1.msra.mxu0 0.0
    %947 = vmatprep.subr.mxu0 0.0
    %948 = vmatpush1.msra.mxu0 0.0
    %949 = vmatprep.subr.mxu0 0.0
    %950 = vmatpush1.msra.mxu0 0.0
    %951 = vmatprep.subr.mxu0 0.0
    %952 = vmatpush1.msra.mxu0 0.0
    %953 = vmatprep.subr.mxu0 0.0
    %954 = vmatpush1.msra.mxu0 0.0
    %955 = vmatprep.subr.mxu0 0.0
    %956 = vmatpush1.msra.mxu0 0.0
    %957 = vmatprep.subr.mxu0 0.0
    %958 = vmatpush1.msra.mxu0 0.0
    %959 = vmatprep.subr.mxu0 0.0
    %960 = vmatpush1.msra.mxu0 0.0
    %961 = vmatprep.subr.mxu0 0.0
    %962 = vmatpush1.msra.mxu0 0.0
    %963 = vmatprep.subr.mxu0 0.0
    %964 = vmatpush1.msra.mxu0 0.0
    %965 = vmatprep.subr.mxu0 0.0
    %966 = vmatpush1.msra.mxu0 0.0
    %967 = vmatprep.subr.mxu0 0.0
    %968 = vmatpush1.msra.mxu0 0.0
    %969 = vmatprep.subr.mxu0 0.0
    %970 = vmatpush1.msra.mxu0 0.0
    %971 = vmatprep.subr.mxu0 0.0
    %972 = vmatpush1.msra.mxu0 0.0
    %973 = vmatprep.subr.mxu0 0.0
    %974 = vmatpush1.msra.mxu0 0.0
    %975 = vmatprep.mubr.f32.mxu0 0.0
    %976 = vmatmul.mubr.f32.gmra.mrb[0].mxu0 %v883
    %v977 = vpop.f32.mrb[0].mxu0
    %v978 = vadd.f32 0.0, %v977
    %v979 = vpop.f32.mrb[0].mxu0
    %980 = vmatprep.mubr.f32.mxu0 0.0
    %981 = vmatmul.mubr.f32.gmra.mrb[0].mxu0 %v884
    %v982 = vpop.f32.mrb[0].mxu0
    %v983 = vadd.f32 0.0, %v982
    %v984 = vpop.f32.mrb[0].mxu0
    %985 = vmatprep.mubr.f32.mxu0 0.0
    %986 = vmatmul.mubr.f32.gmra.mrb[0].mxu0 %v885
    %v987 = vpop.f32.mrb[0].mxu0
    %v988 = vadd.f32 0.0, %v987
    %v989 = vpop.f32.mrb[0].mxu0
    %990 = vmatprep.mubr.f32.mxu0 0.0
    %991 = vmatmul.mubr.f32.gmra.mrb[0].mxu0 %v886
    %v992 = vpop.f32.mrb[0].mxu0
    %v993 = vadd.f32 0.0, %v992
    %v994 = vpop.f32.mrb[0].mxu0
    %995 = vdwg.mxu0
    %v997 = vlaneseq
    %v998 = vshrl.u32 %v997, 7
    %v999 = vsub.s32 0, %v998
    %v1000 = vrot.slane %v882, %v999
    %v1002 = vadd.f32 %v1000, %v978
    %v1003 = vadd.f32 %v1000, %v983
    %v1004 = vadd.f32 %v1000, %v988
    %v1005 = vadd.f32 %v1000, %v993
    %s1006 = scalar_lea.vmem [#allocation7], 128
    %v1007 = vld [vmem:[%s1006] sm:$0xff]
    %v1008 = vld [vmem:[%s1006 + $0x8] sm:$0xff]
    %v1009 = vld [vmem:[%s1006 + $0x10] sm:$0xff]
    %v1010 = vld [vmem:[%s1006 + $0x18] sm:$0xff]
    %v1011 = vld [vmem:[%s1006 + $0x20] sm:$0xff]
    %v1012 = vld [vmem:[%s1006 + $0x28] sm:$0xff]
    %v1013 = vld [vmem:[%s1006 + $0x30] sm:$0xff]
    %v1014 = vld [vmem:[%s1006 + $0x38] sm:$0xff]
    %v1015 = vld [vmem:[%s1006 + $0x40] sm:$0xff]
    %v1016 = vld [vmem:[%s1006 + $0x48] sm:$0xff]
    %v1017 = vld [vmem:[%s1006 + $0x50] sm:$0xff]
    %v1018 = vld [vmem:[%s1006 + $0x58] sm:$0xff]
    %v1019 = vld [vmem:[%s1006 + $0x60] sm:$0xff]
    %v1020 = vld [vmem:[%s1006 + $0x68] sm:$0xff]
    %v1021 = vld [vmem:[%s1006 + $0x70] sm:$0xff]
    %v1022 = vld [vmem:[%s1006 + $0x78] sm:$0xff]
    %1023 = vmatprep.subr.mxu0 0.0
    %1024 = vmatpush1.msra.mxu0 %v1007
    %1025 = vmatprep.subr.mxu0 0.0
    %1026 = vmatpush1.msra.mxu0 %v1008
    %1027 = vmatprep.subr.mxu0 0.0
    %1028 = vmatpush1.msra.mxu0 %v1009
    %1029 = vmatprep.subr.mxu0 0.0
    %1030 = vmatpush1.msra.mxu0 %v1010
    %1031 = vmatprep.subr.mxu0 0.0
    %1032 = vmatpush1.msra.mxu0 %v1011
    %1033 = vmatprep.subr.mxu0 0.0
    %1034 = vmatpush1.msra.mxu0 %v1012
    %1035 = vmatprep.subr.mxu0 0.0
    %1036 = vmatpush1.msra.mxu0 %v1013
    %1037 = vmatprep.subr.mxu0 0.0
    %1038 = vmatpush1.msra.mxu0 %v1014
    %1039 = vmatprep.subr.mxu0 0.0
    %1040 = vmatpush1.msra.mxu0 %v1015
    %1041 = vmatprep.subr.mxu0 0.0
    %1042 = vmatpush1.msra.mxu0 %v1016
    %1043 = vmatprep.subr.mxu0 0.0
    %1044 = vmatpush1.msra.mxu0 %v1017
    %1045 = vmatprep.subr.mxu0 0.0
    %1046 = vmatpush1.msra.mxu0 %v1018
    %1047 = vmatprep.subr.mxu0 0.0
    %1048 = vmatpush1.msra.mxu0 %v1019
    %1049 = vmatprep.subr.mxu0 0.0
    %1050 = vmatpush1.msra.mxu0 %v1020
    %1051 = vmatprep.subr.mxu0 0.0
    %1052 = vmatpush1.msra.mxu0 %v1021
    %1053 = vmatprep.subr.mxu0 0.0
    %1054 = vmatpush1.msra.mxu0 %v1022
    %1055 = vmatprep.subr.mxu0 0.0
    %1056 = vmatpush1.msra.mxu0 0.0
    %1057 = vmatprep.subr.mxu0 0.0
    %1058 = vmatpush1.msra.mxu0 0.0
    %1059 = vmatprep.subr.mxu0 0.0
    %1060 = vmatpush1.msra.mxu0 0.0
    %1061 = vmatprep.subr.mxu0 0.0
    %1062 = vmatpush1.msra.mxu0 0.0
    %1063 = vmatprep.subr.mxu0 0.0
    %1064 = vmatpush1.msra.mxu0 0.0
    %1065 = vmatprep.subr.mxu0 0.0
    %1066 = vmatpush1.msra.mxu0 0.0
    %1067 = vmatprep.subr.mxu0 0.0
    %1068 = vmatpush1.msra.mxu0 0.0
    %1069 = vmatprep.subr.mxu0 0.0
    %1070 = vmatpush1.msra.mxu0 0.0
    %1071 = vmatprep.subr.mxu0 0.0
    %1072 = vmatpush1.msra.mxu0 0.0
    %1073 = vmatprep.subr.mxu0 0.0
    %1074 = vmatpush1.msra.mxu0 0.0
    %1075 = vmatprep.subr.mxu0 0.0
    %1076 = vmatpush1.msra.mxu0 0.0
    %1077 = vmatprep.subr.mxu0 0.0
    %1078 = vmatpush1.msra.mxu0 0.0
    %1079 = vmatprep.subr.mxu0 0.0
    %1080 = vmatpush1.msra.mxu0 0.0
    %1081 = vmatprep.subr.mxu0 0.0
    %1082 = vmatpush1.msra.mxu0 0.0
    %1083 = vmatprep.subr.mxu0 0.0
    %1084 = vmatpush1.msra.mxu0 0.0
    %1085 = vmatprep.subr.mxu0 0.0
    %1086 = vmatpush1.msra.mxu0 0.0
    %1087 = vmatprep.mubr.f32.mxu0 0.0
    %1088 = vmatmul.mubr.f32.gmra.mrb[0].mxu0 %v887
    %v1089 = vpop.f32.mrb[0].mxu0
    %v1090 = vadd.f32 0.0, %v1089
    %v1091 = vpop.f32.mrb[0].mxu0
    %1092 = vmatprep.mubr.f32.mxu0 0.0
    %1093 = vmatmul.mubr.f32.gmra.mrb[0].mxu0 %v888
    %v1094 = vpop.f32.mrb[0].mxu0
    %v1095 = vadd.f32 0.0, %v1094
    %v1096 = vpop.f32.mrb[0].mxu0
    %1097 = vmatprep.mubr.f32.mxu0 0.0
    %1098 = vmatmul.mubr.f32.gmra.mrb[0].mxu0 %v889
    %v1099 = vpop.f32.mrb[0].mxu0
    %v1100 = vadd.f32 0.0, %v1099
    %v1101 = vpop.f32.mrb[0].mxu0
    %1102 = vmatprep.mubr.f32.mxu0 0.0
    %1103 = vmatmul.mubr.f32.gmra.mrb[0].mxu0 %v890
    %v1104 = vpop.f32.mrb[0].mxu0
    %v1105 = vadd.f32 0.0, %v1104
    %v1106 = vpop.f32.mrb[0].mxu0
    %1107 = vdwg.mxu0
    %v1108 = vadd.f32 %v1002, %v1090
    %v1109 = vadd.f32 %v1003, %v1095
    %v1110 = vadd.f32 %v1004, %v1100
    %v1111 = vadd.f32 %v1005, %v1105
    %s1112 = scalar_lea.vmem [#allocation7], 256
    %v1113 = vld [vmem:[%s1112] sm:$0xff]
    %v1114 = vld [vmem:[%s1112 + $0x8] sm:$0xff]
    %v1115 = vld [vmem:[%s1112 + $0x10] sm:$0xff]
    %v1116 = vld [vmem:[%s1112 + $0x18] sm:$0xff]
    %v1117 = vld [vmem:[%s1112 + $0x20] sm:$0xff]
    %v1118 = vld [vmem:[%s1112 + $0x28] sm:$0xff]
    %v1119 = vld [vmem:[%s1112 + $0x30] sm:$0xff]
    %v1120 = vld [vmem:[%s1112 + $0x38] sm:$0xff]
    %v1121 = vld [vmem:[%s1112 + $0x40] sm:$0xff]
    %v1122 = vld [vmem:[%s1112 + $0x48] sm:$0xff]
    %v1123 = vld [vmem:[%s1112 + $0x50] sm:$0xff]
    %v1124 = vld [vmem:[%s1112 + $0x58] sm:$0xff]
    %v1125 = vld [vmem:[%s1112 + $0x60] sm:$0xff]
    %v1126 = vld [vmem:[%s1112 + $0x68] sm:$0xff]
    %v1127 = vld [vmem:[%s1112 + $0x70] sm:$0xff]
    %v1128 = vld [vmem:[%s1112 + $0x78] sm:$0xff]
    %1129 = vmatprep.subr.mxu0 0.0
    %1130 = vmatpush1.msra.mxu0 %v1113
    %1131 = vmatprep.subr.mxu0 0.0
    %1132 = vmatpush1.msra.mxu0 %v1114
    %1133 = vmatprep.subr.mxu0 0.0
    %1134 = vmatpush1.msra.mxu0 %v1115
    %1135 = vmatprep.subr.mxu0 0.0
    %1136 = vmatpush1.msra.mxu0 %v1116
    %1137 = vmatprep.subr.mxu0 0.0
    %1138 = vmatpush1.msra.mxu0 %v1117
    %1139 = vmatprep.subr.mxu0 0.0
    %1140 = vmatpush1.msra.mxu0 %v1118
    %1141 = vmatprep.subr.mxu0 0.0
    %1142 = vmatpush1.msra.mxu0 %v1119
    %1143 = vmatprep.subr.mxu0 0.0
    %1144 = vmatpush1.msra.mxu0 %v1120
    %1145 = vmatprep.subr.mxu0 0.0
    %1146 = vmatpush1.msra.mxu0 %v1121
    %1147 = vmatprep.subr.mxu0 0.0
    %1148 = vmatpush1.msra.mxu0 %v1122
    %1149 = vmatprep.subr.mxu0 0.0
    %1150 = vmatpush1.msra.mxu0 %v1123
    %1151 = vmatprep.subr.mxu0 0.0
    %1152 = vmatpush1.msra.mxu0 %v1124
    %1153 = vmatprep.subr.mxu0 0.0
    %1154 = vmatpush1.msra.mxu0 %v1125
    %1155 = vmatprep.subr.mxu0 0.0
    %1156 = vmatpush1.msra.mxu0 %v1126
    %1157 = vmatprep.subr.mxu0 0.0
    %1158 = vmatpush1.msra.mxu0 %v1127
    %1159 = vmatprep.subr.mxu0 0.0
    %1160 = vmatpush1.msra.mxu0 %v1128
    %1161 = vmatprep.subr.mxu0 0.0
    %1162 = vmatpush1.msra.mxu0 0.0
    %1163 = vmatprep.subr.mxu0 0.0
    %1164 = vmatpush1.msra.mxu0 0.0
    %1165 = vmatprep.subr.mxu0 0.0
    %1166 = vmatpush1.msra.mxu0 0.0
    %1167 = vmatprep.subr.mxu0 0.0
    %1168 = vmatpush1.msra.mxu0 0.0
    %1169 = vmatprep.subr.mxu0 0.0
    %1170 = vmatpush1.msra.mxu0 0.0
    %1171 = vmatprep.subr.mxu0 0.0
    %1172 = vmatpush1.msra.mxu0 0.0
    %1173 = vmatprep.subr.mxu0 0.0
    %1174 = vmatpush1.msra.mxu0 0.0
    %1175 = vmatprep.subr.mxu0 0.0
    %1176 = vmatpush1.msra.mxu0 0.0
    %1177 = vmatprep.subr.mxu0 0.0
    %1178 = vmatpush1.msra.mxu0 0.0
    %1179 = vmatprep.subr.mxu0 0.0
    %1180 = vmatpush1.msra.mxu0 0.0
    %1181 = vmatprep.subr.mxu0 0.0
    %1182 = vmatpush1.msra.mxu0 0.0
    %1183 = vmatprep.subr.mxu0 0.0
    %1184 = vmatpush1.msra.mxu0 0.0
    %1185 = vmatprep.subr.mxu0 0.0
    %1186 = vmatpush1.msra.mxu0 0.0
    %1187 = vmatprep.subr.mxu0 0.0
    %1188 = vmatpush1.msra.mxu0 0.0
    %1189 = vmatprep.subr.mxu0 0.0
    %1190 = vmatpush1.msra.mxu0 0.0
    %1191 = vmatprep.subr.mxu0 0.0
    %1192 = vmatpush1.msra.mxu0 0.0
    %1193 = vmatprep.mubr.f32.mxu0 0.0
    %1194 = vmatmul.mubr.f32.gmra.mrb[0].mxu0 %v891
    %v1195 = vpop.f32.mrb[0].mxu0
    %v1196 = vadd.f32 0.0, %v1195
    %v1197 = vpop.f32.mrb[0].mxu0
    %1198 = vmatprep.mubr.f32.mxu0 0.0
    %1199 = vmatmul.mubr.f32.gmra.mrb[0].mxu0 %v892
    %v1200 = vpop.f32.mrb[0].mxu0
    %v1201 = vadd.f32 0.0, %v1200
    %v1202 = vpop.f32.mrb[0].mxu0
    %1203 = vmatprep.mubr.f32.mxu0 0.0
    %1204 = vmatmul.mubr.f32.gmra.mrb[0].mxu0 %v893
    %v1205 = vpop.f32.mrb[0].mxu0
    %v1206 = vadd.f32 0.0, %v1205
    %v1207 = vpop.f32.mrb[0].mxu0
    %1208 = vmatprep.mubr.f32.mxu0 0.0
    %1209 = vmatmul.mubr.f32.gmra.mrb[0].mxu0 %v894
    %v1210 = vpop.f32.mrb[0].mxu0
    %v1211 = vadd.f32 0.0, %v1210
    %v1212 = vpop.f32.mrb[0].mxu0
    %1213 = vdwg.mxu0
    %v1214 = vadd.f32 %v1108, %v1196
    %v1215 = vadd.f32 %v1109, %v1201
    %v1216 = vadd.f32 %v1110, %v1206
    %v1217 = vadd.f32 %v1111, %v1211
    %v1218 = vld [vmem:[#allocation2] sm:$0xff]
    %v1219 = vld [vmem:[#allocation2 + $0x8] sm:$0xff]
    %v1220 = vld [vmem:[#allocation2 + $0x18] sm:$0xff]
    %v1221 = vld [vmem:[#allocation2 + $0x20] sm:$0xff]
    %v1222 = vld [vmem:[#allocation2 + $0x1] sm:$0xff]
    %v1223 = vld [vmem:[#allocation2 + $0x9] sm:$0xff]
    %v1224 = vld [vmem:[#allocation2 + $0x19] sm:$0xff]
    %v1225 = vld [vmem:[#allocation2 + $0x21] sm:$0xff]
    %v1226 = vld [vmem:[#allocation2 + $0x2] sm:$0xff]
    %v1227 = vld [vmem:[#allocation2 + $0xa] sm:$0xff]
    %v1228 = vld [vmem:[#allocation2 + $0x1a] sm:$0xff]
    %v1229 = vld [vmem:[#allocation2 + $0x22] sm:$0xff]
    %s1230 = scalar_lea.vmem [#allocation7], 384
    %v1231 = vld [vmem:[%s1230] sm:$0xff]
    %v1232 = vld [vmem:[%s1230 + $0x8] sm:$0xff]
    %v1233 = vld [vmem:[%s1230 + $0x10] sm:$0xff]
    %v1234 = vld [vmem:[%s1230 + $0x18] sm:$0xff]
    %v1235 = vld [vmem:[%s1230 + $0x20] sm:$0xff]
    %v1236 = vld [vmem:[%s1230 + $0x28] sm:$0xff]
    %v1237 = vld [vmem:[%s1230 + $0x30] sm:$0xff]
    %v1238 = vld [vmem:[%s1230 + $0x38] sm:$0xff]
    %v1239 = vld [vmem:[%s1230 + $0x40] sm:$0xff]
    %v1240 = vld [vmem:[%s1230 + $0x48] sm:$0xff]
    %v1241 = vld [vmem:[%s1230 + $0x50] sm:$0xff]
    %v1242 = vld [vmem:[%s1230 + $0x58] sm:$0xff]
    %v1243 = vld [vmem:[%s1230 + $0x60] sm:$0xff]
    %v1244 = vld [vmem:[%s1230 + $0x68] sm:$0xff]
    %v1245 = vld [vmem:[%s1230 + $0x70] sm:$0xff]
    %v1246 = vld [vmem:[%s1230 + $0x78] sm:$0xff]
    %1247 = vmatprep.subr.mxu0 0.0
    %1248 = vmatpush1.msra.mxu0 %v1231
    %1249 = vmatprep.subr.mxu0 0.0
    %1250 = vmatpush1.msra.mxu0 %v1232
    %1251 = vmatprep.subr.mxu0 0.0
    %1252 = vmatpush1.msra.mxu0 %v1233
    %1253 = vmatprep.subr.mxu0 0.0
    %1254 = vmatpush1.msra.mxu0 %v1234
    %1255 = vmatprep.subr.mxu0 0.0
    %1256 = vmatpush1.msra.mxu0 %v1235
    %1257 = vmatprep.subr.mxu0 0.0
    %1258 = vmatpush1.msra.mxu0 %v1236
    %1259 = vmatprep.subr.mxu0 0.0
    %1260 = vmatpush1.msra.mxu0 %v1237
    %1261 = vmatprep.subr.mxu0 0.0
    %1262 = vmatpush1.msra.mxu0 %v1238
    %1263 = vmatprep.subr.mxu0 0.0
    %1264 = vmatpush1.msra.mxu0 %v1239
    %1265 = vmatprep.subr.mxu0 0.0
    %1266 = vmatpush1.msra.mxu0 %v1240
    %1267 = vmatprep.subr.mxu0 0.0
    %1268 = vmatpush1.msra.mxu0 %v1241
    %1269 = vmatprep.subr.mxu0 0.0
    %1270 = vmatpush1.msra.mxu0 %v1242
    %1271 = vmatprep.subr.mxu0 0.0
    %1272 = vmatpush1.msra.mxu0 %v1243
    %1273 = vmatprep.subr.mxu0 0.0
    %1274 = vmatpush1.msra.mxu0 %v1244
    %1275 = vmatprep.subr.mxu0 0.0
    %1276 = vmatpush1.msra.mxu0 %v1245
    %1277 = vmatprep.subr.mxu0 0.0
    %1278 = vmatpush1.msra.mxu0 %v1246
    %1279 = vmatprep.subr.mxu0 0.0
    %1280 = vmatpush1.msra.mxu0 0.0
    %1281 = vmatprep.subr.mxu0 0.0
    %1282 = vmatpush1.msra.mxu0 0.0
    %1283 = vmatprep.subr.mxu0 0.0
    %1284 = vmatpush1.msra.mxu0 0.0
    %1285 = vmatprep.subr.mxu0 0.0
    %1286 = vmatpush1.msra.mxu0 0.0
    %1287 = vmatprep.subr.mxu0 0.0
    %1288 = vmatpush1.msra.mxu0 0.0
    %1289 = vmatprep.subr.mxu0 0.0
    %1290 = vmatpush1.msra.mxu0 0.0
    %1291 = vmatprep.subr.mxu0 0.0
    %1292 = vmatpush1.msra.mxu0 0.0
    %1293 = vmatprep.subr.mxu0 0.0
    %1294 = vmatpush1.msra.mxu0 0.0
    %1295 = vmatprep.subr.mxu0 0.0
    %1296 = vmatpush1.msra.mxu0 0.0
    %1297 = vmatprep.subr.mxu0 0.0
    %1298 = vmatpush1.msra.mxu0 0.0
    %1299 = vmatprep.subr.mxu0 0.0
    %1300 = vmatpush1.msra.mxu0 0.0
    %1301 = vmatprep.subr.mxu0 0.0
    %1302 = vmatpush1.msra.mxu0 0.0
    %1303 = vmatprep.subr.mxu0 0.0
    %1304 = vmatpush1.msra.mxu0 0.0
    %1305 = vmatprep.subr.mxu0 0.0
    %1306 = vmatpush1.msra.mxu0 0.0
    %1307 = vmatprep.subr.mxu0 0.0
    %1308 = vmatpush1.msra.mxu0 0.0
    %1309 = vmatprep.subr.mxu0 0.0
    %1310 = vmatpush1.msra.mxu0 0.0
    %1311 = vmatprep.mubr.f32.mxu0 0.0
    %1312 = vmatmul.mubr.f32.gmra.mrb[0].mxu0 %v1218
    %v1313 = vpop.f32.mrb[0].mxu0
    %v1314 = vadd.f32 0.0, %v1313
    %v1315 = vpop.f32.mrb[0].mxu0
    %1316 = vmatprep.mubr.f32.mxu0 0.0
    %1317 = vmatmul.mubr.f32.gmra.mrb[0].mxu0 %v1219
    %v1318 = vpop.f32.mrb[0].mxu0
    %v1319 = vadd.f32 0.0, %v1318
    %v1320 = vpop.f32.mrb[0].mxu0
    %1321 = vmatprep.mubr.f32.mxu0 0.0
    %1322 = vmatmul.mubr.f32.gmra.mrb[0].mxu0 %v1220
    %v1323 = vpop.f32.mrb[0].mxu0
    %v1324 = vadd.f32 0.0, %v1323
    %v1325 = vpop.f32.mrb[0].mxu0
    %1326 = vmatprep.mubr.f32.mxu0 0.0
    %1327 = vmatmul.mubr.f32.gmra.mrb[0].mxu0 %v1221
    %v1328 = vpop.f32.mrb[0].mxu0
    %v1329 = vadd.f32 0.0, %v1328
    %v1330 = vpop.f32.mrb[0].mxu0
    %1331 = vdwg.mxu0
    %v1332 = vadd.f32 %v1214, %v1314
    %v1333 = vadd.f32 %v1215, %v1319
    %v1334 = vadd.f32 %v1216, %v1324
    %v1335 = vadd.f32 %v1217, %v1329
    %s1336 = scalar_lea.vmem [#allocation7], 512
    %v1337 = vld [vmem:[%s1336] sm:$0xff]
    %v1338 = vld [vmem:[%s1336 + $0x8] sm:$0xff]
    %v1339 = vld [vmem:[%s1336 + $0x10] sm:$0xff]
    %v1340 = vld [vmem:[%s1336 + $0x18] sm:$0xff]
    %v1341 = vld [vmem:[%s1336 + $0x20] sm:$0xff]
    %v1342 = vld [vmem:[%s1336 + $0x28] sm:$0xff]
    %v1343 = vld [vmem:[%s1336 + $0x30] sm:$0xff]
    %v1344 = vld [vmem:[%s1336 + $0x38] sm:$0xff]
    %v1345 = vld [vmem:[%s1336 + $0x40] sm:$0xff]
    %v1346 = vld [vmem:[%s1336 + $0x48] sm:$0xff]
    %v1347 = vld [vmem:[%s1336 + $0x50] sm:$0xff]
    %v1348 = vld [vmem:[%s1336 + $0x58] sm:$0xff]
    %v1349 = vld [vmem:[%s1336 + $0x60] sm:$0xff]
    %v1350 = vld [vmem:[%s1336 + $0x68] sm:$0xff]
    %v1351 = vld [vmem:[%s1336 + $0x70] sm:$0xff]
    %v1352 = vld [vmem:[%s1336 + $0x78] sm:$0xff]
    %1353 = vmatprep.subr.mxu0 0.0
    %1354 = vmatpush1.msra.mxu0 %v1337
    %1355 = vmatprep.subr.mxu0 0.0
    %1356 = vmatpush1.msra.mxu0 %v1338
    %1357 = vmatprep.subr.mxu0 0.0
    %1358 = vmatpush1.msra.mxu0 %v1339
    %1359 = vmatprep.subr.mxu0 0.0
    %1360 = vmatpush1.msra.mxu0 %v1340
    %1361 = vmatprep.subr.mxu0 0.0
    %1362 = vmatpush1.msra.mxu0 %v1341
    %1363 = vmatprep.subr.mxu0 0.0
    %1364 = vmatpush1.msra.mxu0 %v1342
    %1365 = vmatprep.subr.mxu0 0.0
    %1366 = vmatpush1.msra.mxu0 %v1343
    %1367 = vmatprep.subr.mxu0 0.0
    %1368 = vmatpush1.msra.mxu0 %v1344
    %1369 = vmatprep.subr.mxu0 0.0
    %1370 = vmatpush1.msra.mxu0 %v1345
    %1371 = vmatprep.subr.mxu0 0.0
    %1372 = vmatpush1.msra.mxu0 %v1346
    %1373 = vmatprep.subr.mxu0 0.0
    %1374 = vmatpush1.msra.mxu0 %v1347
    %1375 = vmatprep.subr.mxu0 0.0
    %1376 = vmatpush1.msra.mxu0 %v1348
    %1377 = vmatprep.subr.mxu0 0.0
    %1378 = vmatpush1.msra.mxu0 %v1349
    %1379 = vmatprep.subr.mxu0 0.0
    %1380 = vmatpush1.msra.mxu0 %v1350
    %1381 = vmatprep.subr.mxu0 0.0
    %1382 = vmatpush1.msra.mxu0 %v1351
    %1383 = vmatprep.subr.mxu0 0.0
    %1384 = vmatpush1.msra.mxu0 %v1352
    %1385 = vmatprep.subr.mxu0 0.0
    %1386 = vmatpush1.msra.mxu0 0.0
    %1387 = vmatprep.subr.mxu0 0.0
    %1388 = vmatpush1.msra.mxu0 0.0
    %1389 = vmatprep.subr.mxu0 0.0
    %1390 = vmatpush1.msra.mxu0 0.0
    %1391 = vmatprep.subr.mxu0 0.0
    %1392 = vmatpush1.msra.mxu0 0.0
    %1393 = vmatprep.subr.mxu0 0.0
    %1394 = vmatpush1.msra.mxu0 0.0
    %1395 = vmatprep.subr.mxu0 0.0
    %1396 = vmatpush1.msra.mxu0 0.0
    %1397 = vmatprep.subr.mxu0 0.0
    %1398 = vmatpush1.msra.mxu0 0.0
    %1399 = vmatprep.subr.mxu0 0.0
    %1400 = vmatpush1.msra.mxu0 0.0
    %1401 = vmatprep.subr.mxu0 0.0
    %1402 = vmatpush1.msra.mxu0 0.0
    %1403 = vmatprep.subr.mxu0 0.0
    %1404 = vmatpush1.msra.mxu0 0.0
    %1405 = vmatprep.subr.mxu0 0.0
    %1406 = vmatpush1.msra.mxu0 0.0
    %1407 = vmatprep.subr.mxu0 0.0
    %1408 = vmatpush1.msra.mxu0 0.0
    %1409 = vmatprep.subr.mxu0 0.0
    %1410 = vmatpush1.msra.mxu0 0.0
    %1411 = vmatprep.subr.mxu0 0.0
    %1412 = vmatpush1.msra.mxu0 0.0
    %1413 = vmatprep.subr.mxu0 0.0
    %1414 = vmatpush1.msra.mxu0 0.0
    %1415 = vmatprep.subr.mxu0 0.0
    %1416 = vmatpush1.msra.mxu0 0.0
    %1417 = vmatprep.mubr.f32.mxu0 0.0
    %1418 = vmatmul.mubr.f32.gmra.mrb[0].mxu0 %v1222
    %v1419 = vpop.f32.mrb[0].mxu0
    %v1420 = vadd.f32 0.0, %v1419
    %v1421 = vpop.f32.mrb[0].mxu0
    %1422 = vmatprep.mubr.f32.mxu0 0.0
    %1423 = vmatmul.mubr.f32.gmra.mrb[0].mxu0 %v1223
    %v1424 = vpop.f32.mrb[0].mxu0
    %v1425 = vadd.f32 0.0, %v1424
    %v1426 = vpop.f32.mrb[0].mxu0
    %1427 = vmatprep.mubr.f32.mxu0 0.0
    %1428 = vmatmul.mubr.f32.gmra.mrb[0].mxu0 %v1224
    %v1429 = vpop.f32.mrb[0].mxu0
    %v1430 = vadd.f32 0.0, %v1429
    %v1431 = vpop.f32.mrb[0].mxu0
    %1432 = vmatprep.mubr.f32.mxu0 0.0
    %1433 = vmatmul.mubr.f32.gmra.mrb[0].mxu0 %v1225
    %v1434 = vpop.f32.mrb[0].mxu0
    %v1435 = vadd.f32 0.0, %v1434
    %v1436 = vpop.f32.mrb[0].mxu0
    %1437 = vdwg.mxu0
    %v1438 = vadd.f32 %v1332, %v1420
    %v1439 = vadd.f32 %v1333, %v1425
    %v1440 = vadd.f32 %v1334, %v1430
    %v1441 = vadd.f32 %v1335, %v1435
    %s1442 = scalar_lea.vmem [#allocation7], 640
    %v1443 = vld [vmem:[%s1442] sm:$0xff]
    %v1444 = vld [vmem:[%s1442 + $0x8] sm:$0xff]
    %v1445 = vld [vmem:[%s1442 + $0x10] sm:$0xff]
    %v1446 = vld [vmem:[%s1442 + $0x18] sm:$0xff]
    %v1447 = vld [vmem:[%s1442 + $0x20] sm:$0xff]
    %v1448 = vld [vmem:[%s1442 + $0x28] sm:$0xff]
    %v1449 = vld [vmem:[%s1442 + $0x30] sm:$0xff]
    %v1450 = vld [vmem:[%s1442 + $0x38] sm:$0xff]
    %v1451 = vld [vmem:[%s1442 + $0x40] sm:$0xff]
    %v1452 = vld [vmem:[%s1442 + $0x48] sm:$0xff]
    %v1453 = vld [vmem:[%s1442 + $0x50] sm:$0xff]
    %v1454 = vld [vmem:[%s1442 + $0x58] sm:$0xff]
    %v1455 = vld [vmem:[%s1442 + $0x60] sm:$0xff]
    %v1456 = vld [vmem:[%s1442 + $0x68] sm:$0xff]
    %v1457 = vld [vmem:[%s1442 + $0x70] sm:$0xff]
    %v1458 = vld [vmem:[%s1442 + $0x78] sm:$0xff]
    %1459 = vmatprep.subr.mxu0 0.0
    %1460 = vmatpush1.msra.mxu0 %v1443
    %1461 = vmatprep.subr.mxu0 0.0
    %1462 = vmatpush1.msra.mxu0 %v1444
    %1463 = vmatprep.subr.mxu0 0.0
    %1464 = vmatpush1.msra.mxu0 %v1445
    %1465 = vmatprep.subr.mxu0 0.0
    %1466 = vmatpush1.msra.mxu0 %v1446
    %1467 = vmatprep.subr.mxu0 0.0
    %1468 = vmatpush1.msra.mxu0 %v1447
    %1469 = vmatprep.subr.mxu0 0.0
    %1470 = vmatpush1.msra.mxu0 %v1448
    %1471 = vmatprep.subr.mxu0 0.0
    %1472 = vmatpush1.msra.mxu0 %v1449
    %1473 = vmatprep.subr.mxu0 0.0
    %1474 = vmatpush1.msra.mxu0 %v1450
    %1475 = vmatprep.subr.mxu0 0.0
    %1476 = vmatpush1.msra.mxu0 %v1451
    %1477 = vmatprep.subr.mxu0 0.0
    %1478 = vmatpush1.msra.mxu0 %v1452
    %1479 = vmatprep.subr.mxu0 0.0
    %1480 = vmatpush1.msra.mxu0 %v1453
    %1481 = vmatprep.subr.mxu0 0.0
    %1482 = vmatpush1.msra.mxu0 %v1454
    %1483 = vmatprep.subr.mxu0 0.0
    %1484 = vmatpush1.msra.mxu0 %v1455
    %1485 = vmatprep.subr.mxu0 0.0
    %1486 = vmatpush1.msra.mxu0 %v1456
    %1487 = vmatprep.subr.mxu0 0.0
    %1488 = vmatpush1.msra.mxu0 %v1457
    %1489 = vmatprep.subr.mxu0 0.0
    %1490 = vmatpush1.msra.mxu0 %v1458
    %1491 = vmatprep.subr.mxu0 0.0
    %1492 = vmatpush1.msra.mxu0 0.0
    %1493 = vmatprep.subr.mxu0 0.0
    %1494 = vmatpush1.msra.mxu0 0.0
    %1495 = vmatprep.subr.mxu0 0.0
    %1496 = vmatpush1.msra.mxu0 0.0
    %1497 = vmatprep.subr.mxu0 0.0
    %1498 = vmatpush1.msra.mxu0 0.0
    %1499 = vmatprep.subr.mxu0 0.0
    %1500 = vmatpush1.msra.mxu0 0.0
    %1501 = vmatprep.subr.mxu0 0.0
    %1502 = vmatpush1.msra.mxu0 0.0
    %1503 = vmatprep.subr.mxu0 0.0
    %1504 = vmatpush1.msra.mxu0 0.0
    %1505 = vmatprep.subr.mxu0 0.0
    %1506 = vmatpush1.msra.mxu0 0.0
    %1507 = vmatprep.subr.mxu0 0.0
    %1508 = vmatpush1.msra.mxu0 0.0
    %1509 = vmatprep.subr.mxu0 0.0
    %1510 = vmatpush1.msra.mxu0 0.0
    %1511 = vmatprep.subr.mxu0 0.0
    %1512 = vmatpush1.msra.mxu0 0.0
    %1513 = vmatprep.subr.mxu0 0.0
    %1514 = vmatpush1.msra.mxu0 0.0
    %1515 = vmatprep.subr.mxu0 0.0
    %1516 = vmatpush1.msra.mxu0 0.0
    %1517 = vmatprep.subr.mxu0 0.0
    %1518 = vmatpush1.msra.mxu0 0.0
    %1519 = vmatprep.subr.mxu0 0.0
    %1520 = vmatpush1.msra.mxu0 0.0
    %1521 = vmatprep.subr.mxu0 0.0
    %1522 = vmatpush1.msra.mxu0 0.0
    %1523 = vmatprep.mubr.f32.mxu0 0.0
    %1524 = vmatmul.mubr.f32.gmra.mrb[0].mxu0 %v1226
    %v1525 = vpop.f32.mrb[0].mxu0
    %v1526 = vadd.f32 0.0, %v1525
    %v1527 = vpop.f32.mrb[0].mxu0
    %1528 = vmatprep.mubr.f32.mxu0 0.0
    %1529 = vmatmul.mubr.f32.gmra.mrb[0].mxu0 %v1227
    %v1530 = vpop.f32.mrb[0].mxu0
    %v1531 = vadd.f32 0.0, %v1530
    %v1532 = vpop.f32.mrb[0].mxu0
    %1533 = vmatprep.mubr.f32.mxu0 0.0
    %1534 = vmatmul.mubr.f32.gmra.mrb[0].mxu0 %v1228
    %v1535 = vpop.f32.mrb[0].mxu0
    %v1536 = vadd.f32 0.0, %v1535
    %v1537 = vpop.f32.mrb[0].mxu0
    %1538 = vmatprep.mubr.f32.mxu0 0.0
    %1539 = vmatmul.mubr.f32.gmra.mrb[0].mxu0 %v1229
    %v1540 = vpop.f32.mrb[0].mxu0
    %v1541 = vadd.f32 0.0, %v1540
    %v1542 = vpop.f32.mrb[0].mxu0
    %1543 = vdwg.mxu0
    %v1544 = vadd.f32 %v1438, %v1526
    %v1545 = vadd.f32 %v1439, %v1531
    %v1546 = vadd.f32 %v1440, %v1536
    %v1547 = vadd.f32 %v1441, %v1541
    %v1548 = vmul.f32 %v1544, 0.5
    %v1549 = vmul.f32 %v1545, 0.5
    %v1550 = vmul.f32 %v1546, 0.5
    %v1551 = vmul.f32 %v1547, 0.5
    %v1552 = vmul.f32 %v1544, 0.70710677
    %v1553 = vmul.f32 %v1545, 0.70710677
    %v1554 = vmul.f32 %v1546, 0.70710677
    %v1555 = vmul.f32 %v1547, 0.70710677
    %v1556 = verf.f32.pop %v1552
    %v1557 = verf.f32.pop %v1553
    %v1558 = verf.f32.pop %v1554
    %v1559 = verf.f32.pop %v1555
    %v1560 = vadd.f32 %v1556, 1.0
    %v1561 = vadd.f32 %v1557, 1.0
    %v1562 = vadd.f32 %v1558, 1.0
    %v1563 = vadd.f32 %v1559, 1.0
    %v1564 = vmul.f32 %v1548, %v1560
    %v1565 = vmul.f32 %v1549, %v1561
    %v1566 = vmul.f32 %v1550, %v1562
    %v1567 = vmul.f32 %v1551, %v1563
    %v1568 = vld [vmem:[%s11] sm:$0x1]
    %v1569 = vld [vmem:[%s12] sm:$0x1]
    %v1570 = vadd.f32 %v1564, %v1565
    %v1571 = vadd.f32 %v1570, %v1566
    %v1572 = vadd.f32 %v1571, %v1567
    %v1573 = vrot.slane %v1572, 4
    %v1574 = vadd.f32 %v1572, %v1573
    %v1575 = vrot.slane %v1574, 2
    %v1576 = vadd.f32 %v1574, %v1575
    %v1577 = vrot.slane %v1576, 1
    %v1578 = vadd.f32 %v1576, %v1577
    %v1579 = vmul.f32 %v1564, %v1564
    %v1580 = vmul.f32 %v1565, %v1565
    %v1581 = vmul.f32 %v1566, %v1566
    %v1582 = vmul.f32 %v1567, %v1567
    %v1583 = vadd.f32 %v1579, %v1580
    %v1584 = vadd.f32 %v1583, %v1581
    %v1585 = vadd.f32 %v1584, %v1582
    %v1586 = vrot.slane %v1585, 4
    %v1587 = vadd.f32 %v1585, %v1586
    %v1588 = vrot.slane %v1587, 2
    %v1589 = vadd.f32 %v1587, %v1588
    %v1590 = vrot.slane %v1589, 1
    %v1591 = vadd.f32 %v1589, %v1590
    %v1592 = vsel %vm489, %v1578, %v1591
    %1593 = vmatprep.subr.mxu0 0.0
    %1594 = vmatpush1.msra.mxu0 %v75
    %1595 = vmatprep.subr.mxu0 0.0
    %1596 = vmatpush1.msra.mxu0 %v76
    %1597 = vmatprep.subr.mxu0 0.0
    %1598 = vmatpush1.msra.mxu0 %v77
    %1599 = vmatprep.subr.mxu0 0.0
    %1600 = vmatpush1.msra.mxu0 %v78
    %1601 = vmatprep.subr.mxu0 0.0
    %1602 = vmatpush1.msra.mxu0 %v79
    %1603 = vmatprep.subr.mxu0 0.0
    %1604 = vmatpush1.msra.mxu0 %v80
    %1605 = vmatprep.subr.mxu0 0.0
    %1606 = vmatpush1.msra.mxu0 %v81
    %1607 = vmatprep.subr.mxu0 0.0
    %1608 = vmatpush1.msra.mxu0 %v82
    %1609 = vmatprep.subr.mxu0 0.0
    %1610 = vmatpush1.msra.mxu0 %v83
    %1611 = vmatprep.subr.mxu0 0.0
    %1612 = vmatpush1.msra.mxu0 %v84
    %1613 = vmatprep.subr.mxu0 0.0
    %1614 = vmatpush1.msra.mxu0 %v85
    %1615 = vmatprep.subr.mxu0 0.0
    %1616 = vmatpush1.msra.mxu0 %v86
    %1617 = vmatprep.subr.mxu0 0.0
    %1618 = vmatpush1.msra.mxu0 %v87
    %1619 = vmatprep.subr.mxu0 0.0
    %1620 = vmatpush1.msra.mxu0 %v88
    %1621 = vmatprep.subr.mxu0 0.0
    %1622 = vmatpush1.msra.mxu0 %v89
    %1623 = vmatprep.subr.mxu0 0.0
    %1624 = vmatpush1.msra.mxu0 %v90
    %1625 = vmatprep.subr.mxu0 0.0
    %1626 = vmatpush1.msra.mxu0 0.0
    %1627 = vmatprep.subr.mxu0 0.0
    %1628 = vmatpush1.msra.mxu0 0.0
    %1629 = vmatprep.subr.mxu0 0.0
    %1630 = vmatpush1.msra.mxu0 0.0
    %1631 = vmatprep.subr.mxu0 0.0
    %1632 = vmatpush1.msra.mxu0 0.0
    %1633 = vmatprep.subr.mxu0 0.0
    %1634 = vmatpush1.msra.mxu0 0.0
    %1635 = vmatprep.subr.mxu0 0.0
    %1636 = vmatpush1.msra.mxu0 0.0
    %1637 = vmatprep.subr.mxu0 0.0
    %1638 = vmatpush1.msra.mxu0 0.0
    %1639 = vmatprep.subr.mxu0 0.0
    %1640 = vmatpush1.msra.mxu0 0.0
    %1641 = vmatprep.subr.mxu0 0.0
    %1642 = vmatpush1.msra.mxu0 0.0
    %1643 = vmatprep.subr.mxu0 0.0
    %1644 = vmatpush1.msra.mxu0 0.0
    %1645 = vmatprep.subr.mxu0 0.0
    %1646 = vmatpush1.msra.mxu0 0.0
    %1647 = vmatprep.subr.mxu0 0.0
    %1648 = vmatpush1.msra.mxu0 0.0
    %1649 = vmatprep.subr.mxu0 0.0
    %1650 = vmatpush1.msra.mxu0 0.0
    %1651 = vmatprep.subr.mxu0 0.0
    %1652 = vmatpush1.msra.mxu0 0.0
    %1653 = vmatprep.subr.mxu0 0.0
    %1654 = vmatpush1.msra.mxu0 0.0
    %1655 = vmatprep.subr.mxu0 0.0
    %1656 = vmatpush1.msra.mxu0 0.0
    %1657 = vmatprep.mubr.f32.mxu0 0.0
    %1658 = vmatmul.mubr.f32.gmra.mrb[0].mxu0 %v1592
    %v1659 = vpop.f32.mrb[0].mxu0
    %v1660 = vadd.f32 0.0, %v1659
    %v1661 = vpop.f32.mrb[0].mxu0
    %1662 = vdwg.mxu0
    %v1663 = vmul.f32 %v1660, 0.001953125
    %v1664 = vmul.f32 %v1663, %v1663
    %v1666 = vrot.slane %v1664, 7
    %v1668 = vsub.f32 %v1663, %v1666
    %v1669 = vmax.f32 %v1668, 0.0
    %v1670 = vlaneseq
    %v1671 = vshrl.u32 %v1670, 7
    %v1672 = vsub.s32 0, %v1671
    %v1673 = vrot.slane %v1663, %v1672
    %v1674 = vsub.f32 %v1564, %v1673
    %v1675 = vsub.f32 %v1565, %v1673
    %v1676 = vsub.f32 %v1566, %v1673
    %v1677 = vsub.f32 %v1567, %v1673
    %v1678 = vadd.f32 %v1669, 1e-05
    %v1679 = vrsqrt.pop %v1678
    %v1680 = vlaneseq
    %v1681 = vshrl.u32 %v1680, 7
    %v1682 = vsub.s32 1, %v1681
    %v1683 = vrot.slane %v1679, %v1682
    %v1684 = vmul.f32 %v1674, %v1683
    %v1685 = vmul.f32 %v1675, %v1683
    %v1686 = vmul.f32 %v1676, %v1683
    %v1687 = vmul.f32 %v1677, %v1683
    %v1689 = vlaneseq
    %v1690 = vshrl.u32 %v1689, 7
    %v1691 = vsub.s32 0, %v1690
    %v1692 = vrot.slane %v1568, %v1691
    %v1694 = vmul.f32 %v1684, %v1692
    %v1695 = vmul.f32 %v1685, %v1692
    %v1696 = vmul.f32 %v1686, %v1692
    %v1697 = vmul.f32 %v1687, %v1692
    %v1699 = vlaneseq
    %v1700 = vshrl.u32 %v1699, 7
    %v1701 = vsub.s32 0, %v1700
    %v1702 = vrot.slane %v1569, %v1701
    %v1704 = vadd.f32 %v1694, %v1702
    %v1705 = vadd.f32 %v1695, %v1702
    %v1706 = vadd.f32 %v1696, %v1702
    %v1707 = vadd.f32 %v1697, %v1702
    %1708 = vst [vmem:[#allocation4 + $0x1] sm:$0xff] %v1704
    %1709 = vst [vmem:[#allocation4 + $0x9] sm:$0xff] %v1705
    %1710 = vst [vmem:[#allocation4 + $0x19] sm:$0xff] %v1706
    %1711 = vst [vmem:[#allocation4 + $0x21] sm:$0xff] %v1707
    %v1712 = vld [vmem:[#allocation4] sm:$0xff]
    %v1713 = vld [vmem:[#allocation4 + $0x8] sm:$0xff]
    %v1714 = vld [vmem:[#allocation4 + $0x18] sm:$0xff]
    %v1715 = vld [vmem:[#allocation4 + $0x20] sm:$0xff]
    %v1716 = vld [vmem:[#allocation4 + $0x1] sm:$0xff]
    %v1717 = vld [vmem:[#allocation4 + $0x9] sm:$0xff]
    %v1718 = vld [vmem:[#allocation4 + $0x19] sm:$0xff]
    %v1719 = vld [vmem:[#allocation4 + $0x21] sm:$0xff]
    %v1720 = vld [vmem:[#allocation4 + $0x2] sm:$0xff]
    %v1721 = vld [vmem:[#allocation4 + $0xa] sm:$0xff]
    %v1722 = vld [vmem:[#allocation4 + $0x1a] sm:$0xff]
    %v1723 = vld [vmem:[#allocation4 + $0x22] sm:$0xff]
    %s1724 = scalar_lea.vmem %s2, 1
    %v1725 = vld [vmem:[%s1724] sm:$0x1]
    %s1726 = scalar_lea.vmem %s1, 384
    %v1727 = vld [vmem:[%s1726] sm:$0xff]
    %v1728 = vld [vmem:[%s1726 + $0x8] sm:$0xff]
    %v1729 = vld [vmem:[%s1726 + $0x10] sm:$0xff]
    %v1730 = vld [vmem:[%s1726 + $0x18] sm:$0xff]
    %v1731 = vld [vmem:[%s1726 + $0x20] sm:$0xff]
    %v1732 = vld [vmem:[%s1726 + $0x28] sm:$0xff]
    %v1733 = vld [vmem:[%s1726 + $0x30] sm:$0xff]
    %v1734 = vld [vmem:[%s1726 + $0x38] sm:$0xff]
    %v1735 = vld [vmem:[%s1726 + $0x40] sm:$0xff]
    %v1736 = vld [vmem:[%s1726 + $0x48] sm:$0xff]
    %v1737 = vld [vmem:[%s1726 + $0x50] sm:$0xff]
    %v1738 = vld [vmem:[%s1726 + $0x58] sm:$0xff]
    %v1739 = vld [vmem:[%s1726 + $0x60] sm:$0xff]
    %v1740 = vld [vmem:[%s1726 + $0x68] sm:$0xff]
    %v1741 = vld [vmem:[%s1726 + $0x70] sm:$0xff]
    %v1742 = vld [vmem:[%s1726 + $0x78] sm:$0xff]
    %1743 = vmatprep.subr.mxu0 0.0
    %1744 = vmatpush1.msra.mxu0 %v1727
    %1745 = vmatprep.subr.mxu0 0.0
    %1746 = vmatpush1.msra.mxu0 %v1728
    %1747 = vmatprep.subr.mxu0 0.0
    %1748 = vmatpush1.msra.mxu0 %v1729
    %1749 = vmatprep.subr.mxu0 0.0
    %1750 = vmatpush1.msra.mxu0 %v1730
    %1751 = vmatprep.subr.mxu0 0.0
    %1752 = vmatpush1.msra.mxu0 %v1731
    %1753 = vmatprep.subr.mxu0 0.0
    %1754 = vmatpush1.msra.mxu0 %v1732
    %1755 = vmatprep.subr.mxu0 0.0
    %1756 = vmatpush1.msra.mxu0 %v1733
    %1757 = vmatprep.subr.mxu0 0.0
    %1758 = vmatpush1.msra.mxu0 %v1734
    %1759 = vmatprep.subr.mxu0 0.0
    %1760 = vmatpush1.msra.mxu0 %v1735
    %1761 = vmatprep.subr.mxu0 0.0
    %1762 = vmatpush1.msra.mxu0 %v1736
    %1763 = vmatprep.subr.mxu0 0.0
    %1764 = vmatpush1.msra.mxu0 %v1737
    %1765 = vmatprep.subr.mxu0 0.0
    %1766 = vmatpush1.msra.mxu0 %v1738
    %1767 = vmatprep.subr.mxu0 0.0
    %1768 = vmatpush1.msra.mxu0 %v1739
    %1769 = vmatprep.subr.mxu0 0.0
    %1770 = vmatpush1.msra.mxu0 %v1740
    %1771 = vmatprep.subr.mxu0 0.0
    %1772 = vmatpush1.msra.mxu0 %v1741
    %1773 = vmatprep.subr.mxu0 0.0
    %1774 = vmatpush1.msra.mxu0 %v1742
    %1775 = vmatprep.subr.mxu0 0.0
    %1776 = vmatpush1.msra.mxu0 0.0
    %1777 = vmatprep.subr.mxu0 0.0
    %1778 = vmatpush1.msra.mxu0 0.0
    %1779 = vmatprep.subr.mxu0 0.0
    %1780 = vmatpush1.msra.mxu0 0.0
    %1781 = vmatprep.subr.mxu0 0.0
    %1782 = vmatpush1.msra.mxu0 0.0
    %1783 = vmatprep.subr.mxu0 0.0
    %1784 = vmatpush1.msra.mxu0 0.0
    %1785 = vmatprep.subr.mxu0 0.0
    %1786 = vmatpush1.msra.mxu0 0.0
    %1787 = vmatprep.subr.mxu0 0.0
    %1788 = vmatpush1.msra.mxu0 0.0
    %1789 = vmatprep.subr.mxu0 0.0
    %1790 = vmatpush1.msra.mxu0 0.0
    %1791 = vmatprep.subr.mxu0 0.0
    %1792 = vmatpush1.msra.mxu0 0.0
    %1793 = vmatprep.subr.mxu0 0.0
    %1794 = vmatpush1.msra.mxu0 0.0
    %1795 = vmatprep.subr.mxu0 0.0
    %1796 = vmatpush1.msra.mxu0 0.0
    %1797 = vmatprep.subr.mxu0 0.0
    %1798 = vmatpush1.msra.mxu0 0.0
    %1799 = vmatprep.subr.mxu0 0.0
    %1800 = vmatpush1.msra.mxu0 0.0
    %1801 = vmatprep.subr.mxu0 0.0
    %1802 = vmatpush1.msra.mxu0 0.0
    %1803 = vmatprep.subr.mxu0 0.0
    %1804 = vmatpush1.msra.mxu0 0.0
    %1805 = vmatprep.subr.mxu0 0.0
    %1806 = vmatpush1.msra.mxu0 0.0
    %1807 = vmatprep.mubr.f32.mxu0 0.0
    %1808 = vmatmul.mubr.f32.gmra.mrb[0].mxu0 %v1712
    %v1809 = vpop.f32.mrb[0].mxu0
    %v1810 = vadd.f32 0.0, %v1809
    %v1811 = vpop.f32.mrb[0].mxu0
    %1812 = vmatprep.mubr.f32.mxu0 0.0
    %1813 = vmatmul.mubr.f32.gmra.mrb[0].mxu0 %v1713
    %v1814 = vpop.f32.mrb[0].mxu0
    %v1815 = vadd.f32 0.0, %v1814
    %v1816 = vpop.f32.mrb[0].mxu0
    %1817 = vmatprep.mubr.f32.mxu0 0.0
    %1818 = vmatmul.mubr.f32.gmra.mrb[0].mxu0 %v1714
    %v1819 = vpop.f32.mrb[0].mxu0
    %v1820 = vadd.f32 0.0, %v1819
    %v1821 = vpop.f32.mrb[0].mxu0
    %1822 = vmatprep.mubr.f32.mxu0 0.0
    %1823 = vmatmul.mubr.f32.gmra.mrb[0].mxu0 %v1715
    %v1824 = vpop.f32.mrb[0].mxu0
    %v1825 = vadd.f32 0.0, %v1824
    %v1826 = vpop.f32.mrb[0].mxu0
    %1827 = vdwg.mxu0
    %v1829 = vlaneseq
    %v1830 = vshrl.u32 %v1829, 7
    %v1831 = vsub.s32 0, %v1830
    %v1832 = vrot.slane %v1725, %v1831
    %v1834 = vadd.f32 %v1832, %v1810
    %v1835 = vadd.f32 %v1832, %v1815
    %v1836 = vadd.f32 %v1832, %v1820
    %v1837 = vadd.f32 %v1832, %v1825
    %s1838 = scalar_lea.vmem %s1, 512
    %v1839 = vld [vmem:[%s1838] sm:$0xff]
    %v1840 = vld [vmem:[%s1838 + $0x8] sm:$0xff]
    %v1841 = vld [vmem:[%s1838 + $0x10] sm:$0xff]
    %v1842 = vld [vmem:[%s1838 + $0x18] sm:$0xff]
    %v1843 = vld [vmem:[%s1838 + $0x20] sm:$0xff]
    %v1844 = vld [vmem:[%s1838 + $0x28] sm:$0xff]
    %v1845 = vld [vmem:[%s1838 + $0x30] sm:$0xff]
    %v1846 = vld [vmem:[%s1838 + $0x38] sm:$0xff]
    %v1847 = vld [vmem:[%s1838 + $0x40] sm:$0xff]
    %v1848 = vld [vmem:[%s1838 + $0x48] sm:$0xff]
    %v1849 = vld [vmem:[%s1838 + $0x50] sm:$0xff]
    %v1850 = vld [vmem:[%s1838 + $0x58] sm:$0xff]
    %v1851 = vld [vmem:[%s1838 + $0x60] sm:$0xff]
    %v1852 = vld [vmem:[%s1838 + $0x68] sm:$0xff]
    %v1853 = vld [vmem:[%s1838 + $0x70] sm:$0xff]
    %v1854 = vld [vmem:[%s1838 + $0x78] sm:$0xff]
    %1855 = vmatprep.subr.mxu0 0.0
    %1856 = vmatpush1.msra.mxu0 %v1839
    %1857 = vmatprep.subr.mxu0 0.0
    %1858 = vmatpush1.msra.mxu0 %v1840
    %1859 = vmatprep.subr.mxu0 0.0
    %1860 = vmatpush1.msra.mxu0 %v1841
    %1861 = vmatprep.subr.mxu0 0.0
    %1862 = vmatpush1.msra.mxu0 %v1842
    %1863 = vmatprep.subr.mxu0 0.0
    %1864 = vmatpush1.msra.mxu0 %v1843
    %1865 = vmatprep.subr.mxu0 0.0
    %1866 = vmatpush1.msra.mxu0 %v1844
    %1867 = vmatprep.subr.mxu0 0.0
    %1868 = vmatpush1.msra.mxu0 %v1845
    %1869 = vmatprep.subr.mxu0 0.0
    %1870 = vmatpush1.msra.mxu0 %v1846
    %1871 = vmatprep.subr.mxu0 0.0
    %1872 = vmatpush1.msra.mxu0 %v1847
    %1873 = vmatprep.subr.mxu0 0.0
    %1874 = vmatpush1.msra.mxu0 %v1848
    %1875 = vmatprep.subr.mxu0 0.0
    %1876 = vmatpush1.msra.mxu0 %v1849
    %1877 = vmatprep.subr.mxu0 0.0
    %1878 = vmatpush1.msra.mxu0 %v1850
    %1879 = vmatprep.subr.mxu0 0.0
    %1880 = vmatpush1.msra.mxu0 %v1851
    %1881 = vmatprep.subr.mxu0 0.0
    %1882 = vmatpush1.msra.mxu0 %v1852
    %1883 = vmatprep.subr.mxu0 0.0
    %1884 = vmatpush1.msra.mxu0 %v1853
    %1885 = vmatprep.subr.mxu0 0.0
    %1886 = vmatpush1.msra.mxu0 %v1854
    %1887 = vmatprep.subr.mxu0 0.0
    %1888 = vmatpush1.msra.mxu0 0.0
    %1889 = vmatprep.subr.mxu0 0.0
    %1890 = vmatpush1.msra.mxu0 0.0
    %1891 = vmatprep.subr.mxu0 0.0
    %1892 = vmatpush1.msra.mxu0 0.0
    %1893 = vmatprep.subr.mxu0 0.0
    %1894 = vmatpush1.msra.mxu0 0.0
    %1895 = vmatprep.subr.mxu0 0.0
    %1896 = vmatpush1.msra.mxu0 0.0
    %1897 = vmatprep.subr.mxu0 0.0
    %1898 = vmatpush1.msra.mxu0 0.0
    %1899 = vmatprep.subr.mxu0 0.0
    %1900 = vmatpush1.msra.mxu0 0.0
    %1901 = vmatprep.subr.mxu0 0.0
    %1902 = vmatpush1.msra.mxu0 0.0
    %1903 = vmatprep.subr.mxu0 0.0
    %1904 = vmatpush1.msra.mxu0 0.0
    %1905 = vmatprep.subr.mxu0 0.0
    %1906 = vmatpush1.msra.mxu0 0.0
    %1907 = vmatprep.subr.mxu0 0.0
    %1908 = vmatpush1.msra.mxu0 0.0
    %1909 = vmatprep.subr.mxu0 0.0
    %1910 = vmatpush1.msra.mxu0 0.0
    %1911 = vmatprep.subr.mxu0 0.0
    %1912 = vmatpush1.msra.mxu0 0.0
    %1913 = vmatprep.subr.mxu0 0.0
    %1914 = vmatpush1.msra.mxu0 0.0
    %1915 = vmatprep.subr.mxu0 0.0
    %1916 = vmatpush1.msra.mxu0 0.0
    %1917 = vmatprep.subr.mxu0 0.0
    %1918 = vmatpush1.msra.mxu0 0.0
    %1919 = vmatprep.mubr.f32.mxu0 0.0
    %1920 = vmatmul.mubr.f32.gmra.mrb[0].mxu0 %v1716
    %v1921 = vpop.f32.mrb[0].mxu0
    %v1922 = vadd.f32 0.0, %v1921
    %v1923 = vpop.f32.mrb[0].mxu0
    %1924 = vmatprep.mubr.f32.mxu0 0.0
    %1925 = vmatmul.mubr.f32.gmra.mrb[0].mxu0 %v1717
    %v1926 = vpop.f32.mrb[0].mxu0
    %v1927 = vadd.f32 0.0, %v1926
    %v1928 = vpop.f32.mrb[0].mxu0
    %1929 = vmatprep.mubr.f32.mxu0 0.0
    %1930 = vmatmul.mubr.f32.gmra.mrb[0].mxu0 %v1718
    %v1931 = vpop.f32.mrb[0].mxu0
    %v1932 = vadd.f32 0.0, %v1931
    %v1933 = vpop.f32.mrb[0].mxu0
    %1934 = vmatprep.mubr.f32.mxu0 0.0
    %1935 = vmatmul.mubr.f32.gmra.mrb[0].mxu0 %v1719
    %v1936 = vpop.f32.mrb[0].mxu0
    %v1937 = vadd.f32 0.0, %v1936
    %v1938 = vpop.f32.mrb[0].mxu0
    %1939 = vdwg.mxu0
    %v1940 = vadd.f32 %v1834, %v1922
    %v1941 = vadd.f32 %v1835, %v1927
    %v1942 = vadd.f32 %v1836, %v1932
    %v1943 = vadd.f32 %v1837, %v1937
    %s1944 = scalar_lea.vmem %s1, 640
    %v1945 = vld [vmem:[%s1944] sm:$0xff]
    %v1946 = vld [vmem:[%s1944 + $0x8] sm:$0xff]
    %v1947 = vld [vmem:[%s1944 + $0x10] sm:$0xff]
    %v1948 = vld [vmem:[%s1944 + $0x18] sm:$0xff]
    %v1949 = vld [vmem:[%s1944 + $0x20] sm:$0xff]
    %v1950 = vld [vmem:[%s1944 + $0x28] sm:$0xff]
    %v1951 = vld [vmem:[%s1944 + $0x30] sm:$0xff]
    %v1952 = vld [vmem:[%s1944 + $0x38] sm:$0xff]
    %v1953 = vld [vmem:[%s1944 + $0x40] sm:$0xff]
    %v1954 = vld [vmem:[%s1944 + $0x48] sm:$0xff]
    %v1955 = vld [vmem:[%s1944 + $0x50] sm:$0xff]
    %v1956 = vld [vmem:[%s1944 + $0x58] sm:$0xff]
    %v1957 = vld [vmem:[%s1944 + $0x60] sm:$0xff]
    %v1958 = vld [vmem:[%s1944 + $0x68] sm:$0xff]
    %v1959 = vld [vmem:[%s1944 + $0x70] sm:$0xff]
    %v1960 = vld [vmem:[%s1944 + $0x78] sm:$0xff]
    %1961 = vmatprep.subr.mxu0 0.0
    %1962 = vmatpush1.msra.mxu0 %v1945
    %1963 = vmatprep.subr.mxu0 0.0
    %1964 = vmatpush1.msra.mxu0 %v1946
    %1965 = vmatprep.subr.mxu0 0.0
    %1966 = vmatpush1.msra.mxu0 %v1947
    %1967 = vmatprep.subr.mxu0 0.0
    %1968 = vmatpush1.msra.mxu0 %v1948
    %1969 = vmatprep.subr.mxu0 0.0
    %1970 = vmatpush1.msra.mxu0 %v1949
    %1971 = vmatprep.subr.mxu0 0.0
    %1972 = vmatpush1.msra.mxu0 %v1950
    %1973 = vmatprep.subr.mxu0 0.0
    %1974 = vmatpush1.msra.mxu0 %v1951
    %1975 = vmatprep.subr.mxu0 0.0
    %1976 = vmatpush1.msra.mxu0 %v1952
    %1977 = vmatprep.subr.mxu0 0.0
    %1978 = vmatpush1.msra.mxu0 %v1953
    %1979 = vmatprep.subr.mxu0 0.0
    %1980 = vmatpush1.msra.mxu0 %v1954
    %1981 = vmatprep.subr.mxu0 0.0
    %1982 = vmatpush1.msra.mxu0 %v1955
    %1983 = vmatprep.subr.mxu0 0.0
    %1984 = vmatpush1.msra.mxu0 %v1956
    %1985 = vmatprep.subr.mxu0 0.0
    %1986 = vmatpush1.msra.mxu0 %v1957
    %1987 = vmatprep.subr.mxu0 0.0
    %1988 = vmatpush1.msra.mxu0 %v1958
    %1989 = vmatprep.subr.mxu0 0.0
    %1990 = vmatpush1.msra.mxu0 %v1959
    %1991 = vmatprep.subr.mxu0 0.0
    %1992 = vmatpush1.msra.mxu0 %v1960
    %1993 = vmatprep.subr.mxu0 0.0
    %1994 = vmatpush1.msra.mxu0 0.0
    %1995 = vmatprep.subr.mxu0 0.0
    %1996 = vmatpush1.msra.mxu0 0.0
    %1997 = vmatprep.subr.mxu0 0.0
    %1998 = vmatpush1.msra.mxu0 0.0
    %1999 = vmatprep.subr.mxu0 0.0
    %2000 = vmatpush1.msra.mxu0 0.0
    %2001 = vmatprep.subr.mxu0 0.0
    %2002 = vmatpush1.msra.mxu0 0.0
    %2003 = vmatprep.subr.mxu0 0.0
    %2004 = vmatpush1.msra.mxu0 0.0
    %2005 = vmatprep.subr.mxu0 0.0
    %2006 = vmatpush1.msra.mxu0 0.0
    %2007 = vmatprep.subr.mxu0 0.0
    %2008 = vmatpush1.msra.mxu0 0.0
    %2009 = vmatprep.subr.mxu0 0.0
    %2010 = vmatpush1.msra.mxu0 0.0
    %2011 = vmatprep.subr.mxu0 0.0
    %2012 = vmatpush1.msra.mxu0 0.0
    %2013 = vmatprep.subr.mxu0 0.0
    %2014 = vmatpush1.msra.mxu0 0.0
    %2015 = vmatprep.subr.mxu0 0.0
    %2016 = vmatpush1.msra.mxu0 0.0
    %2017 = vmatprep.subr.mxu0 0.0
    %2018 = vmatpush1.msra.mxu0 0.0
    %2019 = vmatprep.subr.mxu0 0.0
    %2020 = vmatpush1.msra.mxu0 0.0
    %2021 = vmatprep.subr.mxu0 0.0
    %2022 = vmatpush1.msra.mxu0 0.0
    %2023 = vmatprep.subr.mxu0 0.0
    %2024 = vmatpush1.msra.mxu0 0.0
    %2025 = vmatprep.mubr.f32.mxu0 0.0
    %2026 = vmatmul.mubr.f32.gmra.mrb[0].mxu0 %v1720
    %v2027 = vpop.f32.mrb[0].mxu0
    %v2028 = vadd.f32 0.0, %v2027
    %v2029 = vpop.f32.mrb[0].mxu0
    %2030 = vmatprep.mubr.f32.mxu0 0.0
    %2031 = vmatmul.mubr.f32.gmra.mrb[0].mxu0 %v1721
    %v2032 = vpop.f32.mrb[0].mxu0
    %v2033 = vadd.f32 0.0, %v2032
    %v2034 = vpop.f32.mrb[0].mxu0
    %2035 = vmatprep.mubr.f32.mxu0 0.0
    %2036 = vmatmul.mubr.f32.gmra.mrb[0].mxu0 %v1722
    %v2037 = vpop.f32.mrb[0].mxu0
    %v2038 = vadd.f32 0.0, %v2037
    %v2039 = vpop.f32.mrb[0].mxu0
    %2040 = vmatprep.mubr.f32.mxu0 0.0
    %2041 = vmatmul.mubr.f32.gmra.mrb[0].mxu0 %v1723
    %v2042 = vpop.f32.mrb[0].mxu0
    %v2043 = vadd.f32 0.0, %v2042
    %v2044 = vpop.f32.mrb[0].mxu0
    %2045 = vdwg.mxu0
    %v2046 = vadd.f32 %v1940, %v2028
    %v2047 = vadd.f32 %v1941, %v2033
    %v2048 = vadd.f32 %v1942, %v2038
    %v2049 = vadd.f32 %v1943, %v2043
    %v2050 = vmul.f32 %v2046, 0.5
    %v2051 = vmul.f32 %v2047, 0.5
    %v2052 = vmul.f32 %v2048, 0.5
    %v2053 = vmul.f32 %v2049, 0.5
    %v2054 = vmul.f32 %v2046, 0.70710677
    %v2055 = vmul.f32 %v2047, 0.70710677
    %v2056 = vmul.f32 %v2048, 0.70710677
    %v2057 = vmul.f32 %v2049, 0.70710677
    %v2058 = verf.f32.pop %v2054
    %v2059 = verf.f32.pop %v2055
    %v2060 = verf.f32.pop %v2056
    %v2061 = verf.f32.pop %v2057
    %v2062 = vadd.f32 %v2058, 1.0
    %v2063 = vadd.f32 %v2059, 1.0
    %v2064 = vadd.f32 %v2060, 1.0
    %v2065 = vadd.f32 %v2061, 1.0
    %v2066 = vmul.f32 %v2050, %v2062
    %v2067 = vmul.f32 %v2051, %v2063
    %v2068 = vmul.f32 %v2052, %v2064
    %v2069 = vmul.f32 %v2053, %v2065
    %s2070 = scalar_lea.vmem %s3, 1
    %v2071 = vld [vmem:[%s2070] sm:$0x1]
    %s2072 = scalar_lea.vmem %s4, 1
    %v2073 = vld [vmem:[%s2072] sm:$0x1]
    %v2074 = vadd.f32 %v2066, %v2067
    %v2075 = vadd.f32 %v2074, %v2068
    %v2076 = vadd.f32 %v2075, %v2069
    %v2077 = vrot.slane %v2076, 4
    %v2078 = vadd.f32 %v2076, %v2077
    %v2079 = vrot.slane %v2078, 2
    %v2080 = vadd.f32 %v2078, %v2079
    %v2081 = vrot.slane %v2080, 1
    %v2082 = vadd.f32 %v2080, %v2081
    %v2083 = vmul.f32 %v2066, %v2066
    %v2084 = vmul.f32 %v2067, %v2067
    %v2085 = vmul.f32 %v2068, %v2068
    %v2086 = vmul.f32 %v2069, %v2069
    %v2087 = vadd.f32 %v2083, %v2084
    %v2088 = vadd.f32 %v2087, %v2085
    %v2089 = vadd.f32 %v2088, %v2086
    %v2090 = vrot.slane %v2089, 4
    %v2091 = vadd.f32 %v2089, %v2090
    %v2092 = vrot.slane %v2091, 2
    %v2093 = vadd.f32 %v2091, %v2092
    %v2094 = vrot.slane %v2093, 1
    %v2095 = vadd.f32 %v2093, %v2094
    %v2096 = vsel %vm489, %v2082, %v2095
    %2097 = vmatprep.subr.mxu0 0.0
    %2098 = vmatpush1.msra.mxu0 %v75
    %2099 = vmatprep.subr.mxu0 0.0
    %2100 = vmatpush1.msra.mxu0 %v76
    %2101 = vmatprep.subr.mxu0 0.0
    %2102 = vmatpush1.msra.mxu0 %v77
    %2103 = vmatprep.subr.mxu0 0.0
    %2104 = vmatpush1.msra.mxu0 %v78
    %2105 = vmatprep.subr.mxu0 0.0
    %2106 = vmatpush1.msra.mxu0 %v79
    %2107 = vmatprep.subr.mxu0 0.0
    %2108 = vmatpush1.msra.mxu0 %v80
    %2109 = vmatprep.subr.mxu0 0.0
    %2110 = vmatpush1.msra.mxu0 %v81
    %2111 = vmatprep.subr.mxu0 0.0
    %2112 = vmatpush1.msra.mxu0 %v82
    %2113 = vmatprep.subr.mxu0 0.0
    %2114 = vmatpush1.msra.mxu0 %v83
    %2115 = vmatprep.subr.mxu0 0.0
    %2116 = vmatpush1.msra.mxu0 %v84
    %2117 = vmatprep.subr.mxu0 0.0
    %2118 = vmatpush1.msra.mxu0 %v85
    %2119 = vmatprep.subr.mxu0 0.0
    %2120 = vmatpush1.msra.mxu0 %v86
    %2121 = vmatprep.subr.mxu0 0.0
    %2122 = vmatpush1.msra.mxu0 %v87
    %2123 = vmatprep.subr.mxu0 0.0
    %2124 = vmatpush1.msra.mxu0 %v88
    %2125 = vmatprep.subr.mxu0 0.0
    %2126 = vmatpush1.msra.mxu0 %v89
    %2127 = vmatprep.subr.mxu0 0.0
    %2128 = vmatpush1.msra.mxu0 %v90
    %2129 = vmatprep.subr.mxu0 0.0
    %2130 = vmatpush1.msra.mxu0 0.0
    %2131 = vmatprep.subr.mxu0 0.0
    %2132 = vmatpush1.msra.mxu0 0.0
    %2133 = vmatprep.subr.mxu0 0.0
    %2134 = vmatpush1.msra.mxu0 0.0
    %2135 = vmatprep.subr.mxu0 0.0
    %2136 = vmatpush1.msra.mxu0 0.0
    %2137 = vmatprep.subr.mxu0 0.0
    %2138 = vmatpush1.msra.mxu0 0.0
    %2139 = vmatprep.subr.mxu0 0.0
    %2140 = vmatpush1.msra.mxu0 0.0
    %2141 = vmatprep.subr.mxu0 0.0
    %2142 = vmatpush1.msra.mxu0 0.0
    %2143 = vmatprep.subr.mxu0 0.0
    %2144 = vmatpush1.msra.mxu0 0.0
    %2145 = vmatprep.subr.mxu0 0.0
    %2146 = vmatpush1.msra.mxu0 0.0
    %2147 = vmatprep.subr.mxu0 0.0
    %2148 = vmatpush1.msra.mxu0 0.0
    %2149 = vmatprep.subr.mxu0 0.0
    %2150 = vmatpush1.msra.mxu0 0.0
    %2151 = vmatprep.subr.mxu0 0.0
    %2152 = vmatpush1.msra.mxu0 0.0
    %2153 = vmatprep.subr.mxu0 0.0
    %2154 = vmatpush1.msra.mxu0 0.0
    %2155 = vmatprep.subr.mxu0 0.0
    %2156 = vmatpush1.msra.mxu0 0.0
    %2157 = vmatprep.subr.mxu0 0.0
    %2158 = vmatpush1.msra.mxu0 0.0
    %2159 = vmatprep.subr.mxu0 0.0
    %2160 = vmatpush1.msra.mxu0 0.0
    %2161 = vmatprep.mubr.f32.mxu0 0.0
    %2162 = vmatmul.mubr.f32.gmra.mrb[0].mxu0 %v2096
    %v2163 = vpop.f32.mrb[0].mxu0
    %v2164 = vadd.f32 0.0, %v2163
    %v2165 = vpop.f32.mrb[0].mxu0
    %2166 = vdwg.mxu0
    %v2167 = vmul.f32 %v2164, 0.001953125
    %v2168 = vmul.f32 %v2167, %v2167
    %v2170 = vrot.slane %v2168, 7
    %v2172 = vsub.f32 %v2167, %v2170
    %v2173 = vmax.f32 %v2172, 0.0
    %v2174 = vlaneseq
    %v2175 = vshrl.u32 %v2174, 7
    %v2176 = vsub.s32 0, %v2175
    %v2177 = vrot.slane %v2167, %v2176
    %v2178 = vsub.f32 %v2066, %v2177
    %v2179 = vsub.f32 %v2067, %v2177
    %v2180 = vsub.f32 %v2068, %v2177
    %v2181 = vsub.f32 %v2069, %v2177
    %v2182 = vadd.f32 %v2173, 1e-05
    %v2183 = vrsqrt.pop %v2182
    %v2184 = vlaneseq
    %v2185 = vshrl.u32 %v2184, 7
    %v2186 = vsub.s32 1, %v2185
    %v2187 = vrot.slane %v2183, %v2186
    %v2188 = vmul.f32 %v2178, %v2187
    %v2189 = vmul.f32 %v2179, %v2187
    %v2190 = vmul.f32 %v2180, %v2187
    %v2191 = vmul.f32 %v2181, %v2187
    %v2193 = vlaneseq
    %v2194 = vshrl.u32 %v2193, 7
    %v2195 = vsub.s32 0, %v2194
    %v2196 = vrot.slane %v2071, %v2195
    %v2198 = vmul.f32 %v2188, %v2196
    %v2199 = vmul.f32 %v2189, %v2196
    %v2200 = vmul.f32 %v2190, %v2196
    %v2201 = vmul.f32 %v2191, %v2196
    %v2203 = vlaneseq
    %v2204 = vshrl.u32 %v2203, 7
    %v2205 = vsub.s32 0, %v2204
    %v2206 = vrot.slane %v2073, %v2205
    %v2208 = vadd.f32 %v2198, %v2206
    %v2209 = vadd.f32 %v2199, %v2206
    %v2210 = vadd.f32 %v2200, %v2206
    %v2211 = vadd.f32 %v2201, %v2206
    %v2212 = vadd.f32 %v2208, %v1716
    %v2213 = vadd.f32 %v2209, %v1717
    %v2214 = vadd.f32 %v2210, %v1718
    %v2215 = vadd.f32 %v2211, %v1719
    %s2216 = scalar_lea.vmem [#allocation5], 128
    %v2217 = vld [vmem:[%s2216] sm:$0xff]
    %v2218 = vld [vmem:[%s2216 + $0x8] sm:$0xff]
    %v2219 = vld [vmem:[%s2216 + $0x10] sm:$0xff]
    %v2220 = vld [vmem:[%s2216 + $0x18] sm:$0xff]
    %v2221 = vld [vmem:[%s2216 + $0x20] sm:$0xff]
    %v2222 = vld [vmem:[%s2216 + $0x28] sm:$0xff]
    %v2223 = vld [vmem:[%s2216 + $0x30] sm:$0xff]
    %v2224 = vld [vmem:[%s2216 + $0x38] sm:$0xff]
    %v2225 = vld [vmem:[%s2216 + $0x40] sm:$0xff]
    %v2226 = vld [vmem:[%s2216 + $0x48] sm:$0xff]
    %v2227 = vld [vmem:[%s2216 + $0x50] sm:$0xff]
    %v2228 = vld [vmem:[%s2216 + $0x58] sm:$0xff]
    %v2229 = vld [vmem:[%s2216 + $0x60] sm:$0xff]
    %v2230 = vld [vmem:[%s2216 + $0x68] sm:$0xff]
    %v2231 = vld [vmem:[%s2216 + $0x70] sm:$0xff]
    %v2232 = vld [vmem:[%s2216 + $0x78] sm:$0xff]
    %s2233 = scalar_lea.vmem %s6, 1
    %v2234 = vld [vmem:[%s2233] sm:$0x1]
    %v2236 = vlaneseq
    %v2237 = vshrl.u32 %v2236, 7
    %v2238 = vsub.s32 0, %v2237
    %v2239 = vrot.slane %v2234, %v2238
    %2241 = vmatprep.subr.mxu0 0.0
    %2242 = vmatpush1.msra.mxu0 %v2217
    %2243 = vmatprep.subr.mxu0 0.0
    %2244 = vmatpush1.msra.mxu0 %v2218
    %2245 = vmatprep.subr.mxu0 0.0
    %2246 = vmatpush1.msra.mxu0 %v2219
    %2247 = vmatprep.subr.mxu0 0.0
    %2248 = vmatpush1.msra.mxu0 %v2220
    %2249 = vmatprep.subr.mxu0 0.0
    %2250 = vmatpush1.msra.mxu0 %v2221
    %2251 = vmatprep.subr.mxu0 0.0
    %2252 = vmatpush1.msra.mxu0 %v2222
    %2253 = vmatprep.subr.mxu0 0.0
    %2254 = vmatpush1.msra.mxu0 %v2223
    %2255 = vmatprep.subr.mxu0 0.0
    %2256 = vmatpush1.msra.mxu0 %v2224
    %2257 = vmatprep.subr.mxu0 0.0
    %2258 = vmatpush1.msra.mxu0 %v2225
    %2259 = vmatprep.subr.mxu0 0.0
    %2260 = vmatpush1.msra.mxu0 %v2226
    %2261 = vmatprep.subr.mxu0 0.0
    %2262 = vmatpush1.msra.mxu0 %v2227
    %2263 = vmatprep.subr.mxu0 0.0
    %2264 = vmatpush1.msra.mxu0 %v2228
    %2265 = vmatprep.subr.mxu0 0.0
    %2266 = vmatpush1.msra.mxu0 %v2229
    %2267 = vmatprep.subr.mxu0 0.0
    %2268 = vmatpush1.msra.mxu0 %v2230
    %2269 = vmatprep.subr.mxu0 0.0
    %2270 = vmatpush1.msra.mxu0 %v2231
    %2271 = vmatprep.subr.mxu0 0.0
    %2272 = vmatpush1.msra.mxu0 %v2232
    %2273 = vmatprep.subr.mxu0 0.0
    %2274 = vmatpush1.msra.mxu0 0.0
    %2275 = vmatprep.subr.mxu0 0.0
    %2276 = vmatpush1.msra.mxu0 0.0
    %2277 = vmatprep.subr.mxu0 0.0
    %2278 = vmatpush1.msra.mxu0 0.0
    %2279 = vmatprep.subr.mxu0 0.0
    %2280 = vmatpush1.msra.mxu0 0.0
    %2281 = vmatprep.subr.mxu0 0.0
    %2282 = vmatpush1.msra.mxu0 0.0
    %2283 = vmatprep.subr.mxu0 0.0
    %2284 = vmatpush1.msra.mxu0 0.0
    %2285 = vmatprep.subr.mxu0 0.0
    %2286 = vmatpush1.msra.mxu0 0.0
    %2287 = vmatprep.subr.mxu0 0.0
    %2288 = vmatpush1.msra.mxu0 0.0
    %2289 = vmatprep.subr.mxu0 0.0
    %2290 = vmatpush1.msra.mxu0 0.0
    %2291 = vmatprep.subr.mxu0 0.0
    %2292 = vmatpush1.msra.mxu0 0.0
    %2293 = vmatprep.subr.mxu0 0.0
    %2294 = vmatpush1.msra.mxu0 0.0
    %2295 = vmatprep.subr.mxu0 0.0
    %2296 = vmatpush1.msra.mxu0 0.0
    %2297 = vmatprep.subr.mxu0 0.0
    %2298 = vmatpush1.msra.mxu0 0.0
    %2299 = vmatprep.subr.mxu0 0.0
    %2300 = vmatpush1.msra.mxu0 0.0
    %2301 = vmatprep.subr.mxu0 0.0
    %2302 = vmatpush1.msra.mxu0 0.0
    %2303 = vmatprep.subr.mxu0 0.0
    %2304 = vmatpush1.msra.mxu0 0.0
    %2305 = vmatprep.mubr.f32.mxu0 0.0
    %2306 = vmatmul.mubr.f32.gmra.mrb[0].mxu0 %v2212
    %v2307 = vpop.f32.mrb[0].mxu0
    %v2308 = vadd.f32 %v2239, %v2307
    %v2309 = vpop.f32.mrb[0].mxu0
    %2310 = vmatprep.mubr.f32.mxu0 0.0
    %2311 = vmatmul.mubr.f32.gmra.mrb[0].mxu0 %v2213
    %v2312 = vpop.f32.mrb[0].mxu0
    %v2313 = vadd.f32 %v2239, %v2312
    %v2314 = vpop.f32.mrb[0].mxu0
    %2315 = vmatprep.mubr.f32.mxu0 0.0
    %2316 = vmatmul.mubr.f32.gmra.mrb[0].mxu0 %v2214
    %v2317 = vpop.f32.mrb[0].mxu0
    %v2318 = vadd.f32 %v2239, %v2317
    %v2319 = vpop.f32.mrb[0].mxu0
    %2320 = vmatprep.mubr.f32.mxu0 0.0
    %2321 = vmatmul.mubr.f32.gmra.mrb[0].mxu0 %v2215
    %v2322 = vpop.f32.mrb[0].mxu0
    %v2323 = vadd.f32 %v2239, %v2322
    %v2324 = vpop.f32.mrb[0].mxu0
    %2325 = vdwg.mxu0
    %v2326 = vmul.f32 %v2308, 0.5
    %v2327 = vmul.f32 %v2313, 0.5
    %v2328 = vmul.f32 %v2318, 0.5
    %v2329 = vmul.f32 %v2323, 0.5
    %v2330 = vmul.f32 %v2308, 0.70710677
    %v2331 = vmul.f32 %v2313, 0.70710677
    %v2332 = vmul.f32 %v2318, 0.70710677
    %v2333 = vmul.f32 %v2323, 0.70710677
    %v2334 = verf.f32.pop %v2330
    %v2335 = verf.f32.pop %v2331
    %v2336 = verf.f32.pop %v2332
    %v2337 = verf.f32.pop %v2333
    %v2338 = vadd.f32 %v2334, 1.0
    %v2339 = vadd.f32 %v2335, 1.0
    %v2340 = vadd.f32 %v2336, 1.0
    %v2341 = vadd.f32 %v2337, 1.0
    %v2342 = vmul.f32 %v2326, %v2338
    %v2343 = vmul.f32 %v2327, %v2339
    %v2344 = vmul.f32 %v2328, %v2340
    %v2345 = vmul.f32 %v2329, %v2341
    %s2346 = scalar_lea.vmem %s7, 1
    %v2347 = vld [vmem:[%s2346] sm:$0x1]
    %s2348 = scalar_lea.vmem %s8, 1
    %v2349 = vld [vmem:[%s2348] sm:$0x1]
    %v2350 = vadd.f32 %v2342, %v2343
    %v2351 = vadd.f32 %v2350, %v2344
    %v2352 = vadd.f32 %v2351, %v2345
    %v2353 = vrot.slane %v2352, 4
    %v2354 = vadd.f32 %v2352, %v2353
    %v2355 = vrot.slane %v2354, 2
    %v2356 = vadd.f32 %v2354, %v2355
    %v2357 = vrot.slane %v2356, 1
    %v2358 = vadd.f32 %v2356, %v2357
    %v2359 = vmul.f32 %v2342, %v2342
    %v2360 = vmul.f32 %v2343, %v2343
    %v2361 = vmul.f32 %v2344, %v2344
    %v2362 = vmul.f32 %v2345, %v2345
    %v2363 = vadd.f32 %v2359, %v2360
    %v2364 = vadd.f32 %v2363, %v2361
    %v2365 = vadd.f32 %v2364, %v2362
    %v2366 = vrot.slane %v2365, 4
    %v2367 = vadd.f32 %v2365, %v2366
    %v2368 = vrot.slane %v2367, 2
    %v2369 = vadd.f32 %v2367, %v2368
    %v2370 = vrot.slane %v2369, 1
    %v2371 = vadd.f32 %v2369, %v2370
    %v2372 = vsel %vm489, %v2358, %v2371
    %2373 = vmatprep.subr.mxu0 0.0
    %2374 = vmatpush1.msra.mxu0 %v75
    %2375 = vmatprep.subr.mxu0 0.0
    %2376 = vmatpush1.msra.mxu0 %v76
    %2377 = vmatprep.subr.mxu0 0.0
    %2378 = vmatpush1.msra.mxu0 %v77
    %2379 = vmatprep.subr.mxu0 0.0
    %2380 = vmatpush1.msra.mxu0 %v78
    %2381 = vmatprep.subr.mxu0 0.0
    %2382 = vmatpush1.msra.mxu0 %v79
    %2383 = vmatprep.subr.mxu0 0.0
    %2384 = vmatpush1.msra.mxu0 %v80
    %2385 = vmatprep.subr.mxu0 0.0
    %2386 = vmatpush1.msra.mxu0 %v81
    %2387 = vmatprep.subr.mxu0 0.0
    %2388 = vmatpush1.msra.mxu0 %v82
    %2389 = vmatprep.subr.mxu0 0.0
    %2390 = vmatpush1.msra.mxu0 %v83
    %2391 = vmatprep.subr.mxu0 0.0
    %2392 = vmatpush1.msra.mxu0 %v84
    %2393 = vmatprep.subr.mxu0 0.0
    %2394 = vmatpush1.msra.mxu0 %v85
    %2395 = vmatprep.subr.mxu0 0.0
    %2396 = vmatpush1.msra.mxu0 %v86
    %2397 = vmatprep.subr.mxu0 0.0
    %2398 = vmatpush1.msra.mxu0 %v87
    %2399 = vmatprep.subr.mxu0 0.0
    %2400 = vmatpush1.msra.mxu0 %v88
    %2401 = vmatprep.subr.mxu0 0.0
    %2402 = vmatpush1.msra.mxu0 %v89
    %2403 = vmatprep.subr.mxu0 0.0
    %2404 = vmatpush1.msra.mxu0 %v90
    %2405 = vmatprep.subr.mxu0 0.0
    %2406 = vmatpush1.msra.mxu0 0.0
    %2407 = vmatprep.subr.mxu0 0.0
    %2408 = vmatpush1.msra.mxu0 0.0
    %2409 = vmatprep.subr.mxu0 0.0
    %2410 = vmatpush1.msra.mxu0 0.0
    %2411 = vmatprep.subr.mxu0 0.0
    %2412 = vmatpush1.msra.mxu0 0.0
    %2413 = vmatprep.subr.mxu0 0.0
    %2414 = vmatpush1.msra.mxu0 0.0
    %2415 = vmatprep.subr.mxu0 0.0
    %2416 = vmatpush1.msra.mxu0 0.0
    %2417 = vmatprep.subr.mxu0 0.0
    %2418 = vmatpush1.msra.mxu0 0.0
    %2419 = vmatprep.subr.mxu0 0.0
    %2420 = vmatpush1.msra.mxu0 0.0
    %2421 = vmatprep.subr.mxu0 0.0
    %2422 = vmatpush1.msra.mxu0 0.0
    %2423 = vmatprep.subr.mxu0 0.0
    %2424 = vmatpush1.msra.mxu0 0.0
    %2425 = vmatprep.subr.mxu0 0.0
    %2426 = vmatpush1.msra.mxu0 0.0
    %2427 = vmatprep.subr.mxu0 0.0
    %2428 = vmatpush1.msra.mxu0 0.0
    %2429 = vmatprep.subr.mxu0 0.0
    %2430 = vmatpush1.msra.mxu0 0.0
    %2431 = vmatprep.subr.mxu0 0.0
    %2432 = vmatpush1.msra.mxu0 0.0
    %2433 = vmatprep.subr.mxu0 0.0
    %2434 = vmatpush1.msra.mxu0 0.0
    %2435 = vmatprep.subr.mxu0 0.0
    %2436 = vmatpush1.msra.mxu0 0.0
    %2437 = vmatprep.mubr.f32.mxu0 0.0
    %2438 = vmatmul.mubr.f32.gmra.mrb[0].mxu0 %v2372
    %v2439 = vpop.f32.mrb[0].mxu0
    %v2440 = vadd.f32 0.0, %v2439
    %v2441 = vpop.f32.mrb[0].mxu0
    %2442 = vdwg.mxu0
    %v2443 = vmul.f32 %v2440, 0.001953125
    %v2444 = vmul.f32 %v2443, %v2443
    %v2446 = vrot.slane %v2444, 7
    %v2448 = vsub.f32 %v2443, %v2446
    %v2449 = vmax.f32 %v2448, 0.0
    %v2450 = vlaneseq
    %v2451 = vshrl.u32 %v2450, 7
    %v2452 = vsub.s32 0, %v2451
    %v2453 = vrot.slane %v2443, %v2452
    %v2454 = vsub.f32 %v2342, %v2453
    %v2455 = vsub.f32 %v2343, %v2453
    %v2456 = vsub.f32 %v2344, %v2453
    %v2457 = vsub.f32 %v2345, %v2453
    %v2458 = vadd.f32 %v2449, 1e-05
    %v2459 = vrsqrt.pop %v2458
    %v2460 = vlaneseq
    %v2461 = vshrl.u32 %v2460, 7
    %v2462 = vsub.s32 1, %v2461
    %v2463 = vrot.slane %v2459, %v2462
    %v2464 = vmul.f32 %v2454, %v2463
    %v2465 = vmul.f32 %v2455, %v2463
    %v2466 = vmul.f32 %v2456, %v2463
    %v2467 = vmul.f32 %v2457, %v2463
    %v2469 = vlaneseq
    %v2470 = vshrl.u32 %v2469, 7
    %v2471 = vsub.s32 0, %v2470
    %v2472 = vrot.slane %v2347, %v2471
    %v2474 = vmul.f32 %v2464, %v2472
    %v2475 = vmul.f32 %v2465, %v2472
    %v2476 = vmul.f32 %v2466, %v2472
    %v2477 = vmul.f32 %v2467, %v2472
    %v2479 = vlaneseq
    %v2480 = vshrl.u32 %v2479, 7
    %v2481 = vsub.s32 0, %v2480
    %v2482 = vrot.slane %v2349, %v2481
    %v2484 = vadd.f32 %v2474, %v2482
    %v2485 = vadd.f32 %v2475, %v2482
    %v2486 = vadd.f32 %v2476, %v2482
    %v2487 = vadd.f32 %v2477, %v2482
    %2488 = vst [vmem:[#allocation3 + $0x1] sm:$0xff] %v2484
    %2489 = vst [vmem:[#allocation3 + $0x9] sm:$0xff] %v2485
    %2490 = vst [vmem:[#allocation3 + $0x19] sm:$0xff] %v2486
    %2491 = vst [vmem:[#allocation3 + $0x21] sm:$0xff] %v2487
    %s2492 = scalar_lea.vmem %s10, 1
    %v2493 = vld [vmem:[%s2492] sm:$0x1]
    %v2494 = vld [vmem:[%s0] sm:$0xff]
    %v2495 = vld [vmem:[%s0 + $0x8] sm:$0xff]
    %v2496 = vld [vmem:[%s0 + $0x18] sm:$0xff]
    %v2497 = vld [vmem:[%s0 + $0x20] sm:$0xff]
    %v2498 = vld [vmem:[%s0 + $0x1] sm:$0xff]
    %v2499 = vld [vmem:[%s0 + $0x9] sm:$0xff]
    %v2500 = vld [vmem:[%s0 + $0x19] sm:$0xff]
    %v2501 = vld [vmem:[%s0 + $0x21] sm:$0xff]
    %v2502 = vld [vmem:[%s0 + $0x2] sm:$0xff]
    %v2503 = vld [vmem:[%s0 + $0xa] sm:$0xff]
    %v2504 = vld [vmem:[%s0 + $0x1a] sm:$0xff]
    %v2505 = vld [vmem:[%s0 + $0x22] sm:$0xff]
    %s2506 = scalar_lea.vmem [#allocation7], 768
    %v2507 = vld [vmem:[%s2506] sm:$0xff]
    %v2508 = vld [vmem:[%s2506 + $0x8] sm:$0xff]
    %v2509 = vld [vmem:[%s2506 + $0x10] sm:$0xff]
    %v2510 = vld [vmem:[%s2506 + $0x18] sm:$0xff]
    %v2511 = vld [vmem:[%s2506 + $0x20] sm:$0xff]
    %v2512 = vld [vmem:[%s2506 + $0x28] sm:$0xff]
    %v2513 = vld [vmem:[%s2506 + $0x30] sm:$0xff]
    %v2514 = vld [vmem:[%s2506 + $0x38] sm:$0xff]
    %v2515 = vld [vmem:[%s2506 + $0x40] sm:$0xff]
    %v2516 = vld [vmem:[%s2506 + $0x48] sm:$0xff]
    %v2517 = vld [vmem:[%s2506 + $0x50] sm:$0xff]
    %v2518 = vld [vmem:[%s2506 + $0x58] sm:$0xff]
    %v2519 = vld [vmem:[%s2506 + $0x60] sm:$0xff]
    %v2520 = vld [vmem:[%s2506 + $0x68] sm:$0xff]
    %v2521 = vld [vmem:[%s2506 + $0x70] sm:$0xff]
    %v2522 = vld [vmem:[%s2506 + $0x78] sm:$0xff]
    %2523 = vmatprep.subr.mxu0 0.0
    %2524 = vmatpush1.msra.mxu0 %v2507
    %2525 = vmatprep.subr.mxu0 0.0
    %2526 = vmatpush1.msra.mxu0 %v2508
    %2527 = vmatprep.subr.mxu0 0.0
    %2528 = vmatpush1.msra.mxu0 %v2509
    %2529 = vmatprep.subr.mxu0 0.0
    %2530 = vmatpush1.msra.mxu0 %v2510
    %2531 = vmatprep.subr.mxu0 0.0
    %2532 = vmatpush1.msra.mxu0 %v2511
    %2533 = vmatprep.subr.mxu0 0.0
    %2534 = vmatpush1.msra.mxu0 %v2512
    %2535 = vmatprep.subr.mxu0 0.0
    %2536 = vmatpush1.msra.mxu0 %v2513
    %2537 = vmatprep.subr.mxu0 0.0
    %2538 = vmatpush1.msra.mxu0 %v2514
    %2539 = vmatprep.subr.mxu0 0.0
    %2540 = vmatpush1.msra.mxu0 %v2515
    %2541 = vmatprep.subr.mxu0 0.0
    %2542 = vmatpush1.msra.mxu0 %v2516
    %2543 = vmatprep.subr.mxu0 0.0
    %2544 = vmatpush1.msra.mxu0 %v2517
    %2545 = vmatprep.subr.mxu0 0.0
    %2546 = vmatpush1.msra.mxu0 %v2518
    %2547 = vmatprep.subr.mxu0 0.0
    %2548 = vmatpush1.msra.mxu0 %v2519
    %2549 = vmatprep.subr.mxu0 0.0
    %2550 = vmatpush1.msra.mxu0 %v2520
    %2551 = vmatprep.subr.mxu0 0.0
    %2552 = vmatpush1.msra.mxu0 %v2521
    %2553 = vmatprep.subr.mxu0 0.0
    %2554 = vmatpush1.msra.mxu0 %v2522
    %2555 = vmatprep.subr.mxu0 0.0
    %2556 = vmatpush1.msra.mxu0 0.0
    %2557 = vmatprep.subr.mxu0 0.0
    %2558 = vmatpush1.msra.mxu0 0.0
    %2559 = vmatprep.subr.mxu0 0.0
    %2560 = vmatpush1.msra.mxu0 0.0
    %2561 = vmatprep.subr.mxu0 0.0
    %2562 = vmatpush1.msra.mxu0 0.0
    %2563 = vmatprep.subr.mxu0 0.0
    %2564 = vmatpush1.msra.mxu0 0.0
    %2565 = vmatprep.subr.mxu0 0.0
    %2566 = vmatpush1.msra.mxu0 0.0
    %2567 = vmatprep.subr.mxu0 0.0
    %2568 = vmatpush1.msra.mxu0 0.0
    %2569 = vmatprep.subr.mxu0 0.0
    %2570 = vmatpush1.msra.mxu0 0.0
    %2571 = vmatprep.subr.mxu0 0.0
    %2572 = vmatpush1.msra.mxu0 0.0
    %2573 = vmatprep.subr.mxu0 0.0
    %2574 = vmatpush1.msra.mxu0 0.0
    %2575 = vmatprep.subr.mxu0 0.0
    %2576 = vmatpush1.msra.mxu0 0.0
    %2577 = vmatprep.subr.mxu0 0.0
    %2578 = vmatpush1.msra.mxu0 0.0
    %2579 = vmatprep.subr.mxu0 0.0
    %2580 = vmatpush1.msra.mxu0 0.0
    %2581 = vmatprep.subr.mxu0 0.0
    %2582 = vmatpush1.msra.mxu0 0.0
    %2583 = vmatprep.subr.mxu0 0.0
    %2584 = vmatpush1.msra.mxu0 0.0
    %2585 = vmatprep.subr.mxu0 0.0
    %2586 = vmatpush1.msra.mxu0 0.0
    %2587 = vmatprep.mubr.f32.mxu0 0.0
    %2588 = vmatmul.mubr.f32.gmra.mrb[0].mxu0 %v2494
    %v2589 = vpop.f32.mrb[0].mxu0
    %v2590 = vadd.f32 0.0, %v2589
    %v2591 = vpop.f32.mrb[0].mxu0
    %2592 = vmatprep.mubr.f32.mxu0 0.0
    %2593 = vmatmul.mubr.f32.gmra.mrb[0].mxu0 %v2495
    %v2594 = vpop.f32.mrb[0].mxu0
    %v2595 = vadd.f32 0.0, %v2594
    %v2596 = vpop.f32.mrb[0].mxu0
    %2597 = vmatprep.mubr.f32.mxu0 0.0
    %2598 = vmatmul.mubr.f32.gmra.mrb[0].mxu0 %v2496
    %v2599 = vpop.f32.mrb[0].mxu0
    %v2600 = vadd.f32 0.0, %v2599
    %v2601 = vpop.f32.mrb[0].mxu0
    %2602 = vmatprep.mubr.f32.mxu0 0.0
    %2603 = vmatmul.mubr.f32.gmra.mrb[0].mxu0 %v2497
    %v2604 = vpop.f32.mrb[0].mxu0
    %v2605 = vadd.f32 0.0, %v2604
    %v2606 = vpop.f32.mrb[0].mxu0
    %2607 = vdwg.mxu0
    %v2609 = vlaneseq
    %v2610 = vshrl.u32 %v2609, 7
    %v2611 = vsub.s32 0, %v2610
    %v2612 = vrot.slane %v2493, %v2611
    %v2614 = vadd.f32 %v2612, %v2590
    %v2615 = vadd.f32 %v2612, %v2595
    %v2616 = vadd.f32 %v2612, %v2600
    %v2617 = vadd.f32 %v2612, %v2605
    %s2618 = scalar_lea.vmem [#allocation7], 896
    %v2619 = vld [vmem:[%s2618] sm:$0xff]
    %v2620 = vld [vmem:[%s2618 + $0x8] sm:$0xff]
    %v2621 = vld [vmem:[%s2618 + $0x10] sm:$0xff]
    %v2622 = vld [vmem:[%s2618 + $0x18] sm:$0xff]
    %v2623 = vld [vmem:[%s2618 + $0x20] sm:$0xff]
    %v2624 = vld [vmem:[%s2618 + $0x28] sm:$0xff]
    %v2625 = vld [vmem:[%s2618 + $0x30] sm:$0xff]
    %v2626 = vld [vmem:[%s2618 + $0x38] sm:$0xff]
    %v2627 = vld [vmem:[%s2618 + $0x40] sm:$0xff]
    %v2628 = vld [vmem:[%s2618 + $0x48] sm:$0xff]
    %v2629 = vld [vmem:[%s2618 + $0x50] sm:$0xff]
    %v2630 = vld [vmem:[%s2618 + $0x58] sm:$0xff]
    %v2631 = vld [vmem:[%s2618 + $0x60] sm:$0xff]
    %v2632 = vld [vmem:[%s2618 + $0x68] sm:$0xff]
    %v2633 = vld [vmem:[%s2618 + $0x70] sm:$0xff]
    %v2634 = vld [vmem:[%s2618 + $0x78] sm:$0xff]
    %2635 = vmatprep.subr.mxu0 0.0
    %2636 = vmatpush1.msra.mxu0 %v2619
    %2637 = vmatprep.subr.mxu0 0.0
    %2638 = vmatpush1.msra.mxu0 %v2620
    %2639 = vmatprep.subr.mxu0 0.0
    %2640 = vmatpush1.msra.mxu0 %v2621
    %2641 = vmatprep.subr.mxu0 0.0
    %2642 = vmatpush1.msra.mxu0 %v2622
    %2643 = vmatprep.subr.mxu0 0.0
    %2644 = vmatpush1.msra.mxu0 %v2623
    %2645 = vmatprep.subr.mxu0 0.0
    %2646 = vmatpush1.msra.mxu0 %v2624
    %2647 = vmatprep.subr.mxu0 0.0
    %2648 = vmatpush1.msra.mxu0 %v2625
    %2649 = vmatprep.subr.mxu0 0.0
    %2650 = vmatpush1.msra.mxu0 %v2626
    %2651 = vmatprep.subr.mxu0 0.0
    %2652 = vmatpush1.msra.mxu0 %v2627
    %2653 = vmatprep.subr.mxu0 0.0
    %2654 = vmatpush1.msra.mxu0 %v2628
    %2655 = vmatprep.subr.mxu0 0.0
    %2656 = vmatpush1.msra.mxu0 %v2629
    %2657 = vmatprep.subr.mxu0 0.0
    %2658 = vmatpush1.msra.mxu0 %v2630
    %2659 = vmatprep.subr.mxu0 0.0
    %2660 = vmatpush1.msra.mxu0 %v2631
    %2661 = vmatprep.subr.mxu0 0.0
    %2662 = vmatpush1.msra.mxu0 %v2632
    %2663 = vmatprep.subr.mxu0 0.0
    %2664 = vmatpush1.msra.mxu0 %v2633
    %2665 = vmatprep.subr.mxu0 0.0
    %2666 = vmatpush1.msra.mxu0 %v2634
    %2667 = vmatprep.subr.mxu0 0.0
    %2668 = vmatpush1.msra.mxu0 0.0
    %2669 = vmatprep.subr.mxu0 0.0
    %2670 = vmatpush1.msra.mxu0 0.0
    %2671 = vmatprep.subr.mxu0 0.0
    %2672 = vmatpush1.msra.mxu0 0.0
    %2673 = vmatprep.subr.mxu0 0.0
    %2674 = vmatpush1.msra.mxu0 0.0
    %2675 = vmatprep.subr.mxu0 0.0
    %2676 = vmatpush1.msra.mxu0 0.0
    %2677 = vmatprep.subr.mxu0 0.0
    %2678 = vmatpush1.msra.mxu0 0.0
    %2679 = vmatprep.subr.mxu0 0.0
    %2680 = vmatpush1.msra.mxu0 0.0
    %2681 = vmatprep.subr.mxu0 0.0
    %2682 = vmatpush1.msra.mxu0 0.0
    %2683 = vmatprep.subr.mxu0 0.0
    %2684 = vmatpush1.msra.mxu0 0.0
    %2685 = vmatprep.subr.mxu0 0.0
    %2686 = vmatpush1.msra.mxu0 0.0
    %2687 = vmatprep.subr.mxu0 0.0
    %2688 = vmatpush1.msra.mxu0 0.0
    %2689 = vmatprep.subr.mxu0 0.0
    %2690 = vmatpush1.msra.mxu0 0.0
    %2691 = vmatprep.subr.mxu0 0.0
    %2692 = vmatpush1.msra.mxu0 0.0
    %2693 = vmatprep.subr.mxu0 0.0
    %2694 = vmatpush1.msra.mxu0 0.0
    %2695 = vmatprep.subr.mxu0 0.0
    %2696 = vmatpush1.msra.mxu0 0.0
    %2697 = vmatprep.subr.mxu0 0.0
    %2698 = vmatpush1.msra.mxu0 0.0
    %2699 = vmatprep.mubr.f32.mxu0 0.0
    %2700 = vmatmul.mubr.f32.gmra.mrb[0].mxu0 %v2498
    %v2701 = vpop.f32.mrb[0].mxu0
    %v2702 = vadd.f32 0.0, %v2701
    %v2703 = vpop.f32.mrb[0].mxu0
    %2704 = vmatprep.mubr.f32.mxu0 0.0
    %2705 = vmatmul.mubr.f32.gmra.mrb[0].mxu0 %v2499
    %v2706 = vpop.f32.mrb[0].mxu0
    %v2707 = vadd.f32 0.0, %v2706
    %v2708 = vpop.f32.mrb[0].mxu0
    %2709 = vmatprep.mubr.f32.mxu0 0.0
    %2710 = vmatmul.mubr.f32.gmra.mrb[0].mxu0 %v2500
    %v2711 = vpop.f32.mrb[0].mxu0
    %v2712 = vadd.f32 0.0, %v2711
    %v2713 = vpop.f32.mrb[0].mxu0
    %2714 = vmatprep.mubr.f32.mxu0 0.0
    %2715 = vmatmul.mubr.f32.gmra.mrb[0].mxu0 %v2501
    %v2716 = vpop.f32.mrb[0].mxu0
    %v2717 = vadd.f32 0.0, %v2716
    %v2718 = vpop.f32.mrb[0].mxu0
    %2719 = vdwg.mxu0
    %v2720 = vadd.f32 %v2614, %v2702
    %v2721 = vadd.f32 %v2615, %v2707
    %v2722 = vadd.f32 %v2616, %v2712
    %v2723 = vadd.f32 %v2617, %v2717
    %s2724 = scalar_lea.vmem [#allocation7], 1024
    %v2725 = vld [vmem:[%s2724] sm:$0xff]
    %v2726 = vld [vmem:[%s2724 + $0x8] sm:$0xff]
    %v2727 = vld [vmem:[%s2724 + $0x10] sm:$0xff]
    %v2728 = vld [vmem:[%s2724 + $0x18] sm:$0xff]
    %v2729 = vld [vmem:[%s2724 + $0x20] sm:$0xff]
    %v2730 = vld [vmem:[%s2724 + $0x28] sm:$0xff]
    %v2731 = vld [vmem:[%s2724 + $0x30] sm:$0xff]
    %v2732 = vld [vmem:[%s2724 + $0x38] sm:$0xff]
    %v2733 = vld [vmem:[%s2724 + $0x40] sm:$0xff]
    %v2734 = vld [vmem:[%s2724 + $0x48] sm:$0xff]
    %v2735 = vld [vmem:[%s2724 + $0x50] sm:$0xff]
    %v2736 = vld [vmem:[%s2724 + $0x58] sm:$0xff]
    %v2737 = vld [vmem:[%s2724 + $0x60] sm:$0xff]
    %v2738 = vld [vmem:[%s2724 + $0x68] sm:$0xff]
    %v2739 = vld [vmem:[%s2724 + $0x70] sm:$0xff]
    %v2740 = vld [vmem:[%s2724 + $0x78] sm:$0xff]
    %2741 = vmatprep.subr.mxu0 0.0
    %2742 = vmatpush1.msra.mxu0 %v2725
    %2743 = vmatprep.subr.mxu0 0.0
    %2744 = vmatpush1.msra.mxu0 %v2726
    %2745 = vmatprep.subr.mxu0 0.0
    %2746 = vmatpush1.msra.mxu0 %v2727
    %2747 = vmatprep.subr.mxu0 0.0
    %2748 = vmatpush1.msra.mxu0 %v2728
    %2749 = vmatprep.subr.mxu0 0.0
    %2750 = vmatpush1.msra.mxu0 %v2729
    %2751 = vmatprep.subr.mxu0 0.0
    %2752 = vmatpush1.msra.mxu0 %v2730
    %2753 = vmatprep.subr.mxu0 0.0
    %2754 = vmatpush1.msra.mxu0 %v2731
    %2755 = vmatprep.subr.mxu0 0.0
    %2756 = vmatpush1.msra.mxu0 %v2732
    %2757 = vmatprep.subr.mxu0 0.0
    %2758 = vmatpush1.msra.mxu0 %v2733
    %2759 = vmatprep.subr.mxu0 0.0
    %2760 = vmatpush1.msra.mxu0 %v2734
    %2761 = vmatprep.subr.mxu0 0.0
    %2762 = vmatpush1.msra.mxu0 %v2735
    %2763 = vmatprep.subr.mxu0 0.0
    %2764 = vmatpush1.msra.mxu0 %v2736
    %2765 = vmatprep.subr.mxu0 0.0
    %2766 = vmatpush1.msra.mxu0 %v2737
    %2767 = vmatprep.subr.mxu0 0.0
    %2768 = vmatpush1.msra.mxu0 %v2738
    %2769 = vmatprep.subr.mxu0 0.0
    %2770 = vmatpush1.msra.mxu0 %v2739
    %2771 = vmatprep.subr.mxu0 0.0
    %2772 = vmatpush1.msra.mxu0 %v2740
    %2773 = vmatprep.subr.mxu0 0.0
    %2774 = vmatpush1.msra.mxu0 0.0
    %2775 = vmatprep.subr.mxu0 0.0
    %2776 = vmatpush1.msra.mxu0 0.0
    %2777 = vmatprep.subr.mxu0 0.0
    %2778 = vmatpush1.msra.mxu0 0.0
    %2779 = vmatprep.subr.mxu0 0.0
    %2780 = vmatpush1.msra.mxu0 0.0
    %2781 = vmatprep.subr.mxu0 0.0
    %2782 = vmatpush1.msra.mxu0 0.0
    %2783 = vmatprep.subr.mxu0 0.0
    %2784 = vmatpush1.msra.mxu0 0.0
    %2785 = vmatprep.subr.mxu0 0.0
    %2786 = vmatpush1.msra.mxu0 0.0
    %2787 = vmatprep.subr.mxu0 0.0
    %2788 = vmatpush1.msra.mxu0 0.0
    %2789 = vmatprep.subr.mxu0 0.0
    %2790 = vmatpush1.msra.mxu0 0.0
    %2791 = vmatprep.subr.mxu0 0.0
    %2792 = vmatpush1.msra.mxu0 0.0
    %2793 = vmatprep.subr.mxu0 0.0
    %2794 = vmatpush1.msra.mxu0 0.0
    %2795 = vmatprep.subr.mxu0 0.0
    %2796 = vmatpush1.msra.mxu0 0.0
    %2797 = vmatprep.subr.mxu0 0.0
    %2798 = vmatpush1.msra.mxu0 0.0
    %2799 = vmatprep.subr.mxu0 0.0
    %2800 = vmatpush1.msra.mxu0 0.0
    %2801 = vmatprep.subr.mxu0 0.0
    %2802 = vmatpush1.msra.mxu0 0.0
    %2803 = vmatprep.subr.mxu0 0.0
    %2804 = vmatpush1.msra.mxu0 0.0
    %2805 = vmatprep.mubr.f32.mxu0 0.0
    %2806 = vmatmul.mubr.f32.gmra.mrb[0].mxu0 %v2502
    %v2807 = vpop.f32.mrb[0].mxu0
    %v2808 = vadd.f32 0.0, %v2807
    %v2809 = vpop.f32.mrb[0].mxu0
    %2810 = vmatprep.mubr.f32.mxu0 0.0
    %2811 = vmatmul.mubr.f32.gmra.mrb[0].mxu0 %v2503
    %v2812 = vpop.f32.mrb[0].mxu0
    %v2813 = vadd.f32 0.0, %v2812
    %v2814 = vpop.f32.mrb[0].mxu0
    %2815 = vmatprep.mubr.f32.mxu0 0.0
    %2816 = vmatmul.mubr.f32.gmra.mrb[0].mxu0 %v2504
    %v2817 = vpop.f32.mrb[0].mxu0
    %v2818 = vadd.f32 0.0, %v2817
    %v2819 = vpop.f32.mrb[0].mxu0
    %2820 = vmatprep.mubr.f32.mxu0 0.0
    %2821 = vmatmul.mubr.f32.gmra.mrb[0].mxu0 %v2505
    %v2822 = vpop.f32.mrb[0].mxu0
    %v2823 = vadd.f32 0.0, %v2822
    %v2824 = vpop.f32.mrb[0].mxu0
    %2825 = vdwg.mxu0
    %v2826 = vadd.f32 %v2720, %v2808
    %v2827 = vadd.f32 %v2721, %v2813
    %v2828 = vadd.f32 %v2722, %v2818
    %v2829 = vadd.f32 %v2723, %v2823
    %v2830 = vld [vmem:[#allocation2] sm:$0xff]
    %v2831 = vld [vmem:[#allocation2 + $0x8] sm:$0xff]
    %v2832 = vld [vmem:[#allocation2 + $0x18] sm:$0xff]
    %v2833 = vld [vmem:[#allocation2 + $0x20] sm:$0xff]
    %v2834 = vld [vmem:[#allocation2 + $0x1] sm:$0xff]
    %v2835 = vld [vmem:[#allocation2 + $0x9] sm:$0xff]
    %v2836 = vld [vmem:[#allocation2 + $0x19] sm:$0xff]
    %v2837 = vld [vmem:[#allocation2 + $0x21] sm:$0xff]
    %v2838 = vld [vmem:[#allocation2 + $0x2] sm:$0xff]
    %v2839 = vld [vmem:[#allocation2 + $0xa] sm:$0xff]
    %v2840 = vld [vmem:[#allocation2 + $0x1a] sm:$0xff]
    %v2841 = vld [vmem:[#allocation2 + $0x22] sm:$0xff]
    %s2842 = scalar_lea.vmem [#allocation7], 1152
    %v2843 = vld [vmem:[%s2842] sm:$0xff]
    %v2844 = vld [vmem:[%s2842 + $0x8] sm:$0xff]
    %v2845 = vld [vmem:[%s2842 + $0x10] sm:$0xff]
    %v2846 = vld [vmem:[%s2842 + $0x18] sm:$0xff]
    %v2847 = vld [vmem:[%s2842 + $0x20] sm:$0xff]
    %v2848 = vld [vmem:[%s2842 + $0x28] sm:$0xff]
    %v2849 = vld [vmem:[%s2842 + $0x30] sm:$0xff]
    %v2850 = vld [vmem:[%s2842 + $0x38] sm:$0xff]
    %v2851 = vld [vmem:[%s2842 + $0x40] sm:$0xff]
    %v2852 = vld [vmem:[%s2842 + $0x48] sm:$0xff]
    %v2853 = vld [vmem:[%s2842 + $0x50] sm:$0xff]
    %v2854 = vld [vmem:[%s2842 + $0x58] sm:$0xff]
    %v2855 = vld [vmem:[%s2842 + $0x60] sm:$0xff]
    %v2856 = vld [vmem:[%s2842 + $0x68] sm:$0xff]
    %v2857 = vld [vmem:[%s2842 + $0x70] sm:$0xff]
    %v2858 = vld [vmem:[%s2842 + $0x78] sm:$0xff]
    %2859 = vmatprep.subr.mxu0 0.0
    %2860 = vmatpush1.msra.mxu0 %v2843
    %2861 = vmatprep.subr.mxu0 0.0
    %2862 = vmatpush1.msra.mxu0 %v2844
    %2863 = vmatprep.subr.mxu0 0.0
    %2864 = vmatpush1.msra.mxu0 %v2845
    %2865 = vmatprep.subr.mxu0 0.0
    %2866 = vmatpush1.msra.mxu0 %v2846
    %2867 = vmatprep.subr.mxu0 0.0
    %2868 = vmatpush1.msra.mxu0 %v2847
    %2869 = vmatprep.subr.mxu0 0.0
    %2870 = vmatpush1.msra.mxu0 %v2848
    %2871 = vmatprep.subr.mxu0 0.0
    %2872 = vmatpush1.msra.mxu0 %v2849
    %2873 = vmatprep.subr.mxu0 0.0
    %2874 = vmatpush1.msra.mxu0 %v2850
    %2875 = vmatprep.subr.mxu0 0.0
    %2876 = vmatpush1.msra.mxu0 %v2851
    %2877 = vmatprep.subr.mxu0 0.0
    %2878 = vmatpush1.msra.mxu0 %v2852
    %2879 = vmatprep.subr.mxu0 0.0
    %2880 = vmatpush1.msra.mxu0 %v2853
    %2881 = vmatprep.subr.mxu0 0.0
    %2882 = vmatpush1.msra.mxu0 %v2854
    %2883 = vmatprep.subr.mxu0 0.0
    %2884 = vmatpush1.msra.mxu0 %v2855
    %2885 = vmatprep.subr.mxu0 0.0
    %2886 = vmatpush1.msra.mxu0 %v2856
    %2887 = vmatprep.subr.mxu0 0.0
    %2888 = vmatpush1.msra.mxu0 %v2857
    %2889 = vmatprep.subr.mxu0 0.0
    %2890 = vmatpush1.msra.mxu0 %v2858
    %2891 = vmatprep.subr.mxu0 0.0
    %2892 = vmatpush1.msra.mxu0 0.0
    %2893 = vmatprep.subr.mxu0 0.0
    %2894 = vmatpush1.msra.mxu0 0.0
    %2895 = vmatprep.subr.mxu0 0.0
    %2896 = vmatpush1.msra.mxu0 0.0
    %2897 = vmatprep.subr.mxu0 0.0
    %2898 = vmatpush1.msra.mxu0 0.0
    %2899 = vmatprep.subr.mxu0 0.0
    %2900 = vmatpush1.msra.mxu0 0.0
    %2901 = vmatprep.subr.mxu0 0.0
    %2902 = vmatpush1.msra.mxu0 0.0
    %2903 = vmatprep.subr.mxu0 0.0
    %2904 = vmatpush1.msra.mxu0 0.0
    %2905 = vmatprep.subr.mxu0 0.0
    %2906 = vmatpush1.msra.mxu0 0.0
    %2907 = vmatprep.subr.mxu0 0.0
    %2908 = vmatpush1.msra.mxu0 0.0
    %2909 = vmatprep.subr.mxu0 0.0
    %2910 = vmatpush1.msra.mxu0 0.0
    %2911 = vmatprep.subr.mxu0 0.0
    %2912 = vmatpush1.msra.mxu0 0.0
    %2913 = vmatprep.subr.mxu0 0.0
    %2914 = vmatpush1.msra.mxu0 0.0
    %2915 = vmatprep.subr.mxu0 0.0
    %2916 = vmatpush1.msra.mxu0 0.0
    %2917 = vmatprep.subr.mxu0 0.0
    %2918 = vmatpush1.msra.mxu0 0.0
    %2919 = vmatprep.subr.mxu0 0.0
    %2920 = vmatpush1.msra.mxu0 0.0
    %2921 = vmatprep.subr.mxu0 0.0
    %2922 = vmatpush1.msra.mxu0 0.0
    %2923 = vmatprep.mubr.f32.mxu0 0.0
    %2924 = vmatmul.mubr.f32.gmra.mrb[0].mxu0 %v2830
    %v2925 = vpop.f32.mrb[0].mxu0
    %v2926 = vadd.f32 0.0, %v2925
    %v2927 = vpop.f32.mrb[0].mxu0
    %2928 = vmatprep.mubr.f32.mxu0 0.0
    %2929 = vmatmul.mubr.f32.gmra.mrb[0].mxu0 %v2831
    %v2930 = vpop.f32.mrb[0].mxu0
    %v2931 = vadd.f32 0.0, %v2930
    %v2932 = vpop.f32.mrb[0].mxu0
    %2933 = vmatprep.mubr.f32.mxu0 0.0
    %2934 = vmatmul.mubr.f32.gmra.mrb[0].mxu0 %v2832
    %v2935 = vpop.f32.mrb[0].mxu0
    %v2936 = vadd.f32 0.0, %v2935
    %v2937 = vpop.f32.mrb[0].mxu0
    %2938 = vmatprep.mubr.f32.mxu0 0.0
    %2939 = vmatmul.mubr.f32.gmra.mrb[0].mxu0 %v2833
    %v2940 = vpop.f32.mrb[0].mxu0
    %v2941 = vadd.f32 0.0, %v2940
    %v2942 = vpop.f32.mrb[0].mxu0
    %2943 = vdwg.mxu0
    %v2944 = vadd.f32 %v2826, %v2926
    %v2945 = vadd.f32 %v2827, %v2931
    %v2946 = vadd.f32 %v2828, %v2936
    %v2947 = vadd.f32 %v2829, %v2941
    %s2948 = scalar_lea.vmem [#allocation7], 1280
    %v2949 = vld [vmem:[%s2948] sm:$0xff]
    %v2950 = vld [vmem:[%s2948 + $0x8] sm:$0xff]
    %v2951 = vld [vmem:[%s2948 + $0x10] sm:$0xff]
    %v2952 = vld [vmem:[%s2948 + $0x18] sm:$0xff]
    %v2953 = vld [vmem:[%s2948 + $0x20] sm:$0xff]
    %v2954 = vld [vmem:[%s2948 + $0x28] sm:$0xff]
    %v2955 = vld [vmem:[%s2948 + $0x30] sm:$0xff]
    %v2956 = vld [vmem:[%s2948 + $0x38] sm:$0xff]
    %v2957 = vld [vmem:[%s2948 + $0x40] sm:$0xff]
    %v2958 = vld [vmem:[%s2948 + $0x48] sm:$0xff]
    %v2959 = vld [vmem:[%s2948 + $0x50] sm:$0xff]
    %v2960 = vld [vmem:[%s2948 + $0x58] sm:$0xff]
    %v2961 = vld [vmem:[%s2948 + $0x60] sm:$0xff]
    %v2962 = vld [vmem:[%s2948 + $0x68] sm:$0xff]
    %v2963 = vld [vmem:[%s2948 + $0x70] sm:$0xff]
    %v2964 = vld [vmem:[%s2948 + $0x78] sm:$0xff]
    %2965 = vmatprep.subr.mxu0 0.0
    %2966 = vmatpush1.msra.mxu0 %v2949
    %2967 = vmatprep.subr.mxu0 0.0
    %2968 = vmatpush1.msra.mxu0 %v2950
    %2969 = vmatprep.subr.mxu0 0.0
    %2970 = vmatpush1.msra.mxu0 %v2951
    %2971 = vmatprep.subr.mxu0 0.0
    %2972 = vmatpush1.msra.mxu0 %v2952
    %2973 = vmatprep.subr.mxu0 0.0
    %2974 = vmatpush1.msra.mxu0 %v2953
    %2975 = vmatprep.subr.mxu0 0.0
    %2976 = vmatpush1.msra.mxu0 %v2954
    %2977 = vmatprep.subr.mxu0 0.0
    %2978 = vmatpush1.msra.mxu0 %v2955
    %2979 = vmatprep.subr.mxu0 0.0
    %2980 = vmatpush1.msra.mxu0 %v2956
    %2981 = vmatprep.subr.mxu0 0.0
    %2982 = vmatpush1.msra.mxu0 %v2957
    %2983 = vmatprep.subr.mxu0 0.0
    %2984 = vmatpush1.msra.mxu0 %v2958
    %2985 = vmatprep.subr.mxu0 0.0
    %2986 = vmatpush1.msra.mxu0 %v2959
    %2987 = vmatprep.subr.mxu0 0.0
    %2988 = vmatpush1.msra.mxu0 %v2960
    %2989 = vmatprep.subr.mxu0 0.0
    %2990 = vmatpush1.msra.mxu0 %v2961
    %2991 = vmatprep.subr.mxu0 0.0
    %2992 = vmatpush1.msra.mxu0 %v2962
    %2993 = vmatprep.subr.mxu0 0.0
    %2994 = vmatpush1.msra.mxu0 %v2963
    %2995 = vmatprep.subr.mxu0 0.0
    %2996 = vmatpush1.msra.mxu0 %v2964
    %2997 = vmatprep.subr.mxu0 0.0
    %2998 = vmatpush1.msra.mxu0 0.0
    %2999 = vmatprep.subr.mxu0 0.0
    %3000 = vmatpush1.msra.mxu0 0.0
    %3001 = vmatprep.subr.mxu0 0.0
    %3002 = vmatpush1.msra.mxu0 0.0
    %3003 = vmatprep.subr.mxu0 0.0
    %3004 = vmatpush1.msra.mxu0 0.0
    %3005 = vmatprep.subr.mxu0 0.0
    %3006 = vmatpush1.msra.mxu0 0.0
    %3007 = vmatprep.subr.mxu0 0.0
    %3008 = vmatpush1.msra.mxu0 0.0
    %3009 = vmatprep.subr.mxu0 0.0
    %3010 = vmatpush1.msra.mxu0 0.0
    %3011 = vmatprep.subr.mxu0 0.0
    %3012 = vmatpush1.msra.mxu0 0.0
    %3013 = vmatprep.subr.mxu0 0.0
    %3014 = vmatpush1.msra.mxu0 0.0
    %3015 = vmatprep.subr.mxu0 0.0
    %3016 = vmatpush1.msra.mxu0 0.0
    %3017 = vmatprep.subr.mxu0 0.0
    %3018 = vmatpush1.msra.mxu0 0.0
    %3019 = vmatprep.subr.mxu0 0.0
    %3020 = vmatpush1.msra.mxu0 0.0
    %3021 = vmatprep.subr.mxu0 0.0
    %3022 = vmatpush1.msra.mxu0 0.0
    %3023 = vmatprep.subr.mxu0 0.0
    %3024 = vmatpush1.msra.mxu0 0.0
    %3025 = vmatprep.subr.mxu0 0.0
    %3026 = vmatpush1.msra.mxu0 0.0
    %3027 = vmatprep.subr.mxu0 0.0
    %3028 = vmatpush1.msra.mxu0 0.0
    %3029 = vmatprep.mubr.f32.mxu0 0.0
    %3030 = vmatmul.mubr.f32.gmra.mrb[0].mxu0 %v2834
    %v3031 = vpop.f32.mrb[0].mxu0
    %v3032 = vadd.f32 0.0, %v3031
    %v3033 = vpop.f32.mrb[0].mxu0
    %3034 = vmatprep.mubr.f32.mxu0 0.0
    %3035 = vmatmul.mubr.f32.gmra.mrb[0].mxu0 %v2835
    %v3036 = vpop.f32.mrb[0].mxu0
    %v3037 = vadd.f32 0.0, %v3036
    %v3038 = vpop.f32.mrb[0].mxu0
    %3039 = vmatprep.mubr.f32.mxu0 0.0
    %3040 = vmatmul.mubr.f32.gmra.mrb[0].mxu0 %v2836
    %v3041 = vpop.f32.mrb[0].mxu0
    %v3042 = vadd.f32 0.0, %v3041
    %v3043 = vpop.f32.mrb[0].mxu0
    %3044 = vmatprep.mubr.f32.mxu0 0.0
    %3045 = vmatmul.mubr.f32.gmra.mrb[0].mxu0 %v2837
    %v3046 = vpop.f32.mrb[0].mxu0
    %v3047 = vadd.f32 0.0, %v3046
    %v3048 = vpop.f32.mrb[0].mxu0
    %3049 = vdwg.mxu0
    %v3050 = vadd.f32 %v2944, %v3032
    %v3051 = vadd.f32 %v2945, %v3037
    %v3052 = vadd.f32 %v2946, %v3042
    %v3053 = vadd.f32 %v2947, %v3047
    %s3054 = scalar_lea.vmem [#allocation7], 1408
    %v3055 = vld [vmem:[%s3054] sm:$0xff]
    %v3056 = vld [vmem:[%s3054 + $0x8] sm:$0xff]
    %v3057 = vld [vmem:[%s3054 + $0x10] sm:$0xff]
    %v3058 = vld [vmem:[%s3054 + $0x18] sm:$0xff]
    %v3059 = vld [vmem:[%s3054 + $0x20] sm:$0xff]
    %v3060 = vld [vmem:[%s3054 + $0x28] sm:$0xff]
    %v3061 = vld [vmem:[%s3054 + $0x30] sm:$0xff]
    %v3062 = vld [vmem:[%s3054 + $0x38] sm:$0xff]
    %v3063 = vld [vmem:[%s3054 + $0x40] sm:$0xff]
    %v3064 = vld [vmem:[%s3054 + $0x48] sm:$0xff]
    %v3065 = vld [vmem:[%s3054 + $0x50] sm:$0xff]
    %v3066 = vld [vmem:[%s3054 + $0x58] sm:$0xff]
    %v3067 = vld [vmem:[%s3054 + $0x60] sm:$0xff]
    %v3068 = vld [vmem:[%s3054 + $0x68] sm:$0xff]
    %v3069 = vld [vmem:[%s3054 + $0x70] sm:$0xff]
    %v3070 = vld [vmem:[%s3054 + $0x78] sm:$0xff]
    %3071 = vmatprep.subr.mxu0 0.0
    %3072 = vmatpush1.msra.mxu0 %v3055
    %3073 = vmatprep.subr.mxu0 0.0
    %3074 = vmatpush1.msra.mxu0 %v3056
    %3075 = vmatprep.subr.mxu0 0.0
    %3076 = vmatpush1.msra.mxu0 %v3057
    %3077 = vmatprep.subr.mxu0 0.0
    %3078 = vmatpush1.msra.mxu0 %v3058
    %3079 = vmatprep.subr.mxu0 0.0
    %3080 = vmatpush1.msra.mxu0 %v3059
    %3081 = vmatprep.subr.mxu0 0.0
    %3082 = vmatpush1.msra.mxu0 %v3060
    %3083 = vmatprep.subr.mxu0 0.0
    %3084 = vmatpush1.msra.mxu0 %v3061
    %3085 = vmatprep.subr.mxu0 0.0
    %3086 = vmatpush1.msra.mxu0 %v3062
    %3087 = vmatprep.subr.mxu0 0.0
    %3088 = vmatpush1.msra.mxu0 %v3063
    %3089 = vmatprep.subr.mxu0 0.0
    %3090 = vmatpush1.msra.mxu0 %v3064
    %3091 = vmatprep.subr.mxu0 0.0
    %3092 = vmatpush1.msra.mxu0 %v3065
    %3093 = vmatprep.subr.mxu0 0.0
    %3094 = vmatpush1.msra.mxu0 %v3066
    %3095 = vmatprep.subr.mxu0 0.0
    %3096 = vmatpush1.msra.mxu0 %v3067
    %3097 = vmatprep.subr.mxu0 0.0
    %3098 = vmatpush1.msra.mxu0 %v3068
    %3099 = vmatprep.subr.mxu0 0.0
    %3100 = vmatpush1.msra.mxu0 %v3069
    %3101 = vmatprep.subr.mxu0 0.0
    %3102 = vmatpush1.msra.mxu0 %v3070
    %3103 = vmatprep.subr.mxu0 0.0
    %3104 = vmatpush1.msra.mxu0 0.0
    %3105 = vmatprep.subr.mxu0 0.0
    %3106 = vmatpush1.msra.mxu0 0.0
    %3107 = vmatprep.subr.mxu0 0.0
    %3108 = vmatpush1.msra.mxu0 0.0
    %3109 = vmatprep.subr.mxu0 0.0
    %3110 = vmatpush1.msra.mxu0 0.0
    %3111 = vmatprep.subr.mxu0 0.0
    %3112 = vmatpush1.msra.mxu0 0.0
    %3113 = vmatprep.subr.mxu0 0.0
    %3114 = vmatpush1.msra.mxu0 0.0
    %3115 = vmatprep.subr.mxu0 0.0
    %3116 = vmatpush1.msra.mxu0 0.0
    %3117 = vmatprep.subr.mxu0 0.0
    %3118 = vmatpush1.msra.mxu0 0.0
    %3119 = vmatprep.subr.mxu0 0.0
    %3120 = vmatpush1.msra.mxu0 0.0
    %3121 = vmatprep.subr.mxu0 0.0
    %3122 = vmatpush1.msra.mxu0 0.0
    %3123 = vmatprep.subr.mxu0 0.0
    %3124 = vmatpush1.msra.mxu0 0.0
    %3125 = vmatprep.subr.mxu0 0.0
    %3126 = vmatpush1.msra.mxu0 0.0
    %3127 = vmatprep.subr.mxu0 0.0
    %3128 = vmatpush1.msra.mxu0 0.0
    %3129 = vmatprep.subr.mxu0 0.0
    %3130 = vmatpush1.msra.mxu0 0.0
    %3131 = vmatprep.subr.mxu0 0.0
    %3132 = vmatpush1.msra.mxu0 0.0
    %3133 = vmatprep.subr.mxu0 0.0
    %3134 = vmatpush1.msra.mxu0 0.0
    %3135 = vmatprep.mubr.f32.mxu0 0.0
    %3136 = vmatmul.mubr.f32.gmra.mrb[0].mxu0 %v2838
    %v3137 = vpop.f32.mrb[0].mxu0
    %v3138 = vadd.f32 0.0, %v3137
    %v3139 = vpop.f32.mrb[0].mxu0
    %3140 = vmatprep.mubr.f32.mxu0 0.0
    %3141 = vmatmul.mubr.f32.gmra.mrb[0].mxu0 %v2839
    %v3142 = vpop.f32.mrb[0].mxu0
    %v3143 = vadd.f32 0.0, %v3142
    %v3144 = vpop.f32.mrb[0].mxu0
    %3145 = vmatprep.mubr.f32.mxu0 0.0
    %3146 = vmatmul.mubr.f32.gmra.mrb[0].mxu0 %v2840
    %v3147 = vpop.f32.mrb[0].mxu0
    %v3148 = vadd.f32 0.0, %v3147
    %v3149 = vpop.f32.mrb[0].mxu0
    %3150 = vmatprep.mubr.f32.mxu0 0.0
    %3151 = vmatmul.mubr.f32.gmra.mrb[0].mxu0 %v2841
    %v3152 = vpop.f32.mrb[0].mxu0
    %v3153 = vadd.f32 0.0, %v3152
    %v3154 = vpop.f32.mrb[0].mxu0
    %3155 = vdwg.mxu0
    %v3156 = vadd.f32 %v3050, %v3138
    %v3157 = vadd.f32 %v3051, %v3143
    %v3158 = vadd.f32 %v3052, %v3148
    %v3159 = vadd.f32 %v3053, %v3153
    %v3160 = vld [vmem:[#allocation3] sm:$0xff]
    %v3161 = vld [vmem:[#allocation3 + $0x8] sm:$0xff]
    %v3162 = vld [vmem:[#allocation3 + $0x18] sm:$0xff]
    %v3163 = vld [vmem:[#allocation3 + $0x20] sm:$0xff]
    %v3164 = vld [vmem:[#allocation3 + $0x1] sm:$0xff]
    %v3165 = vld [vmem:[#allocation3 + $0x9] sm:$0xff]
    %v3166 = vld [vmem:[#allocation3 + $0x19] sm:$0xff]
    %v3167 = vld [vmem:[#allocation3 + $0x21] sm:$0xff]
    %v3168 = vld [vmem:[#allocation3 + $0x2] sm:$0xff]
    %v3169 = vld [vmem:[#allocation3 + $0xa] sm:$0xff]
    %v3170 = vld [vmem:[#allocation3 + $0x1a] sm:$0xff]
    %v3171 = vld [vmem:[#allocation3 + $0x22] sm:$0xff]
    %s3172 = scalar_lea.vmem [#allocation7], 1536
    %v3173 = vld [vmem:[%s3172] sm:$0xff]
    %v3174 = vld [vmem:[%s3172 + $0x8] sm:$0xff]
    %v3175 = vld [vmem:[%s3172 + $0x10] sm:$0xff]
    %v3176 = vld [vmem:[%s3172 + $0x18] sm:$0xff]
    %v3177 = vld [vmem:[%s3172 + $0x20] sm:$0xff]
    %v3178 = vld [vmem:[%s3172 + $0x28] sm:$0xff]
    %v3179 = vld [vmem:[%s3172 + $0x30] sm:$0xff]
    %v3180 = vld [vmem:[%s3172 + $0x38] sm:$0xff]
    %v3181 = vld [vmem:[%s3172 + $0x40] sm:$0xff]
    %v3182 = vld [vmem:[%s3172 + $0x48] sm:$0xff]
    %v3183 = vld [vmem:[%s3172 + $0x50] sm:$0xff]
    %v3184 = vld [vmem:[%s3172 + $0x58] sm:$0xff]
    %v3185 = vld [vmem:[%s3172 + $0x60] sm:$0xff]
    %v3186 = vld [vmem:[%s3172 + $0x68] sm:$0xff]
    %v3187 = vld [vmem:[%s3172 + $0x70] sm:$0xff]
    %v3188 = vld [vmem:[%s3172 + $0x78] sm:$0xff]
    %3189 = vmatprep.subr.mxu0 0.0
    %3190 = vmatpush1.msra.mxu0 %v3173
    %3191 = vmatprep.subr.mxu0 0.0
    %3192 = vmatpush1.msra.mxu0 %v3174
    %3193 = vmatprep.subr.mxu0 0.0
    %3194 = vmatpush1.msra.mxu0 %v3175
    %3195 = vmatprep.subr.mxu0 0.0
    %3196 = vmatpush1.msra.mxu0 %v3176
    %3197 = vmatprep.subr.mxu0 0.0
    %3198 = vmatpush1.msra.mxu0 %v3177
    %3199 = vmatprep.subr.mxu0 0.0
    %3200 = vmatpush1.msra.mxu0 %v3178
    %3201 = vmatprep.subr.mxu0 0.0
    %3202 = vmatpush1.msra.mxu0 %v3179
    %3203 = vmatprep.subr.mxu0 0.0
    %3204 = vmatpush1.msra.mxu0 %v3180
    %3205 = vmatprep.subr.mxu0 0.0
    %3206 = vmatpush1.msra.mxu0 %v3181
    %3207 = vmatprep.subr.mxu0 0.0
    %3208 = vmatpush1.msra.mxu0 %v3182
    %3209 = vmatprep.subr.mxu0 0.0
    %3210 = vmatpush1.msra.mxu0 %v3183
    %3211 = vmatprep.subr.mxu0 0.0
    %3212 = vmatpush1.msra.mxu0 %v3184
    %3213 = vmatprep.subr.mxu0 0.0
    %3214 = vmatpush1.msra.mxu0 %v3185
    %3215 = vmatprep.subr.mxu0 0.0
    %3216 = vmatpush1.msra.mxu0 %v3186
    %3217 = vmatprep.subr.mxu0 0.0
    %3218 = vmatpush1.msra.mxu0 %v3187
    %3219 = vmatprep.subr.mxu0 0.0
    %3220 = vmatpush1.msra.mxu0 %v3188
    %3221 = vmatprep.subr.mxu0 0.0
    %3222 = vmatpush1.msra.mxu0 0.0
    %3223 = vmatprep.subr.mxu0 0.0
    %3224 = vmatpush1.msra.mxu0 0.0
    %3225 = vmatprep.subr.mxu0 0.0
    %3226 = vmatpush1.msra.mxu0 0.0
    %3227 = vmatprep.subr.mxu0 0.0
    %3228 = vmatpush1.msra.mxu0 0.0
    %3229 = vmatprep.subr.mxu0 0.0
    %3230 = vmatpush1.msra.mxu0 0.0
    %3231 = vmatprep.subr.mxu0 0.0
    %3232 = vmatpush1.msra.mxu0 0.0
    %3233 = vmatprep.subr.mxu0 0.0
    %3234 = vmatpush1.msra.mxu0 0.0
    %3235 = vmatprep.subr.mxu0 0.0
    %3236 = vmatpush1.msra.mxu0 0.0
    %3237 = vmatprep.subr.mxu0 0.0
    %3238 = vmatpush1.msra.mxu0 0.0
    %3239 = vmatprep.subr.mxu0 0.0
    %3240 = vmatpush1.msra.mxu0 0.0
    %3241 = vmatprep.subr.mxu0 0.0
    %3242 = vmatpush1.msra.mxu0 0.0
    %3243 = vmatprep.subr.mxu0 0.0
    %3244 = vmatpush1.msra.mxu0 0.0
    %3245 = vmatprep.subr.mxu0 0.0
    %3246 = vmatpush1.msra.mxu0 0.0
    %3247 = vmatprep.subr.mxu0 0.0
    %3248 = vmatpush1.msra.mxu0 0.0
    %3249 = vmatprep.subr.mxu0 0.0
    %3250 = vmatpush1.msra.mxu0 0.0
    %3251 = vmatprep.subr.mxu0 0.0
    %3252 = vmatpush1.msra.mxu0 0.0
    %3253 = vmatprep.mubr.f32.mxu0 0.0
    %3254 = vmatmul.mubr.f32.gmra.mrb[0].mxu0 %v3160
    %v3255 = vpop.f32.mrb[0].mxu0
    %v3256 = vadd.f32 0.0, %v3255
    %v3257 = vpop.f32.mrb[0].mxu0
    %3258 = vmatprep.mubr.f32.mxu0 0.0
    %3259 = vmatmul.mubr.f32.gmra.mrb[0].mxu0 %v3161
    %v3260 = vpop.f32.mrb[0].mxu0
    %v3261 = vadd.f32 0.0, %v3260
    %v3262 = vpop.f32.mrb[0].mxu0
    %3263 = vmatprep.mubr.f32.mxu0 0.0
    %3264 = vmatmul.mubr.f32.gmra.mrb[0].mxu0 %v3162
    %v3265 = vpop.f32.mrb[0].mxu0
    %v3266 = vadd.f32 0.0, %v3265
    %v3267 = vpop.f32.mrb[0].mxu0
    %3268 = vmatprep.mubr.f32.mxu0 0.0
    %3269 = vmatmul.mubr.f32.gmra.mrb[0].mxu0 %v3163
    %v3270 = vpop.f32.mrb[0].mxu0
    %v3271 = vadd.f32 0.0, %v3270
    %v3272 = vpop.f32.mrb[0].mxu0
    %3273 = vdwg.mxu0
    %v3274 = vadd.f32 %v3156, %v3256
    %v3275 = vadd.f32 %v3157, %v3261
    %v3276 = vadd.f32 %v3158, %v3266
    %v3277 = vadd.f32 %v3159, %v3271
    %s3278 = scalar_lea.vmem [#allocation7], 1664
    %v3279 = vld [vmem:[%s3278] sm:$0xff]
    %v3280 = vld [vmem:[%s3278 + $0x8] sm:$0xff]
    %v3281 = vld [vmem:[%s3278 + $0x10] sm:$0xff]
    %v3282 = vld [vmem:[%s3278 + $0x18] sm:$0xff]
    %v3283 = vld [vmem:[%s3278 + $0x20] sm:$0xff]
    %v3284 = vld [vmem:[%s3278 + $0x28] sm:$0xff]
    %v3285 = vld [vmem:[%s3278 + $0x30] sm:$0xff]
    %v3286 = vld [vmem:[%s3278 + $0x38] sm:$0xff]
    %v3287 = vld [vmem:[%s3278 + $0x40] sm:$0xff]
    %v3288 = vld [vmem:[%s3278 + $0x48] sm:$0xff]
    %v3289 = vld [vmem:[%s3278 + $0x50] sm:$0xff]
    %v3290 = vld [vmem:[%s3278 + $0x58] sm:$0xff]
    %v3291 = vld [vmem:[%s3278 + $0x60] sm:$0xff]
    %v3292 = vld [vmem:[%s3278 + $0x68] sm:$0xff]
    %v3293 = vld [vmem:[%s3278 + $0x70] sm:$0xff]
    %v3294 = vld [vmem:[%s3278 + $0x78] sm:$0xff]
    %3295 = vmatprep.subr.mxu0 0.0
    %3296 = vmatpush1.msra.mxu0 %v3279
    %3297 = vmatprep.subr.mxu0 0.0
    %3298 = vmatpush1.msra.mxu0 %v3280
    %3299 = vmatprep.subr.mxu0 0.0
    %3300 = vmatpush1.msra.mxu0 %v3281
    %3301 = vmatprep.subr.mxu0 0.0
    %3302 = vmatpush1.msra.mxu0 %v3282
    %3303 = vmatprep.subr.mxu0 0.0
    %3304 = vmatpush1.msra.mxu0 %v3283
    %3305 = vmatprep.subr.mxu0 0.0
    %3306 = vmatpush1.msra.mxu0 %v3284
    %3307 = vmatprep.subr.mxu0 0.0
    %3308 = vmatpush1.msra.mxu0 %v3285
    %3309 = vmatprep.subr.mxu0 0.0
    %3310 = vmatpush1.msra.mxu0 %v3286
    %3311 = vmatprep.subr.mxu0 0.0
    %3312 = vmatpush1.msra.mxu0 %v3287
    %3313 = vmatprep.subr.mxu0 0.0
    %3314 = vmatpush1.msra.mxu0 %v3288
    %3315 = vmatprep.subr.mxu0 0.0
    %3316 = vmatpush1.msra.mxu0 %v3289
    %3317 = vmatprep.subr.mxu0 0.0
    %3318 = vmatpush1.msra.mxu0 %v3290
    %3319 = vmatprep.subr.mxu0 0.0
    %3320 = vmatpush1.msra.mxu0 %v3291
    %3321 = vmatprep.subr.mxu0 0.0
    %3322 = vmatpush1.msra.mxu0 %v3292
    %3323 = vmatprep.subr.mxu0 0.0
    %3324 = vmatpush1.msra.mxu0 %v3293
    %3325 = vmatprep.subr.mxu0 0.0
    %3326 = vmatpush1.msra.mxu0 %v3294
    %3327 = vmatprep.subr.mxu0 0.0
    %3328 = vmatpush1.msra.mxu0 0.0
    %3329 = vmatprep.subr.mxu0 0.0
    %3330 = vmatpush1.msra.mxu0 0.0
    %3331 = vmatprep.subr.mxu0 0.0
    %3332 = vmatpush1.msra.mxu0 0.0
    %3333 = vmatprep.subr.mxu0 0.0
    %3334 = vmatpush1.msra.mxu0 0.0
    %3335 = vmatprep.subr.mxu0 0.0
    %3336 = vmatpush1.msra.mxu0 0.0
    %3337 = vmatprep.subr.mxu0 0.0
    %3338 = vmatpush1.msra.mxu0 0.0
    %3339 = vmatprep.subr.mxu0 0.0
    %3340 = vmatpush1.msra.mxu0 0.0
    %3341 = vmatprep.subr.mxu0 0.0
    %3342 = vmatpush1.msra.mxu0 0.0
    %3343 = vmatprep.subr.mxu0 0.0
    %3344 = vmatpush1.msra.mxu0 0.0
    %3345 = vmatprep.subr.mxu0 0.0
    %3346 = vmatpush1.msra.mxu0 0.0
    %3347 = vmatprep.subr.mxu0 0.0
    %3348 = vmatpush1.msra.mxu0 0.0
    %3349 = vmatprep.subr.mxu0 0.0
    %3350 = vmatpush1.msra.mxu0 0.0
    %3351 = vmatprep.subr.mxu0 0.0
    %3352 = vmatpush1.msra.mxu0 0.0
    %3353 = vmatprep.subr.mxu0 0.0
    %3354 = vmatpush1.msra.mxu0 0.0
    %3355 = vmatprep.subr.mxu0 0.0
    %3356 = vmatpush1.msra.mxu0 0.0
    %3357 = vmatprep.subr.mxu0 0.0
    %3358 = vmatpush1.msra.mxu0 0.0
    %3359 = vmatprep.mubr.f32.mxu0 0.0
    %3360 = vmatmul.mubr.f32.gmra.mrb[0].mxu0 %v3164
    %v3361 = vpop.f32.mrb[0].mxu0
    %v3362 = vadd.f32 0.0, %v3361
    %v3363 = vpop.f32.mrb[0].mxu0
    %3364 = vmatprep.mubr.f32.mxu0 0.0
    %3365 = vmatmul.mubr.f32.gmra.mrb[0].mxu0 %v3165
    %v3366 = vpop.f32.mrb[0].mxu0
    %v3367 = vadd.f32 0.0, %v3366
    %v3368 = vpop.f32.mrb[0].mxu0
    %3369 = vmatprep.mubr.f32.mxu0 0.0
    %3370 = vmatmul.mubr.f32.gmra.mrb[0].mxu0 %v3166
    %v3371 = vpop.f32.mrb[0].mxu0
    %v3372 = vadd.f32 0.0, %v3371
    %v3373 = vpop.f32.mrb[0].mxu0
    %3374 = vmatprep.mubr.f32.mxu0 0.0
    %3375 = vmatmul.mubr.f32.gmra.mrb[0].mxu0 %v3167
    %v3376 = vpop.f32.mrb[0].mxu0
    %v3377 = vadd.f32 0.0, %v3376
    %v3378 = vpop.f32.mrb[0].mxu0
    %3379 = vdwg.mxu0
    %v3380 = vadd.f32 %v3274, %v3362
    %v3381 = vadd.f32 %v3275, %v3367
    %v3382 = vadd.f32 %v3276, %v3372
    %v3383 = vadd.f32 %v3277, %v3377
    %s3384 = scalar_lea.vmem [#allocation7], 1792
    %v3385 = vld [vmem:[%s3384] sm:$0xff]
    %v3386 = vld [vmem:[%s3384 + $0x8] sm:$0xff]
    %v3387 = vld [vmem:[%s3384 + $0x10] sm:$0xff]
    %v3388 = vld [vmem:[%s3384 + $0x18] sm:$0xff]
    %v3389 = vld [vmem:[%s3384 + $0x20] sm:$0xff]
    %v3390 = vld [vmem:[%s3384 + $0x28] sm:$0xff]
    %v3391 = vld [vmem:[%s3384 + $0x30] sm:$0xff]
    %v3392 = vld [vmem:[%s3384 + $0x38] sm:$0xff]
    %v3393 = vld [vmem:[%s3384 + $0x40] sm:$0xff]
    %v3394 = vld [vmem:[%s3384 + $0x48] sm:$0xff]
    %v3395 = vld [vmem:[%s3384 + $0x50] sm:$0xff]
    %v3396 = vld [vmem:[%s3384 + $0x58] sm:$0xff]
    %v3397 = vld [vmem:[%s3384 + $0x60] sm:$0xff]
    %v3398 = vld [vmem:[%s3384 + $0x68] sm:$0xff]
    %v3399 = vld [vmem:[%s3384 + $0x70] sm:$0xff]
    %v3400 = vld [vmem:[%s3384 + $0x78] sm:$0xff]
    %3401 = vmatprep.subr.mxu0 0.0
    %3402 = vmatpush1.msra.mxu0 %v3385
    %3403 = vmatprep.subr.mxu0 0.0
    %3404 = vmatpush1.msra.mxu0 %v3386
    %3405 = vmatprep.subr.mxu0 0.0
    %3406 = vmatpush1.msra.mxu0 %v3387
    %3407 = vmatprep.subr.mxu0 0.0
    %3408 = vmatpush1.msra.mxu0 %v3388
    %3409 = vmatprep.subr.mxu0 0.0
    %3410 = vmatpush1.msra.mxu0 %v3389
    %3411 = vmatprep.subr.mxu0 0.0
    %3412 = vmatpush1.msra.mxu0 %v3390
    %3413 = vmatprep.subr.mxu0 0.0
    %3414 = vmatpush1.msra.mxu0 %v3391
    %3415 = vmatprep.subr.mxu0 0.0
    %3416 = vmatpush1.msra.mxu0 %v3392
    %3417 = vmatprep.subr.mxu0 0.0
    %3418 = vmatpush1.msra.mxu0 %v3393
    %3419 = vmatprep.subr.mxu0 0.0
    %3420 = vmatpush1.msra.mxu0 %v3394
    %3421 = vmatprep.subr.mxu0 0.0
    %3422 = vmatpush1.msra.mxu0 %v3395
    %3423 = vmatprep.subr.mxu0 0.0
    %3424 = vmatpush1.msra.mxu0 %v3396
    %3425 = vmatprep.subr.mxu0 0.0
    %3426 = vmatpush1.msra.mxu0 %v3397
    %3427 = vmatprep.subr.mxu0 0.0
    %3428 = vmatpush1.msra.mxu0 %v3398
    %3429 = vmatprep.subr.mxu0 0.0
    %3430 = vmatpush1.msra.mxu0 %v3399
    %3431 = vmatprep.subr.mxu0 0.0
    %3432 = vmatpush1.msra.mxu0 %v3400
    %3433 = vmatprep.subr.mxu0 0.0
    %3434 = vmatpush1.msra.mxu0 0.0
    %3435 = vmatprep.subr.mxu0 0.0
    %3436 = vmatpush1.msra.mxu0 0.0
    %3437 = vmatprep.subr.mxu0 0.0
    %3438 = vmatpush1.msra.mxu0 0.0
    %3439 = vmatprep.subr.mxu0 0.0
    %3440 = vmatpush1.msra.mxu0 0.0
    %3441 = vmatprep.subr.mxu0 0.0
    %3442 = vmatpush1.msra.mxu0 0.0
    %3443 = vmatprep.subr.mxu0 0.0
    %3444 = vmatpush1.msra.mxu0 0.0
    %3445 = vmatprep.subr.mxu0 0.0
    %3446 = vmatpush1.msra.mxu0 0.0
    %3447 = vmatprep.subr.mxu0 0.0
    %3448 = vmatpush1.msra.mxu0 0.0
    %3449 = vmatprep.subr.mxu0 0.0
    %3450 = vmatpush1.msra.mxu0 0.0
    %3451 = vmatprep.subr.mxu0 0.0
    %3452 = vmatpush1.msra.mxu0 0.0
    %3453 = vmatprep.subr.mxu0 0.0
    %3454 = vmatpush1.msra.mxu0 0.0
    %3455 = vmatprep.subr.mxu0 0.0
    %3456 = vmatpush1.msra.mxu0 0.0
    %3457 = vmatprep.subr.mxu0 0.0
    %3458 = vmatpush1.msra.mxu0 0.0
    %3459 = vmatprep.subr.mxu0 0.0
    %3460 = vmatpush1.msra.mxu0 0.0
    %3461 = vmatprep.subr.mxu0 0.0
    %3462 = vmatpush1.msra.mxu0 0.0
    %3463 = vmatprep.subr.mxu0 0.0
    %3464 = vmatpush1.msra.mxu0 0.0
    %3465 = vmatprep.mubr.f32.mxu0 0.0
    %3466 = vmatmul.mubr.f32.gmra.mrb[0].mxu0 %v3168
    %v3467 = vpop.f32.mrb[0].mxu0
    %v3468 = vadd.f32 0.0, %v3467
    %v3469 = vpop.f32.mrb[0].mxu0
    %3470 = vmatprep.mubr.f32.mxu0 0.0
    %3471 = vmatmul.mubr.f32.gmra.mrb[0].mxu0 %v3169
    %v3472 = vpop.f32.mrb[0].mxu0
    %v3473 = vadd.f32 0.0, %v3472
    %v3474 = vpop.f32.mrb[0].mxu0
    %3475 = vmatprep.mubr.f32.mxu0 0.0
    %3476 = vmatmul.mubr.f32.gmra.mrb[0].mxu0 %v3170
    %v3477 = vpop.f32.mrb[0].mxu0
    %v3478 = vadd.f32 0.0, %v3477
    %v3479 = vpop.f32.mrb[0].mxu0
    %3480 = vmatprep.mubr.f32.mxu0 0.0
    %3481 = vmatmul.mubr.f32.gmra.mrb[0].mxu0 %v3171
    %v3482 = vpop.f32.mrb[0].mxu0
    %v3483 = vadd.f32 0.0, %v3482
    %v3484 = vpop.f32.mrb[0].mxu0
    %3485 = vdwg.mxu0
    %v3486 = vadd.f32 %v3380, %v3468
    %v3487 = vadd.f32 %v3381, %v3473
    %v3488 = vadd.f32 %v3382, %v3478
    %v3489 = vadd.f32 %v3383, %v3483
    %v3490 = vmul.f32 %v3486, 0.5
    %v3491 = vmul.f32 %v3487, 0.5
    %v3492 = vmul.f32 %v3488, 0.5
    %v3493 = vmul.f32 %v3489, 0.5
    %v3494 = vmul.f32 %v3486, 0.70710677
    %v3495 = vmul.f32 %v3487, 0.70710677
    %v3496 = vmul.f32 %v3488, 0.70710677
    %v3497 = vmul.f32 %v3489, 0.70710677
    %v3498 = verf.f32.pop %v3494
    %v3499 = verf.f32.pop %v3495
    %v3500 = verf.f32.pop %v3496
    %v3501 = verf.f32.pop %v3497
    %v3502 = vadd.f32 %v3498, 1.0
    %v3503 = vadd.f32 %v3499, 1.0
    %v3504 = vadd.f32 %v3500, 1.0
    %v3505 = vadd.f32 %v3501, 1.0
    %v3506 = vmul.f32 %v3490, %v3502
    %v3507 = vmul.f32 %v3491, %v3503
    %v3508 = vmul.f32 %v3492, %v3504
    %v3509 = vmul.f32 %v3493, %v3505
    %s3510 = scalar_lea.vmem %s11, 1
    %v3511 = vld [vmem:[%s3510] sm:$0x1]
    %s3512 = scalar_lea.vmem %s12, 1
    %v3513 = vld [vmem:[%s3512] sm:$0x1]
    %v3514 = vadd.f32 %v3506, %v3507
    %v3515 = vadd.f32 %v3514, %v3508
    %v3516 = vadd.f32 %v3515, %v3509
    %v3517 = vrot.slane %v3516, 4
    %v3518 = vadd.f32 %v3516, %v3517
    %v3519 = vrot.slane %v3518, 2
    %v3520 = vadd.f32 %v3518, %v3519
    %v3521 = vrot.slane %v3520, 1
    %v3522 = vadd.f32 %v3520, %v3521
    %v3523 = vmul.f32 %v3506, %v3506
    %v3524 = vmul.f32 %v3507, %v3507
    %v3525 = vmul.f32 %v3508, %v3508
    %v3526 = vmul.f32 %v3509, %v3509
    %v3527 = vadd.f32 %v3523, %v3524
    %v3528 = vadd.f32 %v3527, %v3525
    %v3529 = vadd.f32 %v3528, %v3526
    %v3530 = vrot.slane %v3529, 4
    %v3531 = vadd.f32 %v3529, %v3530
    %v3532 = vrot.slane %v3531, 2
    %v3533 = vadd.f32 %v3531, %v3532
    %v3534 = vrot.slane %v3533, 1
    %v3535 = vadd.f32 %v3533, %v3534
    %v3536 = vsel %vm489, %v3522, %v3535
    %3537 = vmatprep.subr.mxu0 0.0
    %3538 = vmatpush1.msra.mxu0 %v75
    %3539 = vmatprep.subr.mxu0 0.0
    %3540 = vmatpush1.msra.mxu0 %v76
    %3541 = vmatprep.subr.mxu0 0.0
    %3542 = vmatpush1.msra.mxu0 %v77
    %3543 = vmatprep.subr.mxu0 0.0
    %3544 = vmatpush1.msra.mxu0 %v78
    %3545 = vmatprep.subr.mxu0 0.0
    %3546 = vmatpush1.msra.mxu0 %v79
    %3547 = vmatprep.subr.mxu0 0.0
    %3548 = vmatpush1.msra.mxu0 %v80
    %3549 = vmatprep.subr.mxu0 0.0
    %3550 = vmatpush1.msra.mxu0 %v81
    %3551 = vmatprep.subr.mxu0 0.0
    %3552 = vmatpush1.msra.mxu0 %v82
    %3553 = vmatprep.subr.mxu0 0.0
    %3554 = vmatpush1.msra.mxu0 %v83
    %3555 = vmatprep.subr.mxu0 0.0
    %3556 = vmatpush1.msra.mxu0 %v84
    %3557 = vmatprep.subr.mxu0 0.0
    %3558 = vmatpush1.msra.mxu0 %v85
    %3559 = vmatprep.subr.mxu0 0.0
    %3560 = vmatpush1.msra.mxu0 %v86
    %3561 = vmatprep.subr.mxu0 0.0
    %3562 = vmatpush1.msra.mxu0 %v87
    %3563 = vmatprep.subr.mxu0 0.0
    %3564 = vmatpush1.msra.mxu0 %v88
    %3565 = vmatprep.subr.mxu0 0.0
    %3566 = vmatpush1.msra.mxu0 %v89
    %3567 = vmatprep.subr.mxu0 0.0
    %3568 = vmatpush1.msra.mxu0 %v90
    %3569 = vmatprep.subr.mxu0 0.0
    %3570 = vmatpush1.msra.mxu0 0.0
    %3571 = vmatprep.subr.mxu0 0.0
    %3572 = vmatpush1.msra.mxu0 0.0
    %3573 = vmatprep.subr.mxu0 0.0
    %3574 = vmatpush1.msra.mxu0 0.0
    %3575 = vmatprep.subr.mxu0 0.0
    %3576 = vmatpush1.msra.mxu0 0.0
    %3577 = vmatprep.subr.mxu0 0.0
    %3578 = vmatpush1.msra.mxu0 0.0
    %3579 = vmatprep.subr.mxu0 0.0
    %3580 = vmatpush1.msra.mxu0 0.0
    %3581 = vmatprep.subr.mxu0 0.0
    %3582 = vmatpush1.msra.mxu0 0.0
    %3583 = vmatprep.subr.mxu0 0.0
    %3584 = vmatpush1.msra.mxu0 0.0
    %3585 = vmatprep.subr.mxu0 0.0
    %3586 = vmatpush1.msra.mxu0 0.0
    %3587 = vmatprep.subr.mxu0 0.0
    %3588 = vmatpush1.msra.mxu0 0.0
    %3589 = vmatprep.subr.mxu0 0.0
    %3590 = vmatpush1.msra.mxu0 0.0
    %3591 = vmatprep.subr.mxu0 0.0
    %3592 = vmatpush1.msra.mxu0 0.0
    %3593 = vmatprep.subr.mxu0 0.0
    %3594 = vmatpush1.msra.mxu0 0.0
    %3595 = vmatprep.subr.mxu0 0.0
    %3596 = vmatpush1.msra.mxu0 0.0
    %3597 = vmatprep.subr.mxu0 0.0
    %3598 = vmatpush1.msra.mxu0 0.0
    %3599 = vmatprep.subr.mxu0 0.0
    %3600 = vmatpush1.msra.mxu0 0.0
    %3601 = vmatprep.mubr.f32.mxu0 0.0
    %3602 = vmatmul.mubr.f32.gmra.mrb[0].mxu0 %v3536
    %v3603 = vpop.f32.mrb[0].mxu0
    %v3604 = vadd.f32 0.0, %v3603
    %v3605 = vpop.f32.mrb[0].mxu0
    %3606 = vdwg.mxu0
    %v3607 = vmul.f32 %v3604, 0.001953125
    %v3608 = vmul.f32 %v3607, %v3607
    %v3610 = vrot.slane %v3608, 7
    %v3612 = vsub.f32 %v3607, %v3610
    %v3613 = vmax.f32 %v3612, 0.0
    %v3614 = vlaneseq
    %v3615 = vshrl.u32 %v3614, 7
    %v3616 = vsub.s32 0, %v3615
    %v3617 = vrot.slane %v3607, %v3616
    %v3618 = vsub.f32 %v3506, %v3617
    %v3619 = vsub.f32 %v3507, %v3617
    %v3620 = vsub.f32 %v3508, %v3617
    %v3621 = vsub.f32 %v3509, %v3617
    %v3622 = vadd.f32 %v3613, 1e-05
    %v3623 = vrsqrt.pop %v3622
    %v3624 = vlaneseq
    %v3625 = vshrl.u32 %v3624, 7
    %v3626 = vsub.s32 1, %v3625
    %v3627 = vrot.slane %v3623, %v3626
    %v3628 = vmul.f32 %v3618, %v3627
    %v3629 = vmul.f32 %v3619, %v3627
    %v3630 = vmul.f32 %v3620, %v3627
    %v3631 = vmul.f32 %v3621, %v3627
    %v3633 = vlaneseq
    %v3634 = vshrl.u32 %v3633, 7
    %v3635 = vsub.s32 0, %v3634
    %v3636 = vrot.slane %v3511, %v3635
    %v3638 = vmul.f32 %v3628, %v3636
    %v3639 = vmul.f32 %v3629, %v3636
    %v3640 = vmul.f32 %v3630, %v3636
    %v3641 = vmul.f32 %v3631, %v3636
    %v3643 = vlaneseq
    %v3644 = vshrl.u32 %v3643, 7
    %v3645 = vsub.s32 0, %v3644
    %v3646 = vrot.slane %v3513, %v3645
    %v3648 = vadd.f32 %v3638, %v3646
    %v3649 = vadd.f32 %v3639, %v3646
    %v3650 = vadd.f32 %v3640, %v3646
    %v3651 = vadd.f32 %v3641, %v3646
    %3652 = vst [vmem:[%s14] sm:$0xff] %v3648
    %3653 = vst [vmem:[%s14 + $0x8] sm:$0xff] %v3649
    %3654 = vst [vmem:[%s14 + $0x10] sm:$0xff] %v3650
    %3655 = vst [vmem:[%s14 + $0x18] sm:$0xff] %v3651
    // Predicated region
    $region66: #{dense_conv_mixer_block.1} parent=1 // pred_check
      _
    $region67: #{dense_conv_mixer_block.1} parent=1 // pred_check_branch
      %3657 = sbr.rel (0) target = $region69
    $region68: #{dense_conv_mixer_block.1} parent=1 // pred_region
      _
    $region69: #{dense_conv_mixer_block.1} parent=1 // pred_fallthru
      _
    // Predicated region
    $region70: #{dense_conv_mixer_block.1} parent=1 // pred_check
      _
    $region71: #{dense_conv_mixer_block.1} parent=1 // pred_check_branch
      %3659 = sbr.rel (0) target = $region73
    $region72: #{dense_conv_mixer_block.1} parent=1 // pred_region
      _
    $region73: #{dense_conv_mixer_block.1} parent=1 // pred_fallthru
      _
    %3660 = vsyncpa [#allocation6], 1
    %3661 = vsyncpa [#allocation8], 1

</llo_original>
